<compile_context>
chip_gen: v5e
topology: v5e:2x2
jax: 0.10.0
libtpu: 0.0.40
codegen_flags: <defaults>
</compile_context>

<pallas_src>
import functools
import math

import jax
import jax.numpy as jnp
from jax.experimental import pallas as pl
from jax.experimental.pallas import tpu as pltpu


# ----------------------------- Pallas GEMM kernel ---------------------------

def _gemm_bias_act_kernel(x_ref, w_ref, b_ref, o_ref, acc_ref, *, relu):
    """One (tm, tn) output tile; K is the innermost (reduction) grid axis."""
    @pl.when(pl.program_id(2) == 0)
    def _init():
        acc_ref[...] = jnp.zeros_like(acc_ref)

    acc_ref[...] += jnp.dot(x_ref[...], w_ref[...],
                            preferred_element_type=jnp.float32)

    @pl.when(pl.program_id(2) == pl.num_programs(2) - 1)
    def _finalize():
        y = acc_ref[...] + b_ref[...]
        if relu:
            y = jnp.maximum(y, 0.0)
        o_ref[...] = y.astype(o_ref.dtype)


def _pick_tile(dim, target, granule):
    """Largest tile <= target that divides `dim` and is a multiple of
    `granule`; falls back to the full dim when it cannot be tiled legally."""
    if dim % granule != 0 or dim <= granule:
        return dim
    t = min((target // granule) * granule, dim)
    while dim % t != 0:
        t -= granule
    return t


def fused_linear(x2d, w, b, *, relu, tm=512, tn=256, tk=512):
    """y = (x2d @ w + b), optionally ReLU, as a tiled Pallas GEMM."""
    M, K = x2d.shape
    K2, N = w.shape
    assert K == K2
    tm = _pick_tile(M, tm, 8)
    tn = _pick_tile(N, tn, 128)
    tk = _pick_tile(K, tk, 128)
    grid = (M // tm, N // tn, K // tk)
    kernel = functools.partial(_gemm_bias_act_kernel, relu=relu)
    return pl.pallas_call(
        kernel,
        out_shape=jax.ShapeDtypeStruct((M, N), jnp.float32),
        grid_spec=pltpu.PrefetchScalarGridSpec(
            num_scalar_prefetch=0,
            grid=grid,
            in_specs=[
                pl.BlockSpec((tm, tk), lambda i, j, k: (i, k)),
                pl.BlockSpec((tk, tn), lambda i, j, k: (k, j)),
                pl.BlockSpec((1, tn), lambda i, j, k: (0, j)),
            ],
            out_specs=pl.BlockSpec((tm, tn), lambda i, j, k: (i, j)),
            scratch_shapes=[pltpu.VMEM((tm, tn), jnp.float32)],
        ),
        compiler_params=pltpu.CompilerParams(
            dimension_semantics=("parallel", "parallel", "arbitrary")),
    )(x2d, w, b.reshape(1, N))


# ------------------------ Conv2d(k=4,s=2,p=1) as GEMM -----------------------

def _im2col_k4s2p1(x_nhwc):
    """Patch extraction for Conv2d(kernel=4, stride=2, padding=1), NHWC.
    Per-output-pixel feature order is (kh, kw, c_in), matching
    `_conv_weight_to_mat`.  Pure XLA strided slices (single pass)."""
    B, H, W, C = x_nhwc.shape
    Ho, Wo = H // 2, W // 2
    xp = jnp.pad(x_nhwc, ((0, 0), (1, 1), (1, 1), (0, 0)))
    cols = []
    for kh in range(4):
        for kw in range(4):
            cols.append(jax.lax.slice(
                xp,
                (0, kh, kw, 0),
                (B, kh + 2 * (Ho - 1) + 1, kw + 2 * (Wo - 1) + 1, C),
                (1, 2, 2, 1)))
    patches = jnp.concatenate(cols, axis=-1)            # (B, Ho, Wo, 16*C)
    return patches.reshape(B * Ho * Wo, 16 * C), (B, Ho, Wo)


def _conv_weight_to_mat(w):
    """PyTorch conv weight (C_out, C_in, 4, 4) -> GEMM weight (16*C_in, C_out)
    with rows ordered (kh, kw, c_in)."""
    c_out, c_in, kh, kw = w.shape
    return jnp.transpose(w, (2, 3, 1, 0)).reshape(kh * kw * c_in, c_out)


def conv4x4_s2_relu(x_nhwc, w_torch, b):
    patches, (B, Ho, Wo) = _im2col_k4s2p1(x_nhwc)
    w_mat = _conv_weight_to_mat(w_torch)
    y = fused_linear(patches, w_mat, b, relu=True)      # (B*Ho*Wo, C_out)
    return y.reshape(B, Ho, Wo, w_torch.shape[0])


# ------------------------------ model forward -------------------------------

def cnn_encoder_forward(x_nchw, params):
    """CNNEncoder.forward: 4 x [Conv2d(4,s2,p1)+ReLU] -> Flatten -> Linear."""
    x = jnp.transpose(x_nchw, (0, 2, 3, 1))             # NCHW -> NHWC (C on lanes)
    for w, b in params["convs"]:
        x = conv4x4_s2_relu(x, w, b)
    B, Hf, Wf, Cf = x.shape
    flat = x.reshape(B, Hf * Wf * Cf)                   # NHWC flatten (h, w, c)
    # Re-order the PyTorch Linear weight (which expects (c, h, w) flatten of
    # NCHW) to match the NHWC flatten, so no activation transpose is needed.
    w_lin, b_lin = params["linear"]                     # torch layout (latent, C*H*W)
    latent = w_lin.shape[0]
    w_mat = (w_lin.reshape(latent, Cf, Hf, Wf)
                  .transpose(2, 3, 1, 0)
                  .reshape(Hf * Wf * Cf, latent))
    return fused_linear(flat, w_mat, b_lin, relu=False)  # (B, latent)


# --------------------------- pure-JAX reference -----------------------------

def reference_forward(x_nchw, params):
    y = x_nchw
    for w, b in params["convs"]:
        y = jax.lax.conv_general_dilated(
            y, w, window_strides=(2, 2), padding=((1, 1), (1, 1)),
            dimension_numbers=("NCHW", "OIHW", "NCHW"),
            precision=jax.lax.Precision.HIGHEST)
        y = jnp.maximum(y + b.reshape(1, -1, 1, 1), 0.0)
    w_lin, b_lin = params["linear"]
    flat = y.reshape(y.shape[0], -1)                    # PyTorch Flatten: (c, h, w)
    return flat @ w_lin.T + b_lin


# ------------------------------ parameter init ------------------------------

def init_params(key, *, in_channels, latent_dim):
    chans = [in_channels, 32, 64, 128, 256]
    keys = jax.random.split(key, 10)
    convs = []
    for i in range(4):
        fan_in = chans[i] * 16
        w = (jax.random.normal(keys[2 * i], (chans[i + 1], chans[i], 4, 4),
                               jnp.float32) / math.sqrt(fan_in))
        b = 0.01 * jax.random.normal(keys[2 * i + 1], (chans[i + 1],),
                                     jnp.float32)
        convs.append((w, b))
    fan_in = 256 * 4 * 4
    w_lin = (jax.random.normal(keys[8], (latent_dim, fan_in), jnp.float32)
             / math.sqrt(fan_in))
    b_lin = 0.01 * jax.random.normal(keys[9], (latent_dim,), jnp.float32)
    return {"convs": convs, "linear": (w_lin, b_lin)}


# ----------------------------------- main ------------------------------------

if __name__ == "__main__":
    # Linear(256*4*4) in the PyTorch module implies a 64x64 input.
    B, C, H, W = 2, 3, 64, 64
    LATENT = 128   # lane-dense latent dim

    root = jax.random.PRNGKey(0)
    kx, kp = jax.random.split(root)
    x = jax.random.normal(kx, (B, C, H, W), jnp.float32)
    params = init_params(kp, in_channels=C, latent_dim=LATENT)

    fwd = jax.jit(cnn_encoder_forward)
    out = jax.block_until_ready(fwd(x, params))
    assert out.shape == (B, LATENT), out.shape
    assert bool(jnp.all(jnp.isfinite(out)))

    ref = jax.block_until_ready(jax.jit(reference_forward)(x, params))
    rel_err = float(jnp.max(jnp.abs(out - ref)) /
                    (jnp.max(jnp.abs(ref)) + 1e-6))
    assert rel_err < 5e-2, f"mismatch vs reference: rel_max_err={rel_err}"

    print("KERNEL_OK")
</pallas_src>

<mosaic_0001>
module attributes {stable_mosaic.version = 11 : i64} {
  func.func @_gemm_bias_act_kernel(%arg0: i32, %arg1: i32, %arg2: i32, %arg3: memref<512x48xf32, #tpu.memory_space<vmem>>, %arg4: memref<48x32xf32, #tpu.memory_space<vmem>>, %arg5: memref<1x32xf32, #tpu.memory_space<vmem>>, %arg6: memref<512x32xf32, #tpu.memory_space<vmem>>, %arg7: memref<512x32xf32, #tpu.memory_space<vmem>>) attributes {dimension_semantics = [#tpu.dimension_semantics<parallel>, #tpu.dimension_semantics<parallel>, #tpu.dimension_semantics<arbitrary>], iteration_bounds = array<i64: 4, 1, 1>, scalar_prefetch = 0 : i64, scratch_operands = 1 : i64, tpu.core_type = #tpu.core_type<tc>, window_params = [{transform_indices = @transform_0, window_bounds = array<i64: 512, 48>}, {transform_indices = @transform_1, window_bounds = array<i64: 48, 32>}, {transform_indices = @transform_2, window_bounds = array<i64: 1, 32>}, {transform_indices = @transform_3, window_bounds = array<i64: 512, 32>}]} {
    %c0_i32 = arith.constant 0 : i32
    %0 = arith.cmpi eq, %arg2, %c0_i32 : i32
    %1 = arith.extui %0 : i1 to i32
    %c0_i32_0 = arith.constant 0 : i32
    %2 = arith.cmpi ne, %1, %c0_i32_0 : i32
    scf.if %2 {
      %cst_10 = arith.constant 0.000000e+00 : f32
      %12 = vector.broadcast %cst_10 : f32 to vector<512x32xf32>
      %c0_11 = arith.constant 0 : index
      %c0_12 = arith.constant 0 : index
      %13 = vector.load %arg7[%c0_11, %c0_12] : memref<512x32xf32, #tpu.memory_space<vmem>>, vector<512x32xf32>
      tpu.vector_store %arg7[%c0_11, %c0_12], %12 {strides = array<i32>} : memref<512x32xf32, #tpu.memory_space<vmem>>, vector<512x32xf32>,
    } else {
    }
    %c0 = arith.constant 0 : index
    %c0_1 = arith.constant 0 : index
    %3 = vector.load %arg7[%c0, %c0_1] : memref<512x32xf32, #tpu.memory_space<vmem>>, vector<512x32xf32>
    %c0_2 = arith.constant 0 : index
    %c0_3 = arith.constant 0 : index
    %4 = vector.load %arg3[%c0_2, %c0_3] : memref<512x48xf32, #tpu.memory_space<vmem>>, vector<512x48xf32>
    %c0_4 = arith.constant 0 : index
    %c0_5 = arith.constant 0 : index
    %5 = vector.load %arg4[%c0_4, %c0_5] : memref<48x32xf32, #tpu.memory_space<vmem>>, vector<48x32xf32>
    %cst = arith.constant dense<0.000000e+00> : vector<512x32xf32>
    %6 = tpu.matmul %4, %5, %cst {dimension_numbers = #tpu.dot_dimension_numbers<[1], [0], [0], [1], [0, 0, 1, 1], [], []>} : vector<512x48xf32>, vector<48x32xf32>, vector<512x32xf32> -> vector<512x32xf32>
    %7 = arith.addf %3, %6 : vector<512x32xf32>
    %c0_6 = arith.constant 0 : index
    %c0_7 = arith.constant 0 : index
    %8 = vector.load %arg7[%c0_6, %c0_7] : memref<512x32xf32, #tpu.memory_space<vmem>>, vector<512x32xf32>
    tpu.vector_store %arg7[%c0_6, %c0_7], %7 {strides = array<i32>} : memref<512x32xf32, #tpu.memory_space<vmem>>, vector<512x32xf32>,
    %c0_i32_8 = arith.constant 0 : i32
    %9 = arith.cmpi eq, %arg2, %c0_i32_8 : i32
    %10 = arith.extui %9 : i1 to i32
    %c0_i32_9 = arith.constant 0 : i32
    %11 = arith.cmpi ne, %10, %c0_i32_9 : i32
    scf.if %11 {
      %c0_10 = arith.constant 0 : index
      %c0_11 = arith.constant 0 : index
      %12 = vector.load %arg7[%c0_10, %c0_11] : memref<512x32xf32, #tpu.memory_space<vmem>>, vector<512x32xf32>
      %c0_12 = arith.constant 0 : index
      %c0_13 = arith.constant 0 : index
      %13 = vector.load %arg5[%c0_12, %c0_13] : memref<1x32xf32, #tpu.memory_space<vmem>>, vector<1x32xf32>
      %14 = vector.broadcast %13 : vector<1x32xf32> to vector<512x32xf32>
      %15 = arith.addf %12, %14 : vector<512x32xf32>
      %cst_14 = arith.constant 0.000000e+00 : f32
      %16 = vector.broadcast %cst_14 : f32 to vector<512x32xf32>
      %17 = arith.maximumf %15, %16 : vector<512x32xf32>
      %c0_15 = arith.constant 0 : index
      %c0_16 = arith.constant 0 : index
      %18 = vector.load %arg6[%c0_15, %c0_16] : memref<512x32xf32, #tpu.memory_space<vmem>>, vector<512x32xf32>
      tpu.vector_store %arg6[%c0_15, %c0_16], %17 {strides = array<i32>} : memref<512x32xf32, #tpu.memory_space<vmem>>, vector<512x32xf32>,
    } else {
    }
    return
  }
  func.func @transform_0(%arg0: i32, %arg1: i32, %arg2: i32) -> (i32, i32) {
    %c0_i32 = arith.constant 0 : i32
    return %arg0, %arg2 : i32, i32
  }
  func.func @transform_1(%arg0: i32, %arg1: i32, %arg2: i32) -> (i32, i32) {
    %c0_i32 = arith.constant 0 : i32
    return %arg2, %arg1 : i32, i32
  }
  func.func @transform_2(%arg0: i32, %arg1: i32, %arg2: i32) -> (i32, i32) {
    %c0_i32 = arith.constant 0 : i32
    %c0_i32_0 = arith.constant 0 : i32
    return %c0_i32, %arg1 : i32, i32
  }
  func.func @transform_3(%arg0: i32, %arg1: i32, %arg2: i32) -> (i32, i32) {
    %c0_i32 = arith.constant 0 : i32
    return %arg0, %arg1 : i32, i32
  }
}

module attributes {stable_mosaic.version = 11 : i64} {
  func.func @_gemm_bias_act_kernel(%arg0: i32, %arg1: i32, %arg2: i32, %arg3: memref<512x512xf32, #tpu.memory_space<vmem>>, %arg4: memref<512x64xf32, #tpu.memory_space<vmem>>, %arg5: memref<1x64xf32, #tpu.memory_space<vmem>>, %arg6: memref<512x64xf32, #tpu.memory_space<vmem>>, %arg7: memref<512x64xf32, #tpu.memory_space<vmem>>) attributes {dimension_semantics = [#tpu.dimension_semantics<parallel>, #tpu.dimension_semantics<parallel>, #tpu.dimension_semantics<arbitrary>], iteration_bounds = array<i64: 1, 1, 1>, scalar_prefetch = 0 : i64, scratch_operands = 1 : i64, tpu.core_type = #tpu.core_type<tc>, window_params = [{transform_indices = @transform_0, window_bounds = array<i64: 512, 512>}, {transform_indices = @transform_1, window_bounds = array<i64: 512, 64>}, {transform_indices = @transform_2, window_bounds = array<i64: 1, 64>}, {transform_indices = @transform_3, window_bounds = array<i64: 512, 64>}]} {
    %c0_i32 = arith.constant 0 : i32
    %0 = arith.cmpi eq, %arg2, %c0_i32 : i32
    %1 = arith.extui %0 : i1 to i32
    %c0_i32_0 = arith.constant 0 : i32
    %2 = arith.cmpi ne, %1, %c0_i32_0 : i32
    scf.if %2 {
      %cst_10 = arith.constant 0.000000e+00 : f32
      %12 = vector.broadcast %cst_10 : f32 to vector<512x64xf32>
      %c0_11 = arith.constant 0 : index
      %c0_12 = arith.constant 0 : index
      %13 = vector.load %arg7[%c0_11, %c0_12] : memref<512x64xf32, #tpu.memory_space<vmem>>, vector<512x64xf32>
      tpu.vector_store %arg7[%c0_11, %c0_12], %12 {strides = array<i32>} : memref<512x64xf32, #tpu.memory_space<vmem>>, vector<512x64xf32>,
    } else {
    }
    %c0 = arith.constant 0 : index
    %c0_1 = arith.constant 0 : index
    %3 = vector.load %arg7[%c0, %c0_1] : memref<512x64xf32, #tpu.memory_space<vmem>>, vector<512x64xf32>
    %c0_2 = arith.constant 0 : index
    %c0_3 = arith.constant 0 : index
    %4 = vector.load %arg3[%c0_2, %c0_3] : memref<512x512xf32, #tpu.memory_space<vmem>>, vector<512x512xf32>
    %c0_4 = arith.constant 0 : index
    %c0_5 = arith.constant 0 : index
    %5 = vector.load %arg4[%c0_4, %c0_5] : memref<512x64xf32, #tpu.memory_space<vmem>>, vector<512x64xf32>
    %cst = arith.constant dense<0.000000e+00> : vector<512x64xf32>
    %6 = tpu.matmul %4, %5, %cst {dimension_numbers = #tpu.dot_dimension_numbers<[1], [0], [0], [1], [0, 0, 1, 1], [], []>} : vector<512x512xf32>, vector<512x64xf32>, vector<512x64xf32> -> vector<512x64xf32>
    %7 = arith.addf %3, %6 : vector<512x64xf32>
    %c0_6 = arith.constant 0 : index
    %c0_7 = arith.constant 0 : index
    %8 = vector.load %arg7[%c0_6, %c0_7] : memref<512x64xf32, #tpu.memory_space<vmem>>, vector<512x64xf32>
    tpu.vector_store %arg7[%c0_6, %c0_7], %7 {strides = array<i32>} : memref<512x64xf32, #tpu.memory_space<vmem>>, vector<512x64xf32>,
    %c0_i32_8 = arith.constant 0 : i32
    %9 = arith.cmpi eq, %arg2, %c0_i32_8 : i32
    %10 = arith.extui %9 : i1 to i32
    %c0_i32_9 = arith.constant 0 : i32
    %11 = arith.cmpi ne, %10, %c0_i32_9 : i32
    scf.if %11 {
      %c0_10 = arith.constant 0 : index
      %c0_11 = arith.constant 0 : index
      %12 = vector.load %arg7[%c0_10, %c0_11] : memref<512x64xf32, #tpu.memory_space<vmem>>, vector<512x64xf32>
      %c0_12 = arith.constant 0 : index
      %c0_13 = arith.constant 0 : index
      %13 = vector.load %arg5[%c0_12, %c0_13] : memref<1x64xf32, #tpu.memory_space<vmem>>, vector<1x64xf32>
      %14 = vector.broadcast %13 : vector<1x64xf32> to vector<512x64xf32>
      %15 = arith.addf %12, %14 : vector<512x64xf32>
      %cst_14 = arith.constant 0.000000e+00 : f32
      %16 = vector.broadcast %cst_14 : f32 to vector<512x64xf32>
      %17 = arith.maximumf %15, %16 : vector<512x64xf32>
      %c0_15 = arith.constant 0 : index
      %c0_16 = arith.constant 0 : index
      %18 = vector.load %arg6[%c0_15, %c0_16] : memref<512x64xf32, #tpu.memory_space<vmem>>, vector<512x64xf32>
      tpu.vector_store %arg6[%c0_15, %c0_16], %17 {strides = array<i32>} : memref<512x64xf32, #tpu.memory_space<vmem>>, vector<512x64xf32>,
    } else {
    }
    return
  }
  func.func @transform_0(%arg0: i32, %arg1: i32, %arg2: i32) -> (i32, i32) {
    %c0_i32 = arith.constant 0 : i32
    return %arg0, %arg2 : i32, i32
  }
  func.func @transform_1(%arg0: i32, %arg1: i32, %arg2: i32) -> (i32, i32) {
    %c0_i32 = arith.constant 0 : i32
    return %arg2, %arg1 : i32, i32
  }
  func.func @transform_2(%arg0: i32, %arg1: i32, %arg2: i32) -> (i32, i32) {
    %c0_i32 = arith.constant 0 : i32
    %c0_i32_0 = arith.constant 0 : i32
    return %c0_i32, %arg1 : i32, i32
  }
  func.func @transform_3(%arg0: i32, %arg1: i32, %arg2: i32) -> (i32, i32) {
    %c0_i32 = arith.constant 0 : i32
    return %arg0, %arg1 : i32, i32
  }
}

module attributes {stable_mosaic.version = 11 : i64} {
  func.func @_gemm_bias_act_kernel(%arg0: i32, %arg1: i32, %arg2: i32, %arg3: memref<128x512xf32, #tpu.memory_space<vmem>>, %arg4: memref<512x128xf32, #tpu.memory_space<vmem>>, %arg5: memref<1x128xf32, #tpu.memory_space<vmem>>, %arg6: memref<128x128xf32, #tpu.memory_space<vmem>>, %arg7: memref<128x128xf32, #tpu.memory_space<vmem>>) attributes {dimension_semantics = [#tpu.dimension_semantics<parallel>, #tpu.dimension_semantics<parallel>, #tpu.dimension_semantics<arbitrary>], iteration_bounds = array<i64: 1, 1, 2>, scalar_prefetch = 0 : i64, scratch_operands = 1 : i64, tpu.core_type = #tpu.core_type<tc>, window_params = [{transform_indices = @transform_0, window_bounds = array<i64: 128, 512>}, {transform_indices = @transform_1, window_bounds = array<i64: 512, 128>}, {transform_indices = @transform_2, window_bounds = array<i64: 1, 128>}, {transform_indices = @transform_3, window_bounds = array<i64: 128, 128>}]} {
    %c0_i32 = arith.constant 0 : i32
    %0 = arith.cmpi eq, %arg2, %c0_i32 : i32
    %1 = arith.extui %0 : i1 to i32
    %c0_i32_0 = arith.constant 0 : i32
    %2 = arith.cmpi ne, %1, %c0_i32_0 : i32
    scf.if %2 {
      %cst_9 = arith.constant 0.000000e+00 : f32
      %12 = vector.broadcast %cst_9 : f32 to vector<128x128xf32>
      %c0_10 = arith.constant 0 : index
      %c0_11 = arith.constant 0 : index
      %13 = vector.load %arg7[%c0_10, %c0_11] : memref<128x128xf32, #tpu.memory_space<vmem>>, vector<128x128xf32>
      tpu.vector_store %arg7[%c0_10, %c0_11], %12 {strides = array<i32>} : memref<128x128xf32, #tpu.memory_space<vmem>>, vector<128x128xf32>,
    } else {
    }
    %c0 = arith.constant 0 : index
    %c0_1 = arith.constant 0 : index
    %3 = vector.load %arg7[%c0, %c0_1] : memref<128x128xf32, #tpu.memory_space<vmem>>, vector<128x128xf32>
    %c0_2 = arith.constant 0 : index
    %c0_3 = arith.constant 0 : index
    %4 = vector.load %arg3[%c0_2, %c0_3] : memref<128x512xf32, #tpu.memory_space<vmem>>, vector<128x512xf32>
    %c0_4 = arith.constant 0 : index
    %c0_5 = arith.constant 0 : index
    %5 = vector.load %arg4[%c0_4, %c0_5] : memref<512x128xf32, #tpu.memory_space<vmem>>, vector<512x128xf32>
    %cst = arith.constant dense<0.000000e+00> : vector<128x128xf32>
    %6 = tpu.matmul %4, %5, %cst {dimension_numbers = #tpu.dot_dimension_numbers<[1], [0], [0], [1], [0, 0, 1, 1], [], []>} : vector<128x512xf32>, vector<512x128xf32>, vector<128x128xf32> -> vector<128x128xf32>
    %7 = arith.addf %3, %6 : vector<128x128xf32>
    %c0_6 = arith.constant 0 : index
    %c0_7 = arith.constant 0 : index
    %8 = vector.load %arg7[%c0_6, %c0_7] : memref<128x128xf32, #tpu.memory_space<vmem>>, vector<128x128xf32>
    tpu.vector_store %arg7[%c0_6, %c0_7], %7 {strides = array<i32>} : memref<128x128xf32, #tpu.memory_space<vmem>>, vector<128x128xf32>,
    %c1_i32 = arith.constant 1 : i32
    %9 = arith.cmpi eq, %arg2, %c1_i32 : i32
    %10 = arith.extui %9 : i1 to i32
    %c0_i32_8 = arith.constant 0 : i32
    %11 = arith.cmpi ne, %10, %c0_i32_8 : i32
    scf.if %11 {
      %c0_9 = arith.constant 0 : index
      %c0_10 = arith.constant 0 : index
      %12 = vector.load %arg7[%c0_9, %c0_10] : memref<128x128xf32, #tpu.memory_space<vmem>>, vector<128x128xf32>
      %c0_11 = arith.constant 0 : index
      %c0_12 = arith.constant 0 : index
      %13 = vector.load %arg5[%c0_11, %c0_12] : memref<1x128xf32, #tpu.memory_space<vmem>>, vector<1x128xf32>
      %14 = vector.broadcast %13 : vector<1x128xf32> to vector<128x128xf32>
      %15 = arith.addf %12, %14 : vector<128x128xf32>
      %cst_13 = arith.constant 0.000000e+00 : f32
      %16 = vector.broadcast %cst_13 : f32 to vector<128x128xf32>
      %17 = arith.maximumf %15, %16 : vector<128x128xf32>
      %c0_14 = arith.constant 0 : index
      %c0_15 = arith.constant 0 : index
      %18 = vector.load %arg6[%c0_14, %c0_15] : memref<128x128xf32, #tpu.memory_space<vmem>>, vector<128x128xf32>
      tpu.vector_store %arg6[%c0_14, %c0_15], %17 {strides = array<i32>} : memref<128x128xf32, #tpu.memory_space<vmem>>, vector<128x128xf32>,
    } else {
    }
    return
  }
  func.func @transform_0(%arg0: i32, %arg1: i32, %arg2: i32) -> (i32, i32) {
    %c0_i32 = arith.constant 0 : i32
    return %arg0, %arg2 : i32, i32
  }
  func.func @transform_1(%arg0: i32, %arg1: i32, %arg2: i32) -> (i32, i32) {
    %c0_i32 = arith.constant 0 : i32
    return %arg2, %arg1 : i32, i32
  }
  func.func @transform_2(%arg0: i32, %arg1: i32, %arg2: i32) -> (i32, i32) {
    %c0_i32 = arith.constant 0 : i32
    %c0_i32_0 = arith.constant 0 : i32
    return %c0_i32, %arg1 : i32, i32
  }
  func.func @transform_3(%arg0: i32, %arg1: i32, %arg2: i32) -> (i32, i32) {
    %c0_i32 = arith.constant 0 : i32
    return %arg0, %arg1 : i32, i32
  }
}

module attributes {stable_mosaic.version = 11 : i64} {
  func.func @_gemm_bias_act_kernel(%arg0: i32, %arg1: i32, %arg2: i32, %arg3: memref<32x512xf32, #tpu.memory_space<vmem>>, %arg4: memref<512x256xf32, #tpu.memory_space<vmem>>, %arg5: memref<1x256xf32, #tpu.memory_space<vmem>>, %arg6: memref<32x256xf32, #tpu.memory_space<vmem>>, %arg7: memref<32x256xf32, #tpu.memory_space<vmem>>) attributes {dimension_semantics = [#tpu.dimension_semantics<parallel>, #tpu.dimension_semantics<parallel>, #tpu.dimension_semantics<arbitrary>], iteration_bounds = array<i64: 1, 1, 4>, scalar_prefetch = 0 : i64, scratch_operands = 1 : i64, tpu.core_type = #tpu.core_type<tc>, window_params = [{transform_indices = @transform_0, window_bounds = array<i64: 32, 512>}, {transform_indices = @transform_1, window_bounds = array<i64: 512, 256>}, {transform_indices = @transform_2, window_bounds = array<i64: 1, 256>}, {transform_indices = @transform_3, window_bounds = array<i64: 32, 256>}]} {
    %c0_i32 = arith.constant 0 : i32
    %0 = arith.cmpi eq, %arg2, %c0_i32 : i32
    %1 = arith.extui %0 : i1 to i32
    %c0_i32_0 = arith.constant 0 : i32
    %2 = arith.cmpi ne, %1, %c0_i32_0 : i32
    scf.if %2 {
      %cst_9 = arith.constant 0.000000e+00 : f32
      %12 = vector.broadcast %cst_9 : f32 to vector<32x256xf32>
      %c0_10 = arith.constant 0 : index
      %c0_11 = arith.constant 0 : index
      %13 = vector.load %arg7[%c0_10, %c0_11] : memref<32x256xf32, #tpu.memory_space<vmem>>, vector<32x256xf32>
      tpu.vector_store %arg7[%c0_10, %c0_11], %12 {strides = array<i32>} : memref<32x256xf32, #tpu.memory_space<vmem>>, vector<32x256xf32>,
    } else {
    }
    %c0 = arith.constant 0 : index
    %c0_1 = arith.constant 0 : index
    %3 = vector.load %arg7[%c0, %c0_1] : memref<32x256xf32, #tpu.memory_space<vmem>>, vector<32x256xf32>
    %c0_2 = arith.constant 0 : index
    %c0_3 = arith.constant 0 : index
    %4 = vector.load %arg3[%c0_2, %c0_3] : memref<32x512xf32, #tpu.memory_space<vmem>>, vector<32x512xf32>
    %c0_4 = arith.constant 0 : index
    %c0_5 = arith.constant 0 : index
    %5 = vector.load %arg4[%c0_4, %c0_5] : memref<512x256xf32, #tpu.memory_space<vmem>>, vector<512x256xf32>
    %cst = arith.constant dense<0.000000e+00> : vector<32x256xf32>
    %6 = tpu.matmul %4, %5, %cst {dimension_numbers = #tpu.dot_dimension_numbers<[1], [0], [0], [1], [0, 0, 1, 1], [], []>} : vector<32x512xf32>, vector<512x256xf32>, vector<32x256xf32> -> vector<32x256xf32>
    %7 = arith.addf %3, %6 : vector<32x256xf32>
    %c0_6 = arith.constant 0 : index
    %c0_7 = arith.constant 0 : index
    %8 = vector.load %arg7[%c0_6, %c0_7] : memref<32x256xf32, #tpu.memory_space<vmem>>, vector<32x256xf32>
    tpu.vector_store %arg7[%c0_6, %c0_7], %7 {strides = array<i32>} : memref<32x256xf32, #tpu.memory_space<vmem>>, vector<32x256xf32>,
    %c3_i32 = arith.constant 3 : i32
    %9 = arith.cmpi eq, %arg2, %c3_i32 : i32
    %10 = arith.extui %9 : i1 to i32
    %c0_i32_8 = arith.constant 0 : i32
    %11 = arith.cmpi ne, %10, %c0_i32_8 : i32
    scf.if %11 {
      %c0_9 = arith.constant 0 : index
      %c0_10 = arith.constant 0 : index
      %12 = vector.load %arg7[%c0_9, %c0_10] : memref<32x256xf32, #tpu.memory_space<vmem>>, vector<32x256xf32>
      %c0_11 = arith.constant 0 : index
      %c0_12 = arith.constant 0 : index
      %13 = vector.load %arg5[%c0_11, %c0_12] : memref<1x256xf32, #tpu.memory_space<vmem>>, vector<1x256xf32>
      %14 = vector.broadcast %13 : vector<1x256xf32> to vector<32x256xf32>
      %15 = arith.addf %12, %14 : vector<32x256xf32>
      %cst_13 = arith.constant 0.000000e+00 : f32
      %16 = vector.broadcast %cst_13 : f32 to vector<32x256xf32>
      %17 = arith.maximumf %15, %16 : vector<32x256xf32>
      %c0_14 = arith.constant 0 : index
      %c0_15 = arith.constant 0 : index
      %18 = vector.load %arg6[%c0_14, %c0_15] : memref<32x256xf32, #tpu.memory_space<vmem>>, vector<32x256xf32>
      tpu.vector_store %arg6[%c0_14, %c0_15], %17 {strides = array<i32>} : memref<32x256xf32, #tpu.memory_space<vmem>>, vector<32x256xf32>,
    } else {
    }
    return
  }
  func.func @transform_0(%arg0: i32, %arg1: i32, %arg2: i32) -> (i32, i32) {
    %c0_i32 = arith.constant 0 : i32
    return %arg0, %arg2 : i32, i32
  }
  func.func @transform_1(%arg0: i32, %arg1: i32, %arg2: i32) -> (i32, i32) {
    %c0_i32 = arith.constant 0 : i32
    return %arg2, %arg1 : i32, i32
  }
  func.func @transform_2(%arg0: i32, %arg1: i32, %arg2: i32) -> (i32, i32) {
    %c0_i32 = arith.constant 0 : i32
    %c0_i32_0 = arith.constant 0 : i32
    return %c0_i32, %arg1 : i32, i32
  }
  func.func @transform_3(%arg0: i32, %arg1: i32, %arg2: i32) -> (i32, i32) {
    %c0_i32 = arith.constant 0 : i32
    return %arg0, %arg1 : i32, i32
  }
}

module attributes {stable_mosaic.version = 11 : i64} {
  func.func @_gemm_bias_act_kernel(%arg0: i32, %arg1: i32, %arg2: i32, %arg3: memref<2x512xf32, #tpu.memory_space<vmem>>, %arg4: memref<512x128xf32, #tpu.memory_space<vmem>>, %arg5: memref<1x128xf32, #tpu.memory_space<vmem>>, %arg6: memref<2x128xf32, #tpu.memory_space<vmem>>, %arg7: memref<2x128xf32, #tpu.memory_space<vmem>>) attributes {dimension_semantics = [#tpu.dimension_semantics<parallel>, #tpu.dimension_semantics<parallel>, #tpu.dimension_semantics<arbitrary>], iteration_bounds = array<i64: 1, 1, 8>, scalar_prefetch = 0 : i64, scratch_operands = 1 : i64, tpu.core_type = #tpu.core_type<tc>, window_params = [{transform_indices = @transform_0, window_bounds = array<i64: 2, 512>}, {transform_indices = @transform_1, window_bounds = array<i64: 512, 128>}, {transform_indices = @transform_2, window_bounds = array<i64: 1, 128>}, {transform_indices = @transform_3, window_bounds = array<i64: 2, 128>}]} {
    %c0_i32 = arith.constant 0 : i32
    %0 = arith.cmpi eq, %arg2, %c0_i32 : i32
    %1 = arith.extui %0 : i1 to i32
    %c0_i32_0 = arith.constant 0 : i32
    %2 = arith.cmpi ne, %1, %c0_i32_0 : i32
    scf.if %2 {
      %cst_9 = arith.constant 0.000000e+00 : f32
      %12 = vector.broadcast %cst_9 : f32 to vector<2x128xf32>
      %c0_10 = arith.constant 0 : index
      %c0_11 = arith.constant 0 : index
      %13 = vector.load %arg7[%c0_10, %c0_11] : memref<2x128xf32, #tpu.memory_space<vmem>>, vector<2x128xf32>
      tpu.vector_store %arg7[%c0_10, %c0_11], %12 {strides = array<i32>} : memref<2x128xf32, #tpu.memory_space<vmem>>, vector<2x128xf32>,
    } else {
    }
    %c0 = arith.constant 0 : index
    %c0_1 = arith.constant 0 : index
    %3 = vector.load %arg7[%c0, %c0_1] : memref<2x128xf32, #tpu.memory_space<vmem>>, vector<2x128xf32>
    %c0_2 = arith.constant 0 : index
    %c0_3 = arith.constant 0 : index
    %4 = vector.load %arg3[%c0_2, %c0_3] : memref<2x512xf32, #tpu.memory_space<vmem>>, vector<2x512xf32>
    %c0_4 = arith.constant 0 : index
    %c0_5 = arith.constant 0 : index
    %5 = vector.load %arg4[%c0_4, %c0_5] : memref<512x128xf32, #tpu.memory_space<vmem>>, vector<512x128xf32>
    %cst = arith.constant dense<0.000000e+00> : vector<2x128xf32>
    %6 = tpu.matmul %4, %5, %cst {dimension_numbers = #tpu.dot_dimension_numbers<[1], [0], [0], [1], [0, 0, 1, 1], [], []>} : vector<2x512xf32>, vector<512x128xf32>, vector<2x128xf32> -> vector<2x128xf32>
    %7 = arith.addf %3, %6 : vector<2x128xf32>
    %c0_6 = arith.constant 0 : index
    %c0_7 = arith.constant 0 : index
    %8 = vector.load %arg7[%c0_6, %c0_7] : memref<2x128xf32, #tpu.memory_space<vmem>>, vector<2x128xf32>
    tpu.vector_store %arg7[%c0_6, %c0_7], %7 {strides = array<i32>} : memref<2x128xf32, #tpu.memory_space<vmem>>, vector<2x128xf32>,
    %c7_i32 = arith.constant 7 : i32
    %9 = arith.cmpi eq, %arg2, %c7_i32 : i32
    %10 = arith.extui %9 : i1 to i32
    %c0_i32_8 = arith.constant 0 : i32
    %11 = arith.cmpi ne, %10, %c0_i32_8 : i32
    scf.if %11 {
      %c0_9 = arith.constant 0 : index
      %c0_10 = arith.constant 0 : index
      %12 = vector.load %arg7[%c0_9, %c0_10] : memref<2x128xf32, #tpu.memory_space<vmem>>, vector<2x128xf32>
      %c0_11 = arith.constant 0 : index
      %c0_12 = arith.constant 0 : index
      %13 = vector.load %arg5[%c0_11, %c0_12] : memref<1x128xf32, #tpu.memory_space<vmem>>, vector<1x128xf32>
      %14 = vector.broadcast %13 : vector<1x128xf32> to vector<2x128xf32>
      %15 = arith.addf %12, %14 : vector<2x128xf32>
      %c0_13 = arith.constant 0 : index
      %c0_14 = arith.constant 0 : index
      %16 = vector.load %arg6[%c0_13, %c0_14] : memref<2x128xf32, #tpu.memory_space<vmem>>, vector<2x128xf32>
      tpu.vector_store %arg6[%c0_13, %c0_14], %15 {strides = array<i32>} : memref<2x128xf32, #tpu.memory_space<vmem>>, vector<2x128xf32>,
    } else {
    }
    return
  }
  func.func @transform_0(%arg0: i32, %arg1: i32, %arg2: i32) -> (i32, i32) {
    %c0_i32 = arith.constant 0 : i32
    return %arg0, %arg2 : i32, i32
  }
  func.func @transform_1(%arg0: i32, %arg1: i32, %arg2: i32) -> (i32, i32) {
    %c0_i32 = arith.constant 0 : i32
    return %arg2, %arg1 : i32, i32
  }
  func.func @transform_2(%arg0: i32, %arg1: i32, %arg2: i32) -> (i32, i32) {
    %c0_i32 = arith.constant 0 : i32
    %c0_i32_0 = arith.constant 0 : i32
    return %c0_i32, %arg1 : i32, i32
  }
  func.func @transform_3(%arg0: i32, %arg1: i32, %arg2: i32) -> (i32, i32) {
    %c0_i32 = arith.constant 0 : i32
    return %arg0, %arg1 : i32, i32
  }
}

</mosaic_0001>

<llo_original>
// kernel: cnn_encoder_forward.5
$region0: #{cnn_encoder_forward.5}
  #allocation0 [shape = 'u32[]', space=smem, size = 0x4, offset = 0x4, fixed_abs, tag = 'smem constant byte address 0x4 - core index']
  #allocation1 [shape = 'u32[72,128]{1,0:T(1,128)}', space=vmem, size = 0x9000, scoped, tag = 'internal scratch']
  #allocation2 [shape = 'f32[512,32]{1,0:T(8,128)}', space=vmem, size = 0x40000, scoped, tag = 'scratch operand']
  %s0 = inlined_call_operand.vmem [shape: f32[2048,48], index: 0, kind: input, shape index: {}]
  %s1 = inlined_call_operand.vmem [shape: f32[48,32], index: 1, kind: input, shape index: {}]
  %s2 = inlined_call_operand.vmem [shape: f32[1,32], index: 2, kind: input, shape index: {}]
  %s3 = inlined_call_operand.vmem [shape: f32[2048,32], index: 3, kind: output, shape index: {}]
  %s4 = sld [smem:[#allocation0]]
  $region53: #{cnn_encoder_forward.5} parent=0
    _
  %s6 = ssub.s32 1, %s4
  %s7 = scalar_select 0, %s6, %s4
  loop: start=0, step=1, limit=6
  $region2: #{cnn_encoder_forward.5} parent=0 // loop_pre_header
    _
  $region3: #{cnn_encoder_forward.5} parent=0 // loop_header
    %s9 = sphi 0, %s13
    %p10 = scmp.ge.s32.totalorder %s9, 6
    %s16 = sphi 0, %s35
    %s17 = sphi 0, %s31
    %s18 = sphi 0, %s27
    %s19 = sphi 0, %s16
    %s20 = sphi 0, %s17
    %s21 = sphi 0, %s18
    %s22 = sphi 0, %s19
    %s23 = sphi 0, %s20
    %s24 = sphi 0, %s21
    %s40 = sphi 0, %s42
    %s43 = sphi 0, %s40
    %s44 = sphi 0, %s43
    %s60 = sphi 0, %s44
    %s68 = sphi 0, %s70
    %s71 = sphi 0, %s68
    %s72 = sphi 0, %s71
    %s88 = sphi 0, %s72
    %s94 = sphi 0, %s96
    %s97 = sphi 0, %s94
    %s98 = sphi 0, %s97
    %s114 = sphi 0, %s98
    %s122 = sphi 0, %s124
    %s125 = sphi 0, %s122
    %s126 = sphi 0, %s125
    %s142 = sphi 0, %s126
  $region4: #{cnn_encoder_forward.5} parent=0 // loop_header_branch
    %12 = sbr.rel (%p10) target = $region8
  $region5: #{cnn_encoder_forward.5} parent=0 // loop_body
    %s14 = ssub.s32 %s9, 1
    %s15 = ssub.s32 %s9, 2
    %s25 = sadd.s32 1, %s18
    %p26 = scmp.ge.s32.totalorder %s25, 1
    %s27 = scalar_select %p26, 0, %s25
    %s28 = sadd.s32 1, %s17
    %s29 = scalar_select %p26, %s28, %s17
    %p30 = scmp.ge.s32.totalorder %s29, 1
    %s31 = scalar_select %p30, 0, %s29
    %s32 = sadd.s32 1, %s16
    %s33 = scalar_select %p30, %s32, %s16
    %p34 = scmp.ge.s32.totalorder %s33, 4
    %s35 = scalar_select %p34, 0, %s33
    %s36 = ssub.s32 %s16, %s35
    %s37 = ssub.s32 %s18, %s27
    %s38 = sor.u32 %s36, %s37
    %p39 = scmp.eq.s32.totalorder %s38, 0
    %s41 = sadd.s32 %s40, 1
    %s42 = scalar_select %p39, %s40, %s41
    %p45 = pneg %p39
    %p46 = scmp.eq.s32.totalorder %s9, 3
    %p47 = por %p45, %p46
    %p48 = scmp.ne.s32.totalorder %s40, %s43
    %p49 = scmp.eq.s32.totalorder %s9, 0
    %p50 = por %p48, %p49
    %p51 = scmp.ne.s32.totalorder %s40, %s43
    %p52 = scmp.eq.s32.totalorder %s14, 3
    %p53 = por %p51, %p52
    %p54 = scmp.ne.s32.totalorder %s43, %s44
    %p55 = scmp.eq.s32.totalorder %s14, 0
    %p56 = por %p54, %p55
    %p57 = scmp.ne.s32.totalorder %s43, %s44
    %p58 = scmp.eq.s32.totalorder %s15, 3
    %p59 = por %p57, %p58
    %p61 = scmp.ne.s32.totalorder %s44, %s60
    %p62 = scmp.eq.s32.totalorder %s15, 0
    %p63 = por %p61, %p62
    %s64 = ssub.s32 %s18, %s27
    %s65 = ssub.s32 %s17, %s31
    %s66 = sor.u32 %s64, %s65
    %p67 = scmp.eq.s32.totalorder %s66, 0
    %s69 = sadd.s32 %s68, 1
    %s70 = scalar_select %p67, %s68, %s69
    %p73 = pneg %p67
    %p74 = scmp.eq.s32.totalorder %s9, 3
    %p75 = por %p73, %p74
    %p76 = scmp.ne.s32.totalorder %s68, %s71
    %p77 = scmp.eq.s32.totalorder %s9, 0
    %p78 = por %p76, %p77
    %p79 = scmp.ne.s32.totalorder %s68, %s71
    %p80 = scmp.eq.s32.totalorder %s14, 3
    %p81 = por %p79, %p80
    %p82 = scmp.ne.s32.totalorder %s71, %s72
    %p83 = scmp.eq.s32.totalorder %s14, 0
    %p84 = por %p82, %p83
    %p85 = scmp.ne.s32.totalorder %s71, %s72
    %p86 = scmp.eq.s32.totalorder %s15, 3
    %p87 = por %p85, %p86
    %p89 = scmp.ne.s32.totalorder %s72, %s88
    %p90 = scmp.eq.s32.totalorder %s15, 0
    %p91 = por %p89, %p90
    %s92 = ssub.s32 %s17, %s31
    %p93 = scmp.eq.s32.totalorder %s92, 0
    %s95 = sadd.s32 %s94, 1
    %s96 = scalar_select %p93, %s94, %s95
    %p99 = pneg %p93
    %p100 = scmp.eq.s32.totalorder %s9, 3
    %p101 = por %p99, %p100
    %p102 = scmp.ne.s32.totalorder %s94, %s97
    %p103 = scmp.eq.s32.totalorder %s9, 0
    %p104 = por %p102, %p103
    %p105 = scmp.ne.s32.totalorder %s94, %s97
    %p106 = scmp.eq.s32.totalorder %s14, 3
    %p107 = por %p105, %p106
    %p108 = scmp.ne.s32.totalorder %s97, %s98
    %p109 = scmp.eq.s32.totalorder %s14, 0
    %p110 = por %p108, %p109
    %p111 = scmp.ne.s32.totalorder %s97, %s98
    %p112 = scmp.eq.s32.totalorder %s15, 3
    %p113 = por %p111, %p112
    %p115 = scmp.ne.s32.totalorder %s98, %s114
    %p116 = scmp.eq.s32.totalorder %s15, 0
    %p117 = por %p115, %p116
    %s118 = ssub.s32 %s16, %s35
    %s119 = ssub.s32 %s17, %s31
    %s120 = sor.u32 %s118, %s119
    %p121 = scmp.eq.s32.totalorder %s120, 0
    %s123 = sadd.s32 %s122, 1
    %s124 = scalar_select %p121, %s122, %s123
    %p127 = pneg %p121
    %p128 = scmp.eq.s32.totalorder %s9, 3
    %p129 = por %p127, %p128
    %p130 = scmp.ne.s32.totalorder %s122, %s125
    %p131 = scmp.eq.s32.totalorder %s9, 0
    %p132 = por %p130, %p131
    %p133 = scmp.ne.s32.totalorder %s122, %s125
    %p134 = scmp.eq.s32.totalorder %s14, 3
    %p135 = por %p133, %p134
    %p136 = scmp.ne.s32.totalorder %s125, %s126
    %p137 = scmp.eq.s32.totalorder %s14, 0
    %p138 = por %p136, %p137
    %p139 = scmp.ne.s32.totalorder %s125, %s126
    %p140 = scmp.eq.s32.totalorder %s15, 3
    %p141 = por %p139, %p140
    %p143 = scmp.ne.s32.totalorder %s126, %s142
    %p144 = scmp.eq.s32.totalorder %s15, 0
    %p145 = por %p143, %p144
    %p146 = scmp.le.s32.totalorder 1, %s9
    %p147 = scmp.lt.s32.totalorder %s9, 5
    %p148 = pnand %p146, %p147
    %p149 = pneg %p148
    // Predicated region
    $region9: #{cnn_encoder_forward.5} parent=5 // pred_check
      _
    $region10: #{cnn_encoder_forward.5} parent=5 // pred_check_branch
      %151 = sbr.rel (%p148) target = $region12
    $region11: #{cnn_encoder_forward.5} parent=5 // pred_region
      %s152 = ssub.s32 %s9, 1
      // Predicated region
      $region13: #{cnn_encoder_forward.5} parent=11 // pred_check
        %p153 = pneg %p84
      $region14: #{cnn_encoder_forward.5} parent=11 // pred_check_branch
        %155 = sbr.rel (%p153) target = $region16
      $region15: #{cnn_encoder_forward.5} parent=11 // pred_region
        %s156 = smul.u32 6, %s21
        %p157 = scmp.lt.s32.totalorder %s156, 5
        %s158 = scalar_select %p157, %s156, 5
        %p159 = scmp.lt.s32.totalorder %s20, 0
        %s160 = scalar_select %p159, %s20, 0
        %s161 = sadd.s32 %s160, %s158
        %s162 = smul.addr %s161, 8
        %s163 = scalar_lea.vmem %s1, %s162
        %s164 = smul.u32 6, %s21
      $region16: #{cnn_encoder_forward.5} parent=11 // pred_fallthru
        _
      // Predicated region
      $region17: #{cnn_encoder_forward.5} parent=11 // pred_check
        %p165 = pneg %p110
      $region18: #{cnn_encoder_forward.5} parent=11 // pred_check_branch
        %167 = sbr.rel (%p165) target = $region20
      $region19: #{cnn_encoder_forward.5} parent=11 // pred_region
        %p168 = scmp.lt.s32.totalorder %s20, 0
        %s169 = scalar_select %p168, %s20, 0
        %s170 = scalar_lea.vmem %s2, %s169
      $region20: #{cnn_encoder_forward.5} parent=11 // pred_fallthru
        _
    $region12: #{cnn_encoder_forward.5} parent=5 // pred_fallthru
      _
    %p171 = scmp.lt.s32.totalorder %s9, 4
    // Predicated region
    $region21: #{cnn_encoder_forward.5} parent=5 // pred_check
      %p172 = pneg %p171
    $region22: #{cnn_encoder_forward.5} parent=5 // pred_check_branch
      %174 = sbr.rel (%p172) target = $region24
    $region23: #{cnn_encoder_forward.5} parent=5 // pred_region
      // Predicated region
      $region25: #{cnn_encoder_forward.5} parent=23 // pred_check
        %p175 = pneg %p50
      $region26: #{cnn_encoder_forward.5} parent=23 // pred_check_branch
        %177 = sbr.rel (%p175) target = $region28
      $region27: #{cnn_encoder_forward.5} parent=23 // pred_region
        %s178 = smul.u32 64, %s16
        %p179 = scmp.lt.s32.totalorder %s178, 255
        %s180 = scalar_select %p179, %s178, 255
        %p181 = scmp.lt.s32.totalorder %s18, 0
        %s182 = scalar_select %p181, %s18, 0
        %s183 = sadd.s32 %s182, %s180
        %s184 = smul.addr %s183, 8
        %s185 = scalar_lea.vmem %s0, %s184
        %s186 = smul.u32 64, %s16
      $region28: #{cnn_encoder_forward.5} parent=23 // pred_fallthru
        _
    $region24: #{cnn_encoder_forward.5} parent=5 // pred_fallthru
      _
    %p187 = scmp.le.s32.totalorder 1, %s9
    %p188 = scmp.lt.s32.totalorder %s9, 5
    %p189 = pnand %p187, %p188
    %p190 = pneg %p189
    // Predicated region
    $region29: #{cnn_encoder_forward.5} parent=5 // pred_check
      _
    $region30: #{cnn_encoder_forward.5} parent=5 // pred_check_branch
      %192 = sbr.rel (%p189) target = $region32
    $region31: #{cnn_encoder_forward.5} parent=5 // pred_region
      %s193 = ssub.s32 %s9, 1
      %s194 = smul.u32 64, %s19
      %p195 = scmp.lt.s32.totalorder %s194, 255
      %s196 = scalar_select %p195, %s194, 255
      %p197 = scmp.lt.s32.totalorder %s21, 0
      %s198 = scalar_select %p197, %s21, 0
      %s199 = sadd.s32 %s198, %s196
      %s200 = smul.addr %s199, 8
      %s201 = scalar_lea.vmem %s0, %s200
      %p202 = pneg %p56
      %p203 = pneg %p53
      %s204 = smul.u32 6, %s21
      %p205 = scmp.lt.s32.totalorder %s204, 5
      %s206 = scalar_select %p205, %s204, 5
      %p207 = scmp.lt.s32.totalorder %s20, 0
      %s208 = scalar_select %p207, %s20, 0
      %s209 = sadd.s32 %s208, %s206
      %s210 = smul.addr %s209, 8
      %s211 = scalar_lea.vmem %s1, %s210
      %p212 = pneg %p84
      %p213 = pneg %p81
      %p214 = scmp.lt.s32.totalorder %s20, 0
      %s215 = scalar_select %p214, %s20, 0
      %s216 = scalar_lea.vmem %s2, %s215
      %p217 = pneg %p110
      %p218 = pneg %p107
      %p219 = pneg %p138
      %p220 = pneg %p135
      %s221 = smul.u32 64, %s19
      %p222 = scmp.lt.s32.totalorder %s221, 255
      %s223 = scalar_select %p222, %s221, 255
      %p224 = scmp.lt.s32.totalorder %s20, 0
      %s225 = scalar_select %p224, %s20, 0
      %s226 = sadd.s32 %s225, %s223
      %s227 = smul.addr %s226, 8
      %s228 = scalar_lea.vmem %s3, %s227
      %s229 = smul.u32 64, %s19
      %p230 = scmp.lt.s32.totalorder %s229, 255
      %s231 = scalar_select %p230, %s229, 255
      %p232 = scmp.lt.s32.totalorder %s21, 0
      %s233 = scalar_select %p232, %s21, 0
      %s234 = sadd.s32 %s233, %s231
      %s235 = smul.addr %s234, 8
      %s236 = scalar_lea.vmem %s0, %s235
      %s237 = smul.u32 64, %s19
      %s238 = smul.u32 6, %s21
      %p239 = scmp.lt.s32.totalorder %s238, 5
      %s240 = scalar_select %p239, %s238, 5
      %p241 = scmp.lt.s32.totalorder %s20, 0
      %s242 = scalar_select %p241, %s20, 0
      %s243 = sadd.s32 %s242, %s240
      %s244 = smul.addr %s243, 8
      %s245 = scalar_lea.vmem %s1, %s244
      %s246 = smul.u32 6, %s21
      %p247 = scmp.lt.s32.totalorder %s20, 0
      %s248 = scalar_select %p247, %s20, 0
      %s249 = scalar_lea.vmem %s2, %s248
      %s250 = smul.u32 64, %s19
      %p251 = scmp.lt.s32.totalorder %s250, 255
      %s252 = scalar_select %p251, %s250, 255
      %p253 = scmp.lt.s32.totalorder %s20, 0
      %s254 = scalar_select %p253, %s20, 0
      %s255 = sadd.s32 %s254, %s252
      %s256 = smul.addr %s255, 8
      %s257 = scalar_lea.vmem %s3, %s256
      %s258 = smul.u32 64, %s19
      %p259 = scmp.eq.s32.totalorder %s21, 0
      // Predicated region
      $region33: #{cnn_encoder_forward.5} parent=31 // pred_check
        %p260 = pneg %p259
      $region34: #{cnn_encoder_forward.5} parent=31 // pred_check_branch
        %262 = sbr.rel (%p260) target = $region36
      $region35: #{cnn_encoder_forward.5} parent=31 // pred_region
        %vm263 = vcmask 261120
        %264 = vst.msk [vmem:[#allocation2] sm:$0xff] %vm263, 0.0
        %265 = vst.msk [vmem:[#allocation2 + $0x8] sm:$0xff] %vm263, 0.0
        %266 = vst.msk [vmem:[#allocation2 + $0x10] sm:$0xff] %vm263, 0.0
        %267 = vst.msk [vmem:[#allocation2 + $0x18] sm:$0xff] %vm263, 0.0
        %268 = vst.msk [vmem:[#allocation2 + $0x20] sm:$0xff] %vm263, 0.0
        %269 = vst.msk [vmem:[#allocation2 + $0x28] sm:$0xff] %vm263, 0.0
        %270 = vst.msk [vmem:[#allocation2 + $0x30] sm:$0xff] %vm263, 0.0
        %271 = vst.msk [vmem:[#allocation2 + $0x38] sm:$0xff] %vm263, 0.0
        %272 = vst.msk [vmem:[#allocation2 + $0x40] sm:$0xff] %vm263, 0.0
        %273 = vst.msk [vmem:[#allocation2 + $0x48] sm:$0xff] %vm263, 0.0
        %274 = vst.msk [vmem:[#allocation2 + $0x50] sm:$0xff] %vm263, 0.0
        %275 = vst.msk [vmem:[#allocation2 + $0x58] sm:$0xff] %vm263, 0.0
        %276 = vst.msk [vmem:[#allocation2 + $0x60] sm:$0xff] %vm263, 0.0
        %277 = vst.msk [vmem:[#allocation2 + $0x68] sm:$0xff] %vm263, 0.0
        %278 = vst.msk [vmem:[#allocation2 + $0x70] sm:$0xff] %vm263, 0.0
        %279 = vst.msk [vmem:[#allocation2 + $0x78] sm:$0xff] %vm263, 0.0
        %280 = vst.msk [vmem:[#allocation2 + $0x80] sm:$0xff] %vm263, 0.0
        %281 = vst.msk [vmem:[#allocation2 + $0x88] sm:$0xff] %vm263, 0.0
        %282 = vst.msk [vmem:[#allocation2 + $0x90] sm:$0xff] %vm263, 0.0
        %283 = vst.msk [vmem:[#allocation2 + $0x98] sm:$0xff] %vm263, 0.0
        %284 = vst.msk [vmem:[#allocation2 + $0xa0] sm:$0xff] %vm263, 0.0
        %285 = vst.msk [vmem:[#allocation2 + $0xa8] sm:$0xff] %vm263, 0.0
        %286 = vst.msk [vmem:[#allocation2 + $0xb0] sm:$0xff] %vm263, 0.0
        %287 = vst.msk [vmem:[#allocation2 + $0xb8] sm:$0xff] %vm263, 0.0
        %288 = vst.msk [vmem:[#allocation2 + $0xc0] sm:$0xff] %vm263, 0.0
        %289 = vst.msk [vmem:[#allocation2 + $0xc8] sm:$0xff] %vm263, 0.0
        %290 = vst.msk [vmem:[#allocation2 + $0xd0] sm:$0xff] %vm263, 0.0
        %291 = vst.msk [vmem:[#allocation2 + $0xd8] sm:$0xff] %vm263, 0.0
        %292 = vst.msk [vmem:[#allocation2 + $0xe0] sm:$0xff] %vm263, 0.0
        %293 = vst.msk [vmem:[#allocation2 + $0xe8] sm:$0xff] %vm263, 0.0
        %294 = vst.msk [vmem:[#allocation2 + $0xf0] sm:$0xff] %vm263, 0.0
        %295 = vst.msk [vmem:[#allocation2 + $0xf8] sm:$0xff] %vm263, 0.0
        %296 = vst.msk [vmem:[#allocation2 + $0x100] sm:$0xff] %vm263, 0.0
        %297 = vst.msk [vmem:[#allocation2 + $0x108] sm:$0xff] %vm263, 0.0
        %298 = vst.msk [vmem:[#allocation2 + $0x110] sm:$0xff] %vm263, 0.0
        %299 = vst.msk [vmem:[#allocation2 + $0x118] sm:$0xff] %vm263, 0.0
        %300 = vst.msk [vmem:[#allocation2 + $0x120] sm:$0xff] %vm263, 0.0
        %301 = vst.msk [vmem:[#allocation2 + $0x128] sm:$0xff] %vm263, 0.0
        %302 = vst.msk [vmem:[#allocation2 + $0x130] sm:$0xff] %vm263, 0.0
        %303 = vst.msk [vmem:[#allocation2 + $0x138] sm:$0xff] %vm263, 0.0
        %304 = vst.msk [vmem:[#allocation2 + $0x140] sm:$0xff] %vm263, 0.0
        %305 = vst.msk [vmem:[#allocation2 + $0x148] sm:$0xff] %vm263, 0.0
        %306 = vst.msk [vmem:[#allocation2 + $0x150] sm:$0xff] %vm263, 0.0
        %307 = vst.msk [vmem:[#allocation2 + $0x158] sm:$0xff] %vm263, 0.0
        %308 = vst.msk [vmem:[#allocation2 + $0x160] sm:$0xff] %vm263, 0.0
        %309 = vst.msk [vmem:[#allocation2 + $0x168] sm:$0xff] %vm263, 0.0
        %310 = vst.msk [vmem:[#allocation2 + $0x170] sm:$0xff] %vm263, 0.0
        %311 = vst.msk [vmem:[#allocation2 + $0x178] sm:$0xff] %vm263, 0.0
        %312 = vst.msk [vmem:[#allocation2 + $0x180] sm:$0xff] %vm263, 0.0
        %313 = vst.msk [vmem:[#allocation2 + $0x188] sm:$0xff] %vm263, 0.0
        %314 = vst.msk [vmem:[#allocation2 + $0x190] sm:$0xff] %vm263, 0.0
        %315 = vst.msk [vmem:[#allocation2 + $0x198] sm:$0xff] %vm263, 0.0
        %316 = vst.msk [vmem:[#allocation2 + $0x1a0] sm:$0xff] %vm263, 0.0
        %317 = vst.msk [vmem:[#allocation2 + $0x1a8] sm:$0xff] %vm263, 0.0
        %318 = vst.msk [vmem:[#allocation2 + $0x1b0] sm:$0xff] %vm263, 0.0
        %319 = vst.msk [vmem:[#allocation2 + $0x1b8] sm:$0xff] %vm263, 0.0
        %320 = vst.msk [vmem:[#allocation2 + $0x1c0] sm:$0xff] %vm263, 0.0
        %321 = vst.msk [vmem:[#allocation2 + $0x1c8] sm:$0xff] %vm263, 0.0
        %322 = vst.msk [vmem:[#allocation2 + $0x1d0] sm:$0xff] %vm263, 0.0
        %323 = vst.msk [vmem:[#allocation2 + $0x1d8] sm:$0xff] %vm263, 0.0
        %324 = vst.msk [vmem:[#allocation2 + $0x1e0] sm:$0xff] %vm263, 0.0
        %325 = vst.msk [vmem:[#allocation2 + $0x1e8] sm:$0xff] %vm263, 0.0
        %326 = vst.msk [vmem:[#allocation2 + $0x1f0] sm:$0xff] %vm263, 0.0
        %327 = vst.msk [vmem:[#allocation2 + $0x1f8] sm:$0xff] %vm263, 0.0
      $region36: #{cnn_encoder_forward.5} parent=31 // pred_fallthru
        _
      %v328 = vld [vmem:[#allocation2] sm:$0xff]
      %v329 = vld [vmem:[#allocation2 + $0x8] sm:$0xff]
      %v330 = vld [vmem:[#allocation2 + $0x10] sm:$0xff]
      %v331 = vld [vmem:[#allocation2 + $0x18] sm:$0xff]
      %v332 = vld [vmem:[#allocation2 + $0x20] sm:$0xff]
      %v333 = vld [vmem:[#allocation2 + $0x28] sm:$0xff]
      %v334 = vld [vmem:[#allocation2 + $0x30] sm:$0xff]
      %v335 = vld [vmem:[#allocation2 + $0x38] sm:$0xff]
      %v336 = vld [vmem:[#allocation2 + $0x40] sm:$0xff]
      %v337 = vld [vmem:[#allocation2 + $0x48] sm:$0xff]
      %v338 = vld [vmem:[#allocation2 + $0x50] sm:$0xff]
      %v339 = vld [vmem:[#allocation2 + $0x58] sm:$0xff]
      %v340 = vld [vmem:[#allocation2 + $0x60] sm:$0xff]
      %v341 = vld [vmem:[#allocation2 + $0x68] sm:$0xff]
      %v342 = vld [vmem:[#allocation2 + $0x70] sm:$0xff]
      %v343 = vld [vmem:[#allocation2 + $0x78] sm:$0xff]
      %v344 = vld [vmem:[#allocation2 + $0x80] sm:$0xff]
      %v345 = vld [vmem:[#allocation2 + $0x88] sm:$0xff]
      %v346 = vld [vmem:[#allocation2 + $0x90] sm:$0xff]
      %v347 = vld [vmem:[#allocation2 + $0x98] sm:$0xff]
      %v348 = vld [vmem:[#allocation2 + $0xa0] sm:$0xff]
      %v349 = vld [vmem:[#allocation2 + $0xa8] sm:$0xff]
      %v350 = vld [vmem:[#allocation2 + $0xb0] sm:$0xff]
      %v351 = vld [vmem:[#allocation2 + $0xb8] sm:$0xff]
      %v352 = vld [vmem:[#allocation2 + $0xc0] sm:$0xff]
      %v353 = vld [vmem:[#allocation2 + $0xc8] sm:$0xff]
      %v354 = vld [vmem:[#allocation2 + $0xd0] sm:$0xff]
      %v355 = vld [vmem:[#allocation2 + $0xd8] sm:$0xff]
      %v356 = vld [vmem:[#allocation2 + $0xe0] sm:$0xff]
      %v357 = vld [vmem:[#allocation2 + $0xe8] sm:$0xff]
      %v358 = vld [vmem:[#allocation2 + $0xf0] sm:$0xff]
      %v359 = vld [vmem:[#allocation2 + $0xf8] sm:$0xff]
      %v360 = vld [vmem:[#allocation2 + $0x100] sm:$0xff]
      %v361 = vld [vmem:[#allocation2 + $0x108] sm:$0xff]
      %v362 = vld [vmem:[#allocation2 + $0x110] sm:$0xff]
      %v363 = vld [vmem:[#allocation2 + $0x118] sm:$0xff]
      %v364 = vld [vmem:[#allocation2 + $0x120] sm:$0xff]
      %v365 = vld [vmem:[#allocation2 + $0x128] sm:$0xff]
      %v366 = vld [vmem:[#allocation2 + $0x130] sm:$0xff]
      %v367 = vld [vmem:[#allocation2 + $0x138] sm:$0xff]
      %v368 = vld [vmem:[#allocation2 + $0x140] sm:$0xff]
      %v369 = vld [vmem:[#allocation2 + $0x148] sm:$0xff]
      %v370 = vld [vmem:[#allocation2 + $0x150] sm:$0xff]
      %v371 = vld [vmem:[#allocation2 + $0x158] sm:$0xff]
      %v372 = vld [vmem:[#allocation2 + $0x160] sm:$0xff]
      %v373 = vld [vmem:[#allocation2 + $0x168] sm:$0xff]
      %v374 = vld [vmem:[#allocation2 + $0x170] sm:$0xff]
      %v375 = vld [vmem:[#allocation2 + $0x178] sm:$0xff]
      %v376 = vld [vmem:[#allocation2 + $0x180] sm:$0xff]
      %v377 = vld [vmem:[#allocation2 + $0x188] sm:$0xff]
      %v378 = vld [vmem:[#allocation2 + $0x190] sm:$0xff]
      %v379 = vld [vmem:[#allocation2 + $0x198] sm:$0xff]
      %v380 = vld [vmem:[#allocation2 + $0x1a0] sm:$0xff]
      %v381 = vld [vmem:[#allocation2 + $0x1a8] sm:$0xff]
      %v382 = vld [vmem:[#allocation2 + $0x1b0] sm:$0xff]
      %v383 = vld [vmem:[#allocation2 + $0x1b8] sm:$0xff]
      %v384 = vld [vmem:[#allocation2 + $0x1c0] sm:$0xff]
      %v385 = vld [vmem:[#allocation2 + $0x1c8] sm:$0xff]
      %v386 = vld [vmem:[#allocation2 + $0x1d0] sm:$0xff]
      %v387 = vld [vmem:[#allocation2 + $0x1d8] sm:$0xff]
      %v388 = vld [vmem:[#allocation2 + $0x1e0] sm:$0xff]
      %v389 = vld [vmem:[#allocation2 + $0x1e8] sm:$0xff]
      %v390 = vld [vmem:[#allocation2 + $0x1f0] sm:$0xff]
      %v391 = vld [vmem:[#allocation2 + $0x1f8] sm:$0xff]
      %v392 = vld [vmem:[%s236] sm:$0xff]
      %v393 = vld [vmem:[%s236 + $0x8] sm:$0xff]
      %v394 = vld [vmem:[%s236 + $0x10] sm:$0xff]
      %v395 = vld [vmem:[%s236 + $0x18] sm:$0xff]
      %v396 = vld [vmem:[%s236 + $0x20] sm:$0xff]
      %v397 = vld [vmem:[%s236 + $0x28] sm:$0xff]
      %v398 = vld [vmem:[%s236 + $0x30] sm:$0xff]
      %v399 = vld [vmem:[%s236 + $0x38] sm:$0xff]
      %v400 = vld [vmem:[%s236 + $0x40] sm:$0xff]
      %v401 = vld [vmem:[%s236 + $0x48] sm:$0xff]
      %v402 = vld [vmem:[%s236 + $0x50] sm:$0xff]
      %v403 = vld [vmem:[%s236 + $0x58] sm:$0xff]
      %v404 = vld [vmem:[%s236 + $0x60] sm:$0xff]
      %v405 = vld [vmem:[%s236 + $0x68] sm:$0xff]
      %v406 = vld [vmem:[%s236 + $0x70] sm:$0xff]
      %v407 = vld [vmem:[%s236 + $0x78] sm:$0xff]
      %v408 = vld [vmem:[%s236 + $0x80] sm:$0xff]
      %v409 = vld [vmem:[%s236 + $0x88] sm:$0xff]
      %v410 = vld [vmem:[%s236 + $0x90] sm:$0xff]
      %v411 = vld [vmem:[%s236 + $0x98] sm:$0xff]
      %v412 = vld [vmem:[%s236 + $0xa0] sm:$0xff]
      %v413 = vld [vmem:[%s236 + $0xa8] sm:$0xff]
      %v414 = vld [vmem:[%s236 + $0xb0] sm:$0xff]
      %v415 = vld [vmem:[%s236 + $0xb8] sm:$0xff]
      %v416 = vld [vmem:[%s236 + $0xc0] sm:$0xff]
      %v417 = vld [vmem:[%s236 + $0xc8] sm:$0xff]
      %v418 = vld [vmem:[%s236 + $0xd0] sm:$0xff]
      %v419 = vld [vmem:[%s236 + $0xd8] sm:$0xff]
      %v420 = vld [vmem:[%s236 + $0xe0] sm:$0xff]
      %v421 = vld [vmem:[%s236 + $0xe8] sm:$0xff]
      %v422 = vld [vmem:[%s236 + $0xf0] sm:$0xff]
      %v423 = vld [vmem:[%s236 + $0xf8] sm:$0xff]
      %v424 = vld [vmem:[%s236 + $0x100] sm:$0xff]
      %v425 = vld [vmem:[%s236 + $0x108] sm:$0xff]
      %v426 = vld [vmem:[%s236 + $0x110] sm:$0xff]
      %v427 = vld [vmem:[%s236 + $0x118] sm:$0xff]
      %v428 = vld [vmem:[%s236 + $0x120] sm:$0xff]
      %v429 = vld [vmem:[%s236 + $0x128] sm:$0xff]
      %v430 = vld [vmem:[%s236 + $0x130] sm:$0xff]
      %v431 = vld [vmem:[%s236 + $0x138] sm:$0xff]
      %v432 = vld [vmem:[%s236 + $0x140] sm:$0xff]
      %v433 = vld [vmem:[%s236 + $0x148] sm:$0xff]
      %v434 = vld [vmem:[%s236 + $0x150] sm:$0xff]
      %v435 = vld [vmem:[%s236 + $0x158] sm:$0xff]
      %v436 = vld [vmem:[%s236 + $0x160] sm:$0xff]
      %v437 = vld [vmem:[%s236 + $0x168] sm:$0xff]
      %v438 = vld [vmem:[%s236 + $0x170] sm:$0xff]
      %v439 = vld [vmem:[%s236 + $0x178] sm:$0xff]
      %v440 = vld [vmem:[%s236 + $0x180] sm:$0xff]
      %v441 = vld [vmem:[%s236 + $0x188] sm:$0xff]
      %v442 = vld [vmem:[%s236 + $0x190] sm:$0xff]
      %v443 = vld [vmem:[%s236 + $0x198] sm:$0xff]
      %v444 = vld [vmem:[%s236 + $0x1a0] sm:$0xff]
      %v445 = vld [vmem:[%s236 + $0x1a8] sm:$0xff]
      %v446 = vld [vmem:[%s236 + $0x1b0] sm:$0xff]
      %v447 = vld [vmem:[%s236 + $0x1b8] sm:$0xff]
      %v448 = vld [vmem:[%s236 + $0x1c0] sm:$0xff]
      %v449 = vld [vmem:[%s236 + $0x1c8] sm:$0xff]
      %v450 = vld [vmem:[%s236 + $0x1d0] sm:$0xff]
      %v451 = vld [vmem:[%s236 + $0x1d8] sm:$0xff]
      %v452 = vld [vmem:[%s236 + $0x1e0] sm:$0xff]
      %v453 = vld [vmem:[%s236 + $0x1e8] sm:$0xff]
      %v454 = vld [vmem:[%s236 + $0x1f0] sm:$0xff]
      %v455 = vld [vmem:[%s236 + $0x1f8] sm:$0xff]
      %v456 = vld [vmem:[%s245] sm:$0xff]
      %v457 = vld [vmem:[%s245 + $0x8] sm:$0xff]
      %v458 = vld [vmem:[%s245 + $0x10] sm:$0xff]
      %v459 = vld [vmem:[%s245 + $0x18] sm:$0xff]
      %v460 = vld [vmem:[%s245 + $0x20] sm:$0xff]
      %v461 = vld [vmem:[%s245 + $0x28] sm:$0xff]
      %vm462 = vcmask 392192
      %v464 = vsel %vm462, %v392, 0
      %v467 = vsel %vm462, %v393, 0
      %v470 = vsel %vm462, %v394, 0
      %v473 = vsel %vm462, %v395, 0
      %v476 = vsel %vm462, %v396, 0
      %v479 = vsel %vm462, %v397, 0
      %v482 = vsel %vm462, %v398, 0
      %v485 = vsel %vm462, %v399, 0
      %v488 = vsel %vm462, %v400, 0
      %v491 = vsel %vm462, %v401, 0
      %v494 = vsel %vm462, %v402, 0
      %v497 = vsel %vm462, %v403, 0
      %v500 = vsel %vm462, %v404, 0
      %v503 = vsel %vm462, %v405, 0
      %v506 = vsel %vm462, %v406, 0
      %v509 = vsel %vm462, %v407, 0
      %v512 = vsel %vm462, %v408, 0
      %v515 = vsel %vm462, %v409, 0
      %v518 = vsel %vm462, %v410, 0
      %v521 = vsel %vm462, %v411, 0
      %v524 = vsel %vm462, %v412, 0
      %v527 = vsel %vm462, %v413, 0
      %v530 = vsel %vm462, %v414, 0
      %v533 = vsel %vm462, %v415, 0
      %v536 = vsel %vm462, %v416, 0
      %v539 = vsel %vm462, %v417, 0
      %v542 = vsel %vm462, %v418, 0
      %v545 = vsel %vm462, %v419, 0
      %v548 = vsel %vm462, %v420, 0
      %v551 = vsel %vm462, %v421, 0
      %v554 = vsel %vm462, %v422, 0
      %v557 = vsel %vm462, %v423, 0
      %v560 = vsel %vm462, %v424, 0
      %v563 = vsel %vm462, %v425, 0
      %v566 = vsel %vm462, %v426, 0
      %v569 = vsel %vm462, %v427, 0
      %v572 = vsel %vm462, %v428, 0
      %v575 = vsel %vm462, %v429, 0
      %v578 = vsel %vm462, %v430, 0
      %v581 = vsel %vm462, %v431, 0
      %v584 = vsel %vm462, %v432, 0
      %v587 = vsel %vm462, %v433, 0
      %v590 = vsel %vm462, %v434, 0
      %v593 = vsel %vm462, %v435, 0
      %v596 = vsel %vm462, %v436, 0
      %v599 = vsel %vm462, %v437, 0
      %v602 = vsel %vm462, %v438, 0
      %v605 = vsel %vm462, %v439, 0
      %v608 = vsel %vm462, %v440, 0
      %v611 = vsel %vm462, %v441, 0
      %v614 = vsel %vm462, %v442, 0
      %v617 = vsel %vm462, %v443, 0
      %v620 = vsel %vm462, %v444, 0
      %v623 = vsel %vm462, %v445, 0
      %v626 = vsel %vm462, %v446, 0
      %v629 = vsel %vm462, %v447, 0
      %v632 = vsel %vm462, %v448, 0
      %v635 = vsel %vm462, %v449, 0
      %v638 = vsel %vm462, %v450, 0
      %v641 = vsel %vm462, %v451, 0
      %v644 = vsel %vm462, %v452, 0
      %v647 = vsel %vm462, %v453, 0
      %v650 = vsel %vm462, %v454, 0
      %v653 = vsel %vm462, %v455, 0
      %655 = vmatpush.msra.mxu0 0.0
      %656 = vmatpush.msra.mxu0 0.0
      %657 = vmatpush.msra.mxu0 0.0
      %658 = vmatpush.msra.mxu0 0.0
      %659 = vmatpush.msra.mxu0 0.0
      %660 = vmatpush.msra.mxu0 0.0
      %661 = vmatpush.msra.mxu0 0.0
      %662 = vmatpush.msra.mxu0 0.0
      %663 = vmatpush.msra.mxu0 0.0
      %664 = vmatpush.msra.mxu0 0.0
      %665 = vmatpush.msra.mxu0 %v461
      %666 = vmatpush.msra.mxu0 %v460
      %667 = vmatpush.msra.mxu0 %v459
      %668 = vmatpush.msra.mxu0 %v458
      %669 = vmatpush.msra.mxu0 %v457
      %670 = vmatpush.msra.mxu0 %v456
      %671 = vmatmul.f32.gmra.mxu0 %v464
      %v672 = vpop.f32.mrf.mxu0
      %v673 = vadd.f32 0.0, %v672
      %674 = vmatmul.f32.gmra.mxu0 %v467
      %v675 = vpop.f32.mrf.mxu0
      %v676 = vadd.f32 0.0, %v675
      %677 = vmatmul.f32.gmra.mxu0 %v470
      %v678 = vpop.f32.mrf.mxu0
      %v679 = vadd.f32 0.0, %v678
      %680 = vmatmul.f32.gmra.mxu0 %v473
      %v681 = vpop.f32.mrf.mxu0
      %v682 = vadd.f32 0.0, %v681
      %683 = vmatmul.f32.gmra.mxu0 %v476
      %v684 = vpop.f32.mrf.mxu0
      %v685 = vadd.f32 0.0, %v684
      %686 = vmatmul.f32.gmra.mxu0 %v479
      %v687 = vpop.f32.mrf.mxu0
      %v688 = vadd.f32 0.0, %v687
      %689 = vmatmul.f32.gmra.mxu0 %v482
      %v690 = vpop.f32.mrf.mxu0
      %v691 = vadd.f32 0.0, %v690
      %692 = vmatmul.f32.gmra.mxu0 %v485
      %v693 = vpop.f32.mrf.mxu0
      %v694 = vadd.f32 0.0, %v693
      %695 = vmatmul.f32.gmra.mxu0 %v488
      %v696 = vpop.f32.mrf.mxu0
      %v697 = vadd.f32 0.0, %v696
      %698 = vmatmul.f32.gmra.mxu0 %v491
      %v699 = vpop.f32.mrf.mxu0
      %v700 = vadd.f32 0.0, %v699
      %701 = vmatmul.f32.gmra.mxu0 %v494
      %v702 = vpop.f32.mrf.mxu0
      %v703 = vadd.f32 0.0, %v702
      %704 = vmatmul.f32.gmra.mxu0 %v497
      %v705 = vpop.f32.mrf.mxu0
      %v706 = vadd.f32 0.0, %v705
      %707 = vmatmul.f32.gmra.mxu0 %v500
      %v708 = vpop.f32.mrf.mxu0
      %v709 = vadd.f32 0.0, %v708
      %710 = vmatmul.f32.gmra.mxu0 %v503
      %v711 = vpop.f32.mrf.mxu0
      %v712 = vadd.f32 0.0, %v711
      %713 = vmatmul.f32.gmra.mxu0 %v506
      %v714 = vpop.f32.mrf.mxu0
      %v715 = vadd.f32 0.0, %v714
      %716 = vmatmul.f32.gmra.mxu0 %v509
      %v717 = vpop.f32.mrf.mxu0
      %v718 = vadd.f32 0.0, %v717
      %719 = vmatmul.f32.gmra.mxu0 %v512
      %v720 = vpop.f32.mrf.mxu0
      %v721 = vadd.f32 0.0, %v720
      %722 = vmatmul.f32.gmra.mxu0 %v515
      %v723 = vpop.f32.mrf.mxu0
      %v724 = vadd.f32 0.0, %v723
      %725 = vmatmul.f32.gmra.mxu0 %v518
      %v726 = vpop.f32.mrf.mxu0
      %v727 = vadd.f32 0.0, %v726
      %728 = vmatmul.f32.gmra.mxu0 %v521
      %v729 = vpop.f32.mrf.mxu0
      %v730 = vadd.f32 0.0, %v729
      %731 = vmatmul.f32.gmra.mxu0 %v524
      %v732 = vpop.f32.mrf.mxu0
      %v733 = vadd.f32 0.0, %v732
      %734 = vmatmul.f32.gmra.mxu0 %v527
      %v735 = vpop.f32.mrf.mxu0
      %v736 = vadd.f32 0.0, %v735
      %737 = vmatmul.f32.gmra.mxu0 %v530
      %v738 = vpop.f32.mrf.mxu0
      %v739 = vadd.f32 0.0, %v738
      %740 = vmatmul.f32.gmra.mxu0 %v533
      %v741 = vpop.f32.mrf.mxu0
      %v742 = vadd.f32 0.0, %v741
      %743 = vmatmul.f32.gmra.mxu0 %v536
      %v744 = vpop.f32.mrf.mxu0
      %v745 = vadd.f32 0.0, %v744
      %746 = vmatmul.f32.gmra.mxu0 %v539
      %v747 = vpop.f32.mrf.mxu0
      %v748 = vadd.f32 0.0, %v747
      %749 = vmatmul.f32.gmra.mxu0 %v542
      %v750 = vpop.f32.mrf.mxu0
      %v751 = vadd.f32 0.0, %v750
      %752 = vmatmul.f32.gmra.mxu0 %v545
      %v753 = vpop.f32.mrf.mxu0
      %v754 = vadd.f32 0.0, %v753
      %755 = vmatmul.f32.gmra.mxu0 %v548
      %v756 = vpop.f32.mrf.mxu0
      %v757 = vadd.f32 0.0, %v756
      %758 = vmatmul.f32.gmra.mxu0 %v551
      %v759 = vpop.f32.mrf.mxu0
      %v760 = vadd.f32 0.0, %v759
      %761 = vmatmul.f32.gmra.mxu0 %v554
      %v762 = vpop.f32.mrf.mxu0
      %v763 = vadd.f32 0.0, %v762
      %764 = vmatmul.f32.gmra.mxu0 %v557
      %v765 = vpop.f32.mrf.mxu0
      %v766 = vadd.f32 0.0, %v765
      %767 = vmatmul.f32.gmra.mxu0 %v560
      %v768 = vpop.f32.mrf.mxu0
      %v769 = vadd.f32 0.0, %v768
      %770 = vmatmul.f32.gmra.mxu0 %v563
      %v771 = vpop.f32.mrf.mxu0
      %v772 = vadd.f32 0.0, %v771
      %773 = vmatmul.f32.gmra.mxu0 %v566
      %v774 = vpop.f32.mrf.mxu0
      %v775 = vadd.f32 0.0, %v774
      %776 = vmatmul.f32.gmra.mxu0 %v569
      %v777 = vpop.f32.mrf.mxu0
      %v778 = vadd.f32 0.0, %v777
      %779 = vmatmul.f32.gmra.mxu0 %v572
      %v780 = vpop.f32.mrf.mxu0
      %v781 = vadd.f32 0.0, %v780
      %782 = vmatmul.f32.gmra.mxu0 %v575
      %v783 = vpop.f32.mrf.mxu0
      %v784 = vadd.f32 0.0, %v783
      %785 = vmatmul.f32.gmra.mxu0 %v578
      %v786 = vpop.f32.mrf.mxu0
      %v787 = vadd.f32 0.0, %v786
      %788 = vmatmul.f32.gmra.mxu0 %v581
      %v789 = vpop.f32.mrf.mxu0
      %v790 = vadd.f32 0.0, %v789
      %791 = vmatmul.f32.gmra.mxu0 %v584
      %v792 = vpop.f32.mrf.mxu0
      %v793 = vadd.f32 0.0, %v792
      %794 = vmatmul.f32.gmra.mxu0 %v587
      %v795 = vpop.f32.mrf.mxu0
      %v796 = vadd.f32 0.0, %v795
      %797 = vmatmul.f32.gmra.mxu0 %v590
      %v798 = vpop.f32.mrf.mxu0
      %v799 = vadd.f32 0.0, %v798
      %800 = vmatmul.f32.gmra.mxu0 %v593
      %v801 = vpop.f32.mrf.mxu0
      %v802 = vadd.f32 0.0, %v801
      %803 = vmatmul.f32.gmra.mxu0 %v596
      %v804 = vpop.f32.mrf.mxu0
      %v805 = vadd.f32 0.0, %v804
      %806 = vmatmul.f32.gmra.mxu0 %v599
      %v807 = vpop.f32.mrf.mxu0
      %v808 = vadd.f32 0.0, %v807
      %809 = vmatmul.f32.gmra.mxu0 %v602
      %v810 = vpop.f32.mrf.mxu0
      %v811 = vadd.f32 0.0, %v810
      %812 = vmatmul.f32.gmra.mxu0 %v605
      %v813 = vpop.f32.mrf.mxu0
      %v814 = vadd.f32 0.0, %v813
      %815 = vmatmul.f32.gmra.mxu0 %v608
      %v816 = vpop.f32.mrf.mxu0
      %v817 = vadd.f32 0.0, %v816
      %818 = vmatmul.f32.gmra.mxu0 %v611
      %v819 = vpop.f32.mrf.mxu0
      %v820 = vadd.f32 0.0, %v819
      %821 = vmatmul.f32.gmra.mxu0 %v614
      %v822 = vpop.f32.mrf.mxu0
      %v823 = vadd.f32 0.0, %v822
      %824 = vmatmul.f32.gmra.mxu0 %v617
      %v825 = vpop.f32.mrf.mxu0
      %v826 = vadd.f32 0.0, %v825
      %827 = vmatmul.f32.gmra.mxu0 %v620
      %v828 = vpop.f32.mrf.mxu0
      %v829 = vadd.f32 0.0, %v828
      %830 = vmatmul.f32.gmra.mxu0 %v623
      %v831 = vpop.f32.mrf.mxu0
      %v832 = vadd.f32 0.0, %v831
      %833 = vmatmul.f32.gmra.mxu0 %v626
      %v834 = vpop.f32.mrf.mxu0
      %v835 = vadd.f32 0.0, %v834
      %836 = vmatmul.f32.gmra.mxu0 %v629
      %v837 = vpop.f32.mrf.mxu0
      %v838 = vadd.f32 0.0, %v837
      %839 = vmatmul.f32.gmra.mxu0 %v632
      %v840 = vpop.f32.mrf.mxu0
      %v841 = vadd.f32 0.0, %v840
      %842 = vmatmul.f32.gmra.mxu0 %v635
      %v843 = vpop.f32.mrf.mxu0
      %v844 = vadd.f32 0.0, %v843
      %845 = vmatmul.f32.gmra.mxu0 %v638
      %v846 = vpop.f32.mrf.mxu0
      %v847 = vadd.f32 0.0, %v846
      %848 = vmatmul.f32.gmra.mxu0 %v641
      %v849 = vpop.f32.mrf.mxu0
      %v850 = vadd.f32 0.0, %v849
      %851 = vmatmul.f32.gmra.mxu0 %v644
      %v852 = vpop.f32.mrf.mxu0
      %v853 = vadd.f32 0.0, %v852
      %854 = vmatmul.f32.gmra.mxu0 %v647
      %v855 = vpop.f32.mrf.mxu0
      %v856 = vadd.f32 0.0, %v855
      %857 = vmatmul.f32.gmra.mxu0 %v650
      %v858 = vpop.f32.mrf.mxu0
      %v859 = vadd.f32 0.0, %v858
      %860 = vmatmul.f32.gmra.mxu0 %v653
      %v861 = vpop.f32.mrf.mxu0
      %v862 = vadd.f32 0.0, %v861
      %863 = vdwg.mxu0
      %v864 = vadd.f32 %v328, %v673
      %v865 = vadd.f32 %v329, %v676
      %v866 = vadd.f32 %v330, %v679
      %v867 = vadd.f32 %v331, %v682
      %v868 = vadd.f32 %v332, %v685
      %v869 = vadd.f32 %v333, %v688
      %v870 = vadd.f32 %v334, %v691
      %v871 = vadd.f32 %v335, %v694
      %v872 = vadd.f32 %v336, %v697
      %v873 = vadd.f32 %v337, %v700
      %v874 = vadd.f32 %v338, %v703
      %v875 = vadd.f32 %v339, %v706
      %v876 = vadd.f32 %v340, %v709
      %v877 = vadd.f32 %v341, %v712
      %v878 = vadd.f32 %v342, %v715
      %v879 = vadd.f32 %v343, %v718
      %v880 = vadd.f32 %v344, %v721
      %v881 = vadd.f32 %v345, %v724
      %v882 = vadd.f32 %v346, %v727
      %v883 = vadd.f32 %v347, %v730
      %v884 = vadd.f32 %v348, %v733
      %v885 = vadd.f32 %v349, %v736
      %v886 = vadd.f32 %v350, %v739
      %v887 = vadd.f32 %v351, %v742
      %v888 = vadd.f32 %v352, %v745
      %v889 = vadd.f32 %v353, %v748
      %v890 = vadd.f32 %v354, %v751
      %v891 = vadd.f32 %v355, %v754
      %v892 = vadd.f32 %v356, %v757
      %v893 = vadd.f32 %v357, %v760
      %v894 = vadd.f32 %v358, %v763
      %v895 = vadd.f32 %v359, %v766
      %v896 = vadd.f32 %v360, %v769
      %v897 = vadd.f32 %v361, %v772
      %v898 = vadd.f32 %v362, %v775
      %v899 = vadd.f32 %v363, %v778
      %v900 = vadd.f32 %v364, %v781
      %v901 = vadd.f32 %v365, %v784
      %v902 = vadd.f32 %v366, %v787
      %v903 = vadd.f32 %v367, %v790
      %v904 = vadd.f32 %v368, %v793
      %v905 = vadd.f32 %v369, %v796
      %v906 = vadd.f32 %v370, %v799
      %v907 = vadd.f32 %v371, %v802
      %v908 = vadd.f32 %v372, %v805
      %v909 = vadd.f32 %v373, %v808
      %v910 = vadd.f32 %v374, %v811
      %v911 = vadd.f32 %v375, %v814
      %v912 = vadd.f32 %v376, %v817
      %v913 = vadd.f32 %v377, %v820
      %v914 = vadd.f32 %v378, %v823
      %v915 = vadd.f32 %v379, %v826
      %v916 = vadd.f32 %v380, %v829
      %v917 = vadd.f32 %v381, %v832
      %v918 = vadd.f32 %v382, %v835
      %v919 = vadd.f32 %v383, %v838
      %v920 = vadd.f32 %v384, %v841
      %v921 = vadd.f32 %v385, %v844
      %v922 = vadd.f32 %v386, %v847
      %v923 = vadd.f32 %v387, %v850
      %v924 = vadd.f32 %v388, %v853
      %v925 = vadd.f32 %v389, %v856
      %v926 = vadd.f32 %v390, %v859
      %v927 = vadd.f32 %v391, %v862
      %vm928 = vcmask 261120
      %929 = vst.msk [vmem:[#allocation2] sm:$0xff] %vm928, %v864
      %930 = vst.msk [vmem:[#allocation2 + $0x8] sm:$0xff] %vm928, %v865
      %931 = vst.msk [vmem:[#allocation2 + $0x10] sm:$0xff] %vm928, %v866
      %932 = vst.msk [vmem:[#allocation2 + $0x18] sm:$0xff] %vm928, %v867
      %933 = vst.msk [vmem:[#allocation2 + $0x20] sm:$0xff] %vm928, %v868
      %934 = vst.msk [vmem:[#allocation2 + $0x28] sm:$0xff] %vm928, %v869
      %935 = vst.msk [vmem:[#allocation2 + $0x30] sm:$0xff] %vm928, %v870
      %936 = vst.msk [vmem:[#allocation2 + $0x38] sm:$0xff] %vm928, %v871
      %937 = vst.msk [vmem:[#allocation2 + $0x40] sm:$0xff] %vm928, %v872
      %938 = vst.msk [vmem:[#allocation2 + $0x48] sm:$0xff] %vm928, %v873
      %939 = vst.msk [vmem:[#allocation2 + $0x50] sm:$0xff] %vm928, %v874
      %940 = vst.msk [vmem:[#allocation2 + $0x58] sm:$0xff] %vm928, %v875
      %941 = vst.msk [vmem:[#allocation2 + $0x60] sm:$0xff] %vm928, %v876
      %942 = vst.msk [vmem:[#allocation2 + $0x68] sm:$0xff] %vm928, %v877
      %943 = vst.msk [vmem:[#allocation2 + $0x70] sm:$0xff] %vm928, %v878
      %944 = vst.msk [vmem:[#allocation2 + $0x78] sm:$0xff] %vm928, %v879
      %945 = vst.msk [vmem:[#allocation2 + $0x80] sm:$0xff] %vm928, %v880
      %946 = vst.msk [vmem:[#allocation2 + $0x88] sm:$0xff] %vm928, %v881
      %947 = vst.msk [vmem:[#allocation2 + $0x90] sm:$0xff] %vm928, %v882
      %948 = vst.msk [vmem:[#allocation2 + $0x98] sm:$0xff] %vm928, %v883
      %949 = vst.msk [vmem:[#allocation2 + $0xa0] sm:$0xff] %vm928, %v884
      %950 = vst.msk [vmem:[#allocation2 + $0xa8] sm:$0xff] %vm928, %v885
      %951 = vst.msk [vmem:[#allocation2 + $0xb0] sm:$0xff] %vm928, %v886
      %952 = vst.msk [vmem:[#allocation2 + $0xb8] sm:$0xff] %vm928, %v887
      %953 = vst.msk [vmem:[#allocation2 + $0xc0] sm:$0xff] %vm928, %v888
      %954 = vst.msk [vmem:[#allocation2 + $0xc8] sm:$0xff] %vm928, %v889
      %955 = vst.msk [vmem:[#allocation2 + $0xd0] sm:$0xff] %vm928, %v890
      %956 = vst.msk [vmem:[#allocation2 + $0xd8] sm:$0xff] %vm928, %v891
      %957 = vst.msk [vmem:[#allocation2 + $0xe0] sm:$0xff] %vm928, %v892
      %958 = vst.msk [vmem:[#allocation2 + $0xe8] sm:$0xff] %vm928, %v893
      %959 = vst.msk [vmem:[#allocation2 + $0xf0] sm:$0xff] %vm928, %v894
      %960 = vst.msk [vmem:[#allocation2 + $0xf8] sm:$0xff] %vm928, %v895
      %961 = vst.msk [vmem:[#allocation2 + $0x100] sm:$0xff] %vm928, %v896
      %962 = vst.msk [vmem:[#allocation2 + $0x108] sm:$0xff] %vm928, %v897
      %963 = vst.msk [vmem:[#allocation2 + $0x110] sm:$0xff] %vm928, %v898
      %964 = vst.msk [vmem:[#allocation2 + $0x118] sm:$0xff] %vm928, %v899
      %965 = vst.msk [vmem:[#allocation2 + $0x120] sm:$0xff] %vm928, %v900
      %966 = vst.msk [vmem:[#allocation2 + $0x128] sm:$0xff] %vm928, %v901
      %967 = vst.msk [vmem:[#allocation2 + $0x130] sm:$0xff] %vm928, %v902
      %968 = vst.msk [vmem:[#allocation2 + $0x138] sm:$0xff] %vm928, %v903
      %969 = vst.msk [vmem:[#allocation2 + $0x140] sm:$0xff] %vm928, %v904
      %970 = vst.msk [vmem:[#allocation2 + $0x148] sm:$0xff] %vm928, %v905
      %971 = vst.msk [vmem:[#allocation2 + $0x150] sm:$0xff] %vm928, %v906
      %972 = vst.msk [vmem:[#allocation2 + $0x158] sm:$0xff] %vm928, %v907
      %973 = vst.msk [vmem:[#allocation2 + $0x160] sm:$0xff] %vm928, %v908
      %974 = vst.msk [vmem:[#allocation2 + $0x168] sm:$0xff] %vm928, %v909
      %975 = vst.msk [vmem:[#allocation2 + $0x170] sm:$0xff] %vm928, %v910
      %976 = vst.msk [vmem:[#allocation2 + $0x178] sm:$0xff] %vm928, %v911
      %977 = vst.msk [vmem:[#allocation2 + $0x180] sm:$0xff] %vm928, %v912
      %978 = vst.msk [vmem:[#allocation2 + $0x188] sm:$0xff] %vm928, %v913
      %979 = vst.msk [vmem:[#allocation2 + $0x190] sm:$0xff] %vm928, %v914
      %980 = vst.msk [vmem:[#allocation2 + $0x198] sm:$0xff] %vm928, %v915
      %981 = vst.msk [vmem:[#allocation2 + $0x1a0] sm:$0xff] %vm928, %v916
      %982 = vst.msk [vmem:[#allocation2 + $0x1a8] sm:$0xff] %vm928, %v917
      %983 = vst.msk [vmem:[#allocation2 + $0x1b0] sm:$0xff] %vm928, %v918
      %984 = vst.msk [vmem:[#allocation2 + $0x1b8] sm:$0xff] %vm928, %v919
      %985 = vst.msk [vmem:[#allocation2 + $0x1c0] sm:$0xff] %vm928, %v920
      %986 = vst.msk [vmem:[#allocation2 + $0x1c8] sm:$0xff] %vm928, %v921
      %987 = vst.msk [vmem:[#allocation2 + $0x1d0] sm:$0xff] %vm928, %v922
      %988 = vst.msk [vmem:[#allocation2 + $0x1d8] sm:$0xff] %vm928, %v923
      %989 = vst.msk [vmem:[#allocation2 + $0x1e0] sm:$0xff] %vm928, %v924
      %990 = vst.msk [vmem:[#allocation2 + $0x1e8] sm:$0xff] %vm928, %v925
      %991 = vst.msk [vmem:[#allocation2 + $0x1f0] sm:$0xff] %vm928, %v926
      %992 = vst.msk [vmem:[#allocation2 + $0x1f8] sm:$0xff] %vm928, %v927
      // Predicated region
      $region37: #{cnn_encoder_forward.5} parent=31 // pred_check
        %p993 = pneg %p259
      $region38: #{cnn_encoder_forward.5} parent=31 // pred_check_branch
        %995 = sbr.rel (%p993) target = $region40
      $region39: #{cnn_encoder_forward.5} parent=31 // pred_region
        %v996 = vld [vmem:[#allocation2] sm:$0xff]
        %v997 = vld [vmem:[#allocation2 + $0x8] sm:$0xff]
        %v998 = vld [vmem:[#allocation2 + $0x10] sm:$0xff]
        %v999 = vld [vmem:[#allocation2 + $0x18] sm:$0xff]
        %v1000 = vld [vmem:[#allocation2 + $0x20] sm:$0xff]
        %v1001 = vld [vmem:[#allocation2 + $0x28] sm:$0xff]
        %v1002 = vld [vmem:[#allocation2 + $0x30] sm:$0xff]
        %v1003 = vld [vmem:[#allocation2 + $0x38] sm:$0xff]
        %v1004 = vld [vmem:[#allocation2 + $0x40] sm:$0xff]
        %v1005 = vld [vmem:[#allocation2 + $0x48] sm:$0xff]
        %v1006 = vld [vmem:[#allocation2 + $0x50] sm:$0xff]
        %v1007 = vld [vmem:[#allocation2 + $0x58] sm:$0xff]
        %v1008 = vld [vmem:[#allocation2 + $0x60] sm:$0xff]
        %v1009 = vld [vmem:[#allocation2 + $0x68] sm:$0xff]
        %v1010 = vld [vmem:[#allocation2 + $0x70] sm:$0xff]
        %v1011 = vld [vmem:[#allocation2 + $0x78] sm:$0xff]
        %v1012 = vld [vmem:[#allocation2 + $0x80] sm:$0xff]
        %v1013 = vld [vmem:[#allocation2 + $0x88] sm:$0xff]
        %v1014 = vld [vmem:[#allocation2 + $0x90] sm:$0xff]
        %v1015 = vld [vmem:[#allocation2 + $0x98] sm:$0xff]
        %v1016 = vld [vmem:[#allocation2 + $0xa0] sm:$0xff]
        %v1017 = vld [vmem:[#allocation2 + $0xa8] sm:$0xff]
        %v1018 = vld [vmem:[#allocation2 + $0xb0] sm:$0xff]
        %v1019 = vld [vmem:[#allocation2 + $0xb8] sm:$0xff]
        %v1020 = vld [vmem:[#allocation2 + $0xc0] sm:$0xff]
        %v1021 = vld [vmem:[#allocation2 + $0xc8] sm:$0xff]
        %v1022 = vld [vmem:[#allocation2 + $0xd0] sm:$0xff]
        %v1023 = vld [vmem:[#allocation2 + $0xd8] sm:$0xff]
        %v1024 = vld [vmem:[#allocation2 + $0xe0] sm:$0xff]
        %v1025 = vld [vmem:[#allocation2 + $0xe8] sm:$0xff]
        %v1026 = vld [vmem:[#allocation2 + $0xf0] sm:$0xff]
        %v1027 = vld [vmem:[#allocation2 + $0xf8] sm:$0xff]
        %v1028 = vld [vmem:[#allocation2 + $0x100] sm:$0xff]
        %v1029 = vld [vmem:[#allocation2 + $0x108] sm:$0xff]
        %v1030 = vld [vmem:[#allocation2 + $0x110] sm:$0xff]
        %v1031 = vld [vmem:[#allocation2 + $0x118] sm:$0xff]
        %v1032 = vld [vmem:[#allocation2 + $0x120] sm:$0xff]
        %v1033 = vld [vmem:[#allocation2 + $0x128] sm:$0xff]
        %v1034 = vld [vmem:[#allocation2 + $0x130] sm:$0xff]
        %v1035 = vld [vmem:[#allocation2 + $0x138] sm:$0xff]
        %v1036 = vld [vmem:[#allocation2 + $0x140] sm:$0xff]
        %v1037 = vld [vmem:[#allocation2 + $0x148] sm:$0xff]
        %v1038 = vld [vmem:[#allocation2 + $0x150] sm:$0xff]
        %v1039 = vld [vmem:[#allocation2 + $0x158] sm:$0xff]
        %v1040 = vld [vmem:[#allocation2 + $0x160] sm:$0xff]
        %v1041 = vld [vmem:[#allocation2 + $0x168] sm:$0xff]
        %v1042 = vld [vmem:[#allocation2 + $0x170] sm:$0xff]
        %v1043 = vld [vmem:[#allocation2 + $0x178] sm:$0xff]
        %v1044 = vld [vmem:[#allocation2 + $0x180] sm:$0xff]
        %v1045 = vld [vmem:[#allocation2 + $0x188] sm:$0xff]
        %v1046 = vld [vmem:[#allocation2 + $0x190] sm:$0xff]
        %v1047 = vld [vmem:[#allocation2 + $0x198] sm:$0xff]
        %v1048 = vld [vmem:[#allocation2 + $0x1a0] sm:$0xff]
        %v1049 = vld [vmem:[#allocation2 + $0x1a8] sm:$0xff]
        %v1050 = vld [vmem:[#allocation2 + $0x1b0] sm:$0xff]
        %v1051 = vld [vmem:[#allocation2 + $0x1b8] sm:$0xff]
        %v1052 = vld [vmem:[#allocation2 + $0x1c0] sm:$0xff]
        %v1053 = vld [vmem:[#allocation2 + $0x1c8] sm:$0xff]
        %v1054 = vld [vmem:[#allocation2 + $0x1d0] sm:$0xff]
        %v1055 = vld [vmem:[#allocation2 + $0x1d8] sm:$0xff]
        %v1056 = vld [vmem:[#allocation2 + $0x1e0] sm:$0xff]
        %v1057 = vld [vmem:[#allocation2 + $0x1e8] sm:$0xff]
        %v1058 = vld [vmem:[#allocation2 + $0x1f0] sm:$0xff]
        %v1059 = vld [vmem:[#allocation2 + $0x1f8] sm:$0xff]
        %v1060 = vld [vmem:[%s249] sm:$0x1]
        %v1062 = vperm.slane %v1060, 0
        %v1064 = vadd.f32 %v996, %v1062
        %v1065 = vadd.f32 %v997, %v1062
        %v1066 = vadd.f32 %v998, %v1062
        %v1067 = vadd.f32 %v999, %v1062
        %v1068 = vadd.f32 %v1000, %v1062
        %v1069 = vadd.f32 %v1001, %v1062
        %v1070 = vadd.f32 %v1002, %v1062
        %v1071 = vadd.f32 %v1003, %v1062
        %v1072 = vadd.f32 %v1004, %v1062
        %v1073 = vadd.f32 %v1005, %v1062
        %v1074 = vadd.f32 %v1006, %v1062
        %v1075 = vadd.f32 %v1007, %v1062
        %v1076 = vadd.f32 %v1008, %v1062
        %v1077 = vadd.f32 %v1009, %v1062
        %v1078 = vadd.f32 %v1010, %v1062
        %v1079 = vadd.f32 %v1011, %v1062
        %v1080 = vadd.f32 %v1012, %v1062
        %v1081 = vadd.f32 %v1013, %v1062
        %v1082 = vadd.f32 %v1014, %v1062
        %v1083 = vadd.f32 %v1015, %v1062
        %v1084 = vadd.f32 %v1016, %v1062
        %v1085 = vadd.f32 %v1017, %v1062
        %v1086 = vadd.f32 %v1018, %v1062
        %v1087 = vadd.f32 %v1019, %v1062
        %v1088 = vadd.f32 %v1020, %v1062
        %v1089 = vadd.f32 %v1021, %v1062
        %v1090 = vadd.f32 %v1022, %v1062
        %v1091 = vadd.f32 %v1023, %v1062
        %v1092 = vadd.f32 %v1024, %v1062
        %v1093 = vadd.f32 %v1025, %v1062
        %v1094 = vadd.f32 %v1026, %v1062
        %v1095 = vadd.f32 %v1027, %v1062
        %v1096 = vadd.f32 %v1028, %v1062
        %v1097 = vadd.f32 %v1029, %v1062
        %v1098 = vadd.f32 %v1030, %v1062
        %v1099 = vadd.f32 %v1031, %v1062
        %v1100 = vadd.f32 %v1032, %v1062
        %v1101 = vadd.f32 %v1033, %v1062
        %v1102 = vadd.f32 %v1034, %v1062
        %v1103 = vadd.f32 %v1035, %v1062
        %v1104 = vadd.f32 %v1036, %v1062
        %v1105 = vadd.f32 %v1037, %v1062
        %v1106 = vadd.f32 %v1038, %v1062
        %v1107 = vadd.f32 %v1039, %v1062
        %v1108 = vadd.f32 %v1040, %v1062
        %v1109 = vadd.f32 %v1041, %v1062
        %v1110 = vadd.f32 %v1042, %v1062
        %v1111 = vadd.f32 %v1043, %v1062
        %v1112 = vadd.f32 %v1044, %v1062
        %v1113 = vadd.f32 %v1045, %v1062
        %v1114 = vadd.f32 %v1046, %v1062
        %v1115 = vadd.f32 %v1047, %v1062
        %v1116 = vadd.f32 %v1048, %v1062
        %v1117 = vadd.f32 %v1049, %v1062
        %v1118 = vadd.f32 %v1050, %v1062
        %v1119 = vadd.f32 %v1051, %v1062
        %v1120 = vadd.f32 %v1052, %v1062
        %v1121 = vadd.f32 %v1053, %v1062
        %v1122 = vadd.f32 %v1054, %v1062
        %v1123 = vadd.f32 %v1055, %v1062
        %v1124 = vadd.f32 %v1056, %v1062
        %v1125 = vadd.f32 %v1057, %v1062
        %v1126 = vadd.f32 %v1058, %v1062
        %v1127 = vadd.f32 %v1059, %v1062
        %v1128 = vmax.f32 %v1064, 0.0
        %v1129 = vmax.f32 %v1065, 0.0
        %v1130 = vmax.f32 %v1066, 0.0
        %v1131 = vmax.f32 %v1067, 0.0
        %v1132 = vmax.f32 %v1068, 0.0
        %v1133 = vmax.f32 %v1069, 0.0
        %v1134 = vmax.f32 %v1070, 0.0
        %v1135 = vmax.f32 %v1071, 0.0
        %v1136 = vmax.f32 %v1072, 0.0
        %v1137 = vmax.f32 %v1073, 0.0
        %v1138 = vmax.f32 %v1074, 0.0
        %v1139 = vmax.f32 %v1075, 0.0
        %v1140 = vmax.f32 %v1076, 0.0
        %v1141 = vmax.f32 %v1077, 0.0
        %v1142 = vmax.f32 %v1078, 0.0
        %v1143 = vmax.f32 %v1079, 0.0
        %v1144 = vmax.f32 %v1080, 0.0
        %v1145 = vmax.f32 %v1081, 0.0
        %v1146 = vmax.f32 %v1082, 0.0
        %v1147 = vmax.f32 %v1083, 0.0
        %v1148 = vmax.f32 %v1084, 0.0
        %v1149 = vmax.f32 %v1085, 0.0
        %v1150 = vmax.f32 %v1086, 0.0
        %v1151 = vmax.f32 %v1087, 0.0
        %v1152 = vmax.f32 %v1088, 0.0
        %v1153 = vmax.f32 %v1089, 0.0
        %v1154 = vmax.f32 %v1090, 0.0
        %v1155 = vmax.f32 %v1091, 0.0
        %v1156 = vmax.f32 %v1092, 0.0
        %v1157 = vmax.f32 %v1093, 0.0
        %v1158 = vmax.f32 %v1094, 0.0
        %v1159 = vmax.f32 %v1095, 0.0
        %v1160 = vmax.f32 %v1096, 0.0
        %v1161 = vmax.f32 %v1097, 0.0
        %v1162 = vmax.f32 %v1098, 0.0
        %v1163 = vmax.f32 %v1099, 0.0
        %v1164 = vmax.f32 %v1100, 0.0
        %v1165 = vmax.f32 %v1101, 0.0
        %v1166 = vmax.f32 %v1102, 0.0
        %v1167 = vmax.f32 %v1103, 0.0
        %v1168 = vmax.f32 %v1104, 0.0
        %v1169 = vmax.f32 %v1105, 0.0
        %v1170 = vmax.f32 %v1106, 0.0
        %v1171 = vmax.f32 %v1107, 0.0
        %v1172 = vmax.f32 %v1108, 0.0
        %v1173 = vmax.f32 %v1109, 0.0
        %v1174 = vmax.f32 %v1110, 0.0
        %v1175 = vmax.f32 %v1111, 0.0
        %v1176 = vmax.f32 %v1112, 0.0
        %v1177 = vmax.f32 %v1113, 0.0
        %v1178 = vmax.f32 %v1114, 0.0
        %v1179 = vmax.f32 %v1115, 0.0
        %v1180 = vmax.f32 %v1116, 0.0
        %v1181 = vmax.f32 %v1117, 0.0
        %v1182 = vmax.f32 %v1118, 0.0
        %v1183 = vmax.f32 %v1119, 0.0
        %v1184 = vmax.f32 %v1120, 0.0
        %v1185 = vmax.f32 %v1121, 0.0
        %v1186 = vmax.f32 %v1122, 0.0
        %v1187 = vmax.f32 %v1123, 0.0
        %v1188 = vmax.f32 %v1124, 0.0
        %v1189 = vmax.f32 %v1125, 0.0
        %v1190 = vmax.f32 %v1126, 0.0
        %v1191 = vmax.f32 %v1127, 0.0
        %1192 = vst.msk [vmem:[%s257] sm:$0xff] %vm928, %v1128
        %1193 = vst.msk [vmem:[%s257 + $0x8] sm:$0xff] %vm928, %v1129
        %1194 = vst.msk [vmem:[%s257 + $0x10] sm:$0xff] %vm928, %v1130
        %1195 = vst.msk [vmem:[%s257 + $0x18] sm:$0xff] %vm928, %v1131
        %1196 = vst.msk [vmem:[%s257 + $0x20] sm:$0xff] %vm928, %v1132
        %1197 = vst.msk [vmem:[%s257 + $0x28] sm:$0xff] %vm928, %v1133
        %1198 = vst.msk [vmem:[%s257 + $0x30] sm:$0xff] %vm928, %v1134
        %1199 = vst.msk [vmem:[%s257 + $0x38] sm:$0xff] %vm928, %v1135
        %1200 = vst.msk [vmem:[%s257 + $0x40] sm:$0xff] %vm928, %v1136
        %1201 = vst.msk [vmem:[%s257 + $0x48] sm:$0xff] %vm928, %v1137
        %1202 = vst.msk [vmem:[%s257 + $0x50] sm:$0xff] %vm928, %v1138
        %1203 = vst.msk [vmem:[%s257 + $0x58] sm:$0xff] %vm928, %v1139
        %1204 = vst.msk [vmem:[%s257 + $0x60] sm:$0xff] %vm928, %v1140
        %1205 = vst.msk [vmem:[%s257 + $0x68] sm:$0xff] %vm928, %v1141
        %1206 = vst.msk [vmem:[%s257 + $0x70] sm:$0xff] %vm928, %v1142
        %1207 = vst.msk [vmem:[%s257 + $0x78] sm:$0xff] %vm928, %v1143
        %1208 = vst.msk [vmem:[%s257 + $0x80] sm:$0xff] %vm928, %v1144
        %1209 = vst.msk [vmem:[%s257 + $0x88] sm:$0xff] %vm928, %v1145
        %1210 = vst.msk [vmem:[%s257 + $0x90] sm:$0xff] %vm928, %v1146
        %1211 = vst.msk [vmem:[%s257 + $0x98] sm:$0xff] %vm928, %v1147
        %1212 = vst.msk [vmem:[%s257 + $0xa0] sm:$0xff] %vm928, %v1148
        %1213 = vst.msk [vmem:[%s257 + $0xa8] sm:$0xff] %vm928, %v1149
        %1214 = vst.msk [vmem:[%s257 + $0xb0] sm:$0xff] %vm928, %v1150
        %1215 = vst.msk [vmem:[%s257 + $0xb8] sm:$0xff] %vm928, %v1151
        %1216 = vst.msk [vmem:[%s257 + $0xc0] sm:$0xff] %vm928, %v1152
        %1217 = vst.msk [vmem:[%s257 + $0xc8] sm:$0xff] %vm928, %v1153
        %1218 = vst.msk [vmem:[%s257 + $0xd0] sm:$0xff] %vm928, %v1154
        %1219 = vst.msk [vmem:[%s257 + $0xd8] sm:$0xff] %vm928, %v1155
        %1220 = vst.msk [vmem:[%s257 + $0xe0] sm:$0xff] %vm928, %v1156
        %1221 = vst.msk [vmem:[%s257 + $0xe8] sm:$0xff] %vm928, %v1157
        %1222 = vst.msk [vmem:[%s257 + $0xf0] sm:$0xff] %vm928, %v1158
        %1223 = vst.msk [vmem:[%s257 + $0xf8] sm:$0xff] %vm928, %v1159
        %1224 = vst.msk [vmem:[%s257 + $0x100] sm:$0xff] %vm928, %v1160
        %1225 = vst.msk [vmem:[%s257 + $0x108] sm:$0xff] %vm928, %v1161
        %1226 = vst.msk [vmem:[%s257 + $0x110] sm:$0xff] %vm928, %v1162
        %1227 = vst.msk [vmem:[%s257 + $0x118] sm:$0xff] %vm928, %v1163
        %1228 = vst.msk [vmem:[%s257 + $0x120] sm:$0xff] %vm928, %v1164
        %1229 = vst.msk [vmem:[%s257 + $0x128] sm:$0xff] %vm928, %v1165
        %1230 = vst.msk [vmem:[%s257 + $0x130] sm:$0xff] %vm928, %v1166
        %1231 = vst.msk [vmem:[%s257 + $0x138] sm:$0xff] %vm928, %v1167
        %1232 = vst.msk [vmem:[%s257 + $0x140] sm:$0xff] %vm928, %v1168
        %1233 = vst.msk [vmem:[%s257 + $0x148] sm:$0xff] %vm928, %v1169
        %1234 = vst.msk [vmem:[%s257 + $0x150] sm:$0xff] %vm928, %v1170
        %1235 = vst.msk [vmem:[%s257 + $0x158] sm:$0xff] %vm928, %v1171
        %1236 = vst.msk [vmem:[%s257 + $0x160] sm:$0xff] %vm928, %v1172
        %1237 = vst.msk [vmem:[%s257 + $0x168] sm:$0xff] %vm928, %v1173
        %1238 = vst.msk [vmem:[%s257 + $0x170] sm:$0xff] %vm928, %v1174
        %1239 = vst.msk [vmem:[%s257 + $0x178] sm:$0xff] %vm928, %v1175
        %1240 = vst.msk [vmem:[%s257 + $0x180] sm:$0xff] %vm928, %v1176
        %1241 = vst.msk [vmem:[%s257 + $0x188] sm:$0xff] %vm928, %v1177
        %1242 = vst.msk [vmem:[%s257 + $0x190] sm:$0xff] %vm928, %v1178
        %1243 = vst.msk [vmem:[%s257 + $0x198] sm:$0xff] %vm928, %v1179
        %1244 = vst.msk [vmem:[%s257 + $0x1a0] sm:$0xff] %vm928, %v1180
        %1245 = vst.msk [vmem:[%s257 + $0x1a8] sm:$0xff] %vm928, %v1181
        %1246 = vst.msk [vmem:[%s257 + $0x1b0] sm:$0xff] %vm928, %v1182
        %1247 = vst.msk [vmem:[%s257 + $0x1b8] sm:$0xff] %vm928, %v1183
        %1248 = vst.msk [vmem:[%s257 + $0x1c0] sm:$0xff] %vm928, %v1184
        %1249 = vst.msk [vmem:[%s257 + $0x1c8] sm:$0xff] %vm928, %v1185
        %1250 = vst.msk [vmem:[%s257 + $0x1d0] sm:$0xff] %vm928, %v1186
        %1251 = vst.msk [vmem:[%s257 + $0x1d8] sm:$0xff] %vm928, %v1187
        %1252 = vst.msk [vmem:[%s257 + $0x1e0] sm:$0xff] %vm928, %v1188
        %1253 = vst.msk [vmem:[%s257 + $0x1e8] sm:$0xff] %vm928, %v1189
        %1254 = vst.msk [vmem:[%s257 + $0x1f0] sm:$0xff] %vm928, %v1190
        %1255 = vst.msk [vmem:[%s257 + $0x1f8] sm:$0xff] %vm928, %v1191
      $region40: #{cnn_encoder_forward.5} parent=31 // pred_fallthru
        _
      %s1256 = smul.u32 64, %s19
      %p1257 = scmp.lt.s32.totalorder %s1256, 255
      %s1258 = scalar_select %p1257, %s1256, 255
      %p1259 = scmp.lt.s32.totalorder %s20, 0
      %s1260 = scalar_select %p1259, %s20, 0
      %s1261 = sadd.s32 %s1260, %s1258
      %s1262 = smul.addr %s1261, 8
      %s1263 = scalar_lea.vmem %s3, %s1262
      // Predicated region
      $region41: #{cnn_encoder_forward.5} parent=31 // pred_check
        %p1264 = pneg %p135
      $region42: #{cnn_encoder_forward.5} parent=31 // pred_check_branch
        %1266 = sbr.rel (%p1264) target = $region44
      $region43: #{cnn_encoder_forward.5} parent=31 // pred_region
        %s1267 = smul.u32 64, %s19
      $region44: #{cnn_encoder_forward.5} parent=31 // pred_fallthru
        _
    $region32: #{cnn_encoder_forward.5} parent=5 // pred_fallthru
      _
    %p1268 = scmp.le.s32.totalorder 2, %s9
    // Predicated region
    $region45: #{cnn_encoder_forward.5} parent=5 // pred_check
      %p1269 = pneg %p1268
    $region46: #{cnn_encoder_forward.5} parent=5 // pred_check_branch
      %1271 = sbr.rel (%p1269) target = $region48
    $region47: #{cnn_encoder_forward.5} parent=5 // pred_region
      %s1272 = ssub.s32 %s9, 2
      // Predicated region
      $region49: #{cnn_encoder_forward.5} parent=47 // pred_check
        %p1273 = pneg %p141
      $region50: #{cnn_encoder_forward.5} parent=47 // pred_check_branch
        %1275 = sbr.rel (%p1273) target = $region52
      $region51: #{cnn_encoder_forward.5} parent=47 // pred_region
        %s1276 = smul.u32 64, %s22
        %p1277 = scmp.lt.s32.totalorder %s1276, 255
        %s1278 = scalar_select %p1277, %s1276, 255
        %p1279 = scmp.lt.s32.totalorder %s23, 0
        %s1280 = scalar_select %p1279, %s23, 0
        %s1281 = sadd.s32 %s1280, %s1278
        %s1282 = smul.addr %s1281, 8
        %s1283 = scalar_lea.vmem %s3, %s1282
      $region52: #{cnn_encoder_forward.5} parent=47 // pred_fallthru
        _
    $region48: #{cnn_encoder_forward.5} parent=5 // pred_fallthru
      _
  $region6: #{cnn_encoder_forward.5} parent=0 // loop_footer
    %s13 = sadd.s32 1, %s9
  $region7: #{cnn_encoder_forward.5} parent=0 // loop_footer_branch
    %8 = sbr.rel target = $region3
  $region8: #{cnn_encoder_forward.5} parent=0 // loop_exit
    _

// kernel: cnn_encoder_forward.6
$region0: #{cnn_encoder_forward.6}
  #allocation0 [shape = 'u32[]', space=smem, size = 0x4, offset = 0x4, fixed_abs, tag = 'smem constant byte address 0x4 - core index']
  #allocation1 [shape = 'u32[72,128]{1,0:T(1,128)}', space=vmem, size = 0x9000, scoped, tag = 'internal scratch']
  #allocation2 [shape = 'f32[512,64]{1,0:T(8,128)}', space=vmem, size = 0x40000, scoped, tag = 'scratch operand']
  %s0 = inlined_call_operand.vmem [shape: f32[512,512], index: 0, kind: input, shape index: {}]
  %s1 = inlined_call_operand.vmem [shape: f32[512,64], index: 1, kind: input, shape index: {}]
  %s2 = inlined_call_operand.vmem [shape: f32[1,64], index: 2, kind: input, shape index: {}]
  %s3 = inlined_call_operand.vmem [shape: f32[512,64], index: 3, kind: output, shape index: {}]
  %s4 = sld [smem:[#allocation0]]
  $region30: #{cnn_encoder_forward.6} parent=0
    _
  %s6 = ssub.s32 1, %s4
  %s7 = scalar_select 0, %s6, %s4
  // Predicated region
  $region2: #{cnn_encoder_forward.6} parent=0 // pred_check
    _
  $region3: #{cnn_encoder_forward.6} parent=0 // pred_check_branch
    %9 = sbr.rel (0) target = $region5
  $region4: #{cnn_encoder_forward.6} parent=0 // pred_region
    _
  $region5: #{cnn_encoder_forward.6} parent=0 // pred_fallthru
    _
  // Predicated region
  $region6: #{cnn_encoder_forward.6} parent=0 // pred_check
    _
  $region7: #{cnn_encoder_forward.6} parent=0 // pred_check_branch
    %11 = sbr.rel (0) target = $region9
  $region8: #{cnn_encoder_forward.6} parent=0 // pred_region
    _
  $region9: #{cnn_encoder_forward.6} parent=0 // pred_fallthru
    _
  // Predicated region
  $region10: #{cnn_encoder_forward.6} parent=0 // pred_check
    _
  $region11: #{cnn_encoder_forward.6} parent=0 // pred_check_branch
    %13 = sbr.rel (0) target = $region13
  $region12: #{cnn_encoder_forward.6} parent=0 // pred_region
    _
  $region13: #{cnn_encoder_forward.6} parent=0 // pred_fallthru
    _
  %p14 = scmp.eq.s32.totalorder 0, 0
  // Predicated region
  $region14: #{cnn_encoder_forward.6} parent=0 // pred_check
    %p15 = pneg %p14
  $region15: #{cnn_encoder_forward.6} parent=0 // pred_check_branch
    %17 = sbr.rel (%p15) target = $region17
  $region16: #{cnn_encoder_forward.6} parent=0 // pred_region
    %vm18 = vcmask 523264
    %19 = vst.msk [vmem:[#allocation2] sm:$0xff] %vm18, 0.0
    %20 = vst.msk [vmem:[#allocation2 + $0x8] sm:$0xff] %vm18, 0.0
    %21 = vst.msk [vmem:[#allocation2 + $0x10] sm:$0xff] %vm18, 0.0
    %22 = vst.msk [vmem:[#allocation2 + $0x18] sm:$0xff] %vm18, 0.0
    %23 = vst.msk [vmem:[#allocation2 + $0x20] sm:$0xff] %vm18, 0.0
    %24 = vst.msk [vmem:[#allocation2 + $0x28] sm:$0xff] %vm18, 0.0
    %25 = vst.msk [vmem:[#allocation2 + $0x30] sm:$0xff] %vm18, 0.0
    %26 = vst.msk [vmem:[#allocation2 + $0x38] sm:$0xff] %vm18, 0.0
    %27 = vst.msk [vmem:[#allocation2 + $0x40] sm:$0xff] %vm18, 0.0
    %28 = vst.msk [vmem:[#allocation2 + $0x48] sm:$0xff] %vm18, 0.0
    %29 = vst.msk [vmem:[#allocation2 + $0x50] sm:$0xff] %vm18, 0.0
    %30 = vst.msk [vmem:[#allocation2 + $0x58] sm:$0xff] %vm18, 0.0
    %31 = vst.msk [vmem:[#allocation2 + $0x60] sm:$0xff] %vm18, 0.0
    %32 = vst.msk [vmem:[#allocation2 + $0x68] sm:$0xff] %vm18, 0.0
    %33 = vst.msk [vmem:[#allocation2 + $0x70] sm:$0xff] %vm18, 0.0
    %34 = vst.msk [vmem:[#allocation2 + $0x78] sm:$0xff] %vm18, 0.0
    %35 = vst.msk [vmem:[#allocation2 + $0x80] sm:$0xff] %vm18, 0.0
    %36 = vst.msk [vmem:[#allocation2 + $0x88] sm:$0xff] %vm18, 0.0
    %37 = vst.msk [vmem:[#allocation2 + $0x90] sm:$0xff] %vm18, 0.0
    %38 = vst.msk [vmem:[#allocation2 + $0x98] sm:$0xff] %vm18, 0.0
    %39 = vst.msk [vmem:[#allocation2 + $0xa0] sm:$0xff] %vm18, 0.0
    %40 = vst.msk [vmem:[#allocation2 + $0xa8] sm:$0xff] %vm18, 0.0
    %41 = vst.msk [vmem:[#allocation2 + $0xb0] sm:$0xff] %vm18, 0.0
    %42 = vst.msk [vmem:[#allocation2 + $0xb8] sm:$0xff] %vm18, 0.0
    %43 = vst.msk [vmem:[#allocation2 + $0xc0] sm:$0xff] %vm18, 0.0
    %44 = vst.msk [vmem:[#allocation2 + $0xc8] sm:$0xff] %vm18, 0.0
    %45 = vst.msk [vmem:[#allocation2 + $0xd0] sm:$0xff] %vm18, 0.0
    %46 = vst.msk [vmem:[#allocation2 + $0xd8] sm:$0xff] %vm18, 0.0
    %47 = vst.msk [vmem:[#allocation2 + $0xe0] sm:$0xff] %vm18, 0.0
    %48 = vst.msk [vmem:[#allocation2 + $0xe8] sm:$0xff] %vm18, 0.0
    %49 = vst.msk [vmem:[#allocation2 + $0xf0] sm:$0xff] %vm18, 0.0
    %50 = vst.msk [vmem:[#allocation2 + $0xf8] sm:$0xff] %vm18, 0.0
    %51 = vst.msk [vmem:[#allocation2 + $0x100] sm:$0xff] %vm18, 0.0
    %52 = vst.msk [vmem:[#allocation2 + $0x108] sm:$0xff] %vm18, 0.0
    %53 = vst.msk [vmem:[#allocation2 + $0x110] sm:$0xff] %vm18, 0.0
    %54 = vst.msk [vmem:[#allocation2 + $0x118] sm:$0xff] %vm18, 0.0
    %55 = vst.msk [vmem:[#allocation2 + $0x120] sm:$0xff] %vm18, 0.0
    %56 = vst.msk [vmem:[#allocation2 + $0x128] sm:$0xff] %vm18, 0.0
    %57 = vst.msk [vmem:[#allocation2 + $0x130] sm:$0xff] %vm18, 0.0
    %58 = vst.msk [vmem:[#allocation2 + $0x138] sm:$0xff] %vm18, 0.0
    %59 = vst.msk [vmem:[#allocation2 + $0x140] sm:$0xff] %vm18, 0.0
    %60 = vst.msk [vmem:[#allocation2 + $0x148] sm:$0xff] %vm18, 0.0
    %61 = vst.msk [vmem:[#allocation2 + $0x150] sm:$0xff] %vm18, 0.0
    %62 = vst.msk [vmem:[#allocation2 + $0x158] sm:$0xff] %vm18, 0.0
    %63 = vst.msk [vmem:[#allocation2 + $0x160] sm:$0xff] %vm18, 0.0
    %64 = vst.msk [vmem:[#allocation2 + $0x168] sm:$0xff] %vm18, 0.0
    %65 = vst.msk [vmem:[#allocation2 + $0x170] sm:$0xff] %vm18, 0.0
    %66 = vst.msk [vmem:[#allocation2 + $0x178] sm:$0xff] %vm18, 0.0
    %67 = vst.msk [vmem:[#allocation2 + $0x180] sm:$0xff] %vm18, 0.0
    %68 = vst.msk [vmem:[#allocation2 + $0x188] sm:$0xff] %vm18, 0.0
    %69 = vst.msk [vmem:[#allocation2 + $0x190] sm:$0xff] %vm18, 0.0
    %70 = vst.msk [vmem:[#allocation2 + $0x198] sm:$0xff] %vm18, 0.0
    %71 = vst.msk [vmem:[#allocation2 + $0x1a0] sm:$0xff] %vm18, 0.0
    %72 = vst.msk [vmem:[#allocation2 + $0x1a8] sm:$0xff] %vm18, 0.0
    %73 = vst.msk [vmem:[#allocation2 + $0x1b0] sm:$0xff] %vm18, 0.0
    %74 = vst.msk [vmem:[#allocation2 + $0x1b8] sm:$0xff] %vm18, 0.0
    %75 = vst.msk [vmem:[#allocation2 + $0x1c0] sm:$0xff] %vm18, 0.0
    %76 = vst.msk [vmem:[#allocation2 + $0x1c8] sm:$0xff] %vm18, 0.0
    %77 = vst.msk [vmem:[#allocation2 + $0x1d0] sm:$0xff] %vm18, 0.0
    %78 = vst.msk [vmem:[#allocation2 + $0x1d8] sm:$0xff] %vm18, 0.0
    %79 = vst.msk [vmem:[#allocation2 + $0x1e0] sm:$0xff] %vm18, 0.0
    %80 = vst.msk [vmem:[#allocation2 + $0x1e8] sm:$0xff] %vm18, 0.0
    %81 = vst.msk [vmem:[#allocation2 + $0x1f0] sm:$0xff] %vm18, 0.0
    %82 = vst.msk [vmem:[#allocation2 + $0x1f8] sm:$0xff] %vm18, 0.0
  $region17: #{cnn_encoder_forward.6} parent=0 // pred_fallthru
    _
  %v83 = vld [vmem:[#allocation2] sm:$0xff]
  %v84 = vld [vmem:[#allocation2 + $0x8] sm:$0xff]
  %v85 = vld [vmem:[#allocation2 + $0x10] sm:$0xff]
  %v86 = vld [vmem:[#allocation2 + $0x18] sm:$0xff]
  %v87 = vld [vmem:[#allocation2 + $0x20] sm:$0xff]
  %v88 = vld [vmem:[#allocation2 + $0x28] sm:$0xff]
  %v89 = vld [vmem:[#allocation2 + $0x30] sm:$0xff]
  %v90 = vld [vmem:[#allocation2 + $0x38] sm:$0xff]
  %v91 = vld [vmem:[#allocation2 + $0x40] sm:$0xff]
  %v92 = vld [vmem:[#allocation2 + $0x48] sm:$0xff]
  %v93 = vld [vmem:[#allocation2 + $0x50] sm:$0xff]
  %v94 = vld [vmem:[#allocation2 + $0x58] sm:$0xff]
  %v95 = vld [vmem:[#allocation2 + $0x60] sm:$0xff]
  %v96 = vld [vmem:[#allocation2 + $0x68] sm:$0xff]
  %v97 = vld [vmem:[#allocation2 + $0x70] sm:$0xff]
  %v98 = vld [vmem:[#allocation2 + $0x78] sm:$0xff]
  %v99 = vld [vmem:[#allocation2 + $0x80] sm:$0xff]
  %v100 = vld [vmem:[#allocation2 + $0x88] sm:$0xff]
  %v101 = vld [vmem:[#allocation2 + $0x90] sm:$0xff]
  %v102 = vld [vmem:[#allocation2 + $0x98] sm:$0xff]
  %v103 = vld [vmem:[#allocation2 + $0xa0] sm:$0xff]
  %v104 = vld [vmem:[#allocation2 + $0xa8] sm:$0xff]
  %v105 = vld [vmem:[#allocation2 + $0xb0] sm:$0xff]
  %v106 = vld [vmem:[#allocation2 + $0xb8] sm:$0xff]
  %v107 = vld [vmem:[#allocation2 + $0xc0] sm:$0xff]
  %v108 = vld [vmem:[#allocation2 + $0xc8] sm:$0xff]
  %v109 = vld [vmem:[#allocation2 + $0xd0] sm:$0xff]
  %v110 = vld [vmem:[#allocation2 + $0xd8] sm:$0xff]
  %v111 = vld [vmem:[#allocation2 + $0xe0] sm:$0xff]
  %v112 = vld [vmem:[#allocation2 + $0xe8] sm:$0xff]
  %v113 = vld [vmem:[#allocation2 + $0xf0] sm:$0xff]
  %v114 = vld [vmem:[#allocation2 + $0xf8] sm:$0xff]
  %v115 = vld [vmem:[#allocation2 + $0x100] sm:$0xff]
  %v116 = vld [vmem:[#allocation2 + $0x108] sm:$0xff]
  %v117 = vld [vmem:[#allocation2 + $0x110] sm:$0xff]
  %v118 = vld [vmem:[#allocation2 + $0x118] sm:$0xff]
  %v119 = vld [vmem:[#allocation2 + $0x120] sm:$0xff]
  %v120 = vld [vmem:[#allocation2 + $0x128] sm:$0xff]
  %v121 = vld [vmem:[#allocation2 + $0x130] sm:$0xff]
  %v122 = vld [vmem:[#allocation2 + $0x138] sm:$0xff]
  %v123 = vld [vmem:[#allocation2 + $0x140] sm:$0xff]
  %v124 = vld [vmem:[#allocation2 + $0x148] sm:$0xff]
  %v125 = vld [vmem:[#allocation2 + $0x150] sm:$0xff]
  %v126 = vld [vmem:[#allocation2 + $0x158] sm:$0xff]
  %v127 = vld [vmem:[#allocation2 + $0x160] sm:$0xff]
  %v128 = vld [vmem:[#allocation2 + $0x168] sm:$0xff]
  %v129 = vld [vmem:[#allocation2 + $0x170] sm:$0xff]
  %v130 = vld [vmem:[#allocation2 + $0x178] sm:$0xff]
  %v131 = vld [vmem:[#allocation2 + $0x180] sm:$0xff]
  %v132 = vld [vmem:[#allocation2 + $0x188] sm:$0xff]
  %v133 = vld [vmem:[#allocation2 + $0x190] sm:$0xff]
  %v134 = vld [vmem:[#allocation2 + $0x198] sm:$0xff]
  %v135 = vld [vmem:[#allocation2 + $0x1a0] sm:$0xff]
  %v136 = vld [vmem:[#allocation2 + $0x1a8] sm:$0xff]
  %v137 = vld [vmem:[#allocation2 + $0x1b0] sm:$0xff]
  %v138 = vld [vmem:[#allocation2 + $0x1b8] sm:$0xff]
  %v139 = vld [vmem:[#allocation2 + $0x1c0] sm:$0xff]
  %v140 = vld [vmem:[#allocation2 + $0x1c8] sm:$0xff]
  %v141 = vld [vmem:[#allocation2 + $0x1d0] sm:$0xff]
  %v142 = vld [vmem:[#allocation2 + $0x1d8] sm:$0xff]
  %v143 = vld [vmem:[#allocation2 + $0x1e0] sm:$0xff]
  %v144 = vld [vmem:[#allocation2 + $0x1e8] sm:$0xff]
  %v145 = vld [vmem:[#allocation2 + $0x1f0] sm:$0xff]
  %v146 = vld [vmem:[#allocation2 + $0x1f8] sm:$0xff]
  %v147 = vld [vmem:[%s0] sm:$0xff]
  %v148 = vld [vmem:[%s0 + $0x8] sm:$0xff]
  %v149 = vld [vmem:[%s0 + $0x10] sm:$0xff]
  %v150 = vld [vmem:[%s0 + $0x18] sm:$0xff]
  %v151 = vld [vmem:[%s0 + $0x20] sm:$0xff]
  %v152 = vld [vmem:[%s0 + $0x28] sm:$0xff]
  %v153 = vld [vmem:[%s0 + $0x30] sm:$0xff]
  %v154 = vld [vmem:[%s0 + $0x38] sm:$0xff]
  %v155 = vld [vmem:[%s0 + $0x40] sm:$0xff]
  %v156 = vld [vmem:[%s0 + $0x48] sm:$0xff]
  %v157 = vld [vmem:[%s0 + $0x50] sm:$0xff]
  %v158 = vld [vmem:[%s0 + $0x58] sm:$0xff]
  %v159 = vld [vmem:[%s0 + $0x60] sm:$0xff]
  %v160 = vld [vmem:[%s0 + $0x68] sm:$0xff]
  %v161 = vld [vmem:[%s0 + $0x70] sm:$0xff]
  %v162 = vld [vmem:[%s0 + $0x78] sm:$0xff]
  %v163 = vld [vmem:[%s0 + $0x80] sm:$0xff]
  %v164 = vld [vmem:[%s0 + $0x88] sm:$0xff]
  %v165 = vld [vmem:[%s0 + $0x90] sm:$0xff]
  %v166 = vld [vmem:[%s0 + $0x98] sm:$0xff]
  %v167 = vld [vmem:[%s0 + $0xa0] sm:$0xff]
  %v168 = vld [vmem:[%s0 + $0xa8] sm:$0xff]
  %v169 = vld [vmem:[%s0 + $0xb0] sm:$0xff]
  %v170 = vld [vmem:[%s0 + $0xb8] sm:$0xff]
  %v171 = vld [vmem:[%s0 + $0xc0] sm:$0xff]
  %v172 = vld [vmem:[%s0 + $0xc8] sm:$0xff]
  %v173 = vld [vmem:[%s0 + $0xd0] sm:$0xff]
  %v174 = vld [vmem:[%s0 + $0xd8] sm:$0xff]
  %v175 = vld [vmem:[%s0 + $0xe0] sm:$0xff]
  %v176 = vld [vmem:[%s0 + $0xe8] sm:$0xff]
  %v177 = vld [vmem:[%s0 + $0xf0] sm:$0xff]
  %v178 = vld [vmem:[%s0 + $0xf8] sm:$0xff]
  %v179 = vld [vmem:[%s0 + $0x100] sm:$0xff]
  %v180 = vld [vmem:[%s0 + $0x108] sm:$0xff]
  %v181 = vld [vmem:[%s0 + $0x110] sm:$0xff]
  %v182 = vld [vmem:[%s0 + $0x118] sm:$0xff]
  %v183 = vld [vmem:[%s0 + $0x120] sm:$0xff]
  %v184 = vld [vmem:[%s0 + $0x128] sm:$0xff]
  %v185 = vld [vmem:[%s0 + $0x130] sm:$0xff]
  %v186 = vld [vmem:[%s0 + $0x138] sm:$0xff]
  %v187 = vld [vmem:[%s0 + $0x140] sm:$0xff]
  %v188 = vld [vmem:[%s0 + $0x148] sm:$0xff]
  %v189 = vld [vmem:[%s0 + $0x150] sm:$0xff]
  %v190 = vld [vmem:[%s0 + $0x158] sm:$0xff]
  %v191 = vld [vmem:[%s0 + $0x160] sm:$0xff]
  %v192 = vld [vmem:[%s0 + $0x168] sm:$0xff]
  %v193 = vld [vmem:[%s0 + $0x170] sm:$0xff]
  %v194 = vld [vmem:[%s0 + $0x178] sm:$0xff]
  %v195 = vld [vmem:[%s0 + $0x180] sm:$0xff]
  %v196 = vld [vmem:[%s0 + $0x188] sm:$0xff]
  %v197 = vld [vmem:[%s0 + $0x190] sm:$0xff]
  %v198 = vld [vmem:[%s0 + $0x198] sm:$0xff]
  %v199 = vld [vmem:[%s0 + $0x1a0] sm:$0xff]
  %v200 = vld [vmem:[%s0 + $0x1a8] sm:$0xff]
  %v201 = vld [vmem:[%s0 + $0x1b0] sm:$0xff]
  %v202 = vld [vmem:[%s0 + $0x1b8] sm:$0xff]
  %v203 = vld [vmem:[%s0 + $0x1c0] sm:$0xff]
  %v204 = vld [vmem:[%s0 + $0x1c8] sm:$0xff]
  %v205 = vld [vmem:[%s0 + $0x1d0] sm:$0xff]
  %v206 = vld [vmem:[%s0 + $0x1d8] sm:$0xff]
  %v207 = vld [vmem:[%s0 + $0x1e0] sm:$0xff]
  %v208 = vld [vmem:[%s0 + $0x1e8] sm:$0xff]
  %v209 = vld [vmem:[%s0 + $0x1f0] sm:$0xff]
  %v210 = vld [vmem:[%s0 + $0x1f8] sm:$0xff]
  %v211 = vld [vmem:[%s0 + $0x200] sm:$0xff]
  %v212 = vld [vmem:[%s0 + $0x208] sm:$0xff]
  %v213 = vld [vmem:[%s0 + $0x210] sm:$0xff]
  %v214 = vld [vmem:[%s0 + $0x218] sm:$0xff]
  %v215 = vld [vmem:[%s0 + $0x220] sm:$0xff]
  %v216 = vld [vmem:[%s0 + $0x228] sm:$0xff]
  %v217 = vld [vmem:[%s0 + $0x230] sm:$0xff]
  %v218 = vld [vmem:[%s0 + $0x238] sm:$0xff]
  %v219 = vld [vmem:[%s0 + $0x240] sm:$0xff]
  %v220 = vld [vmem:[%s0 + $0x248] sm:$0xff]
  %v221 = vld [vmem:[%s0 + $0x250] sm:$0xff]
  %v222 = vld [vmem:[%s0 + $0x258] sm:$0xff]
  %v223 = vld [vmem:[%s0 + $0x260] sm:$0xff]
  %v224 = vld [vmem:[%s0 + $0x268] sm:$0xff]
  %v225 = vld [vmem:[%s0 + $0x270] sm:$0xff]
  %v226 = vld [vmem:[%s0 + $0x278] sm:$0xff]
  %v227 = vld [vmem:[%s0 + $0x280] sm:$0xff]
  %v228 = vld [vmem:[%s0 + $0x288] sm:$0xff]
  %v229 = vld [vmem:[%s0 + $0x290] sm:$0xff]
  %v230 = vld [vmem:[%s0 + $0x298] sm:$0xff]
  %v231 = vld [vmem:[%s0 + $0x2a0] sm:$0xff]
  %v232 = vld [vmem:[%s0 + $0x2a8] sm:$0xff]
  %v233 = vld [vmem:[%s0 + $0x2b0] sm:$0xff]
  %v234 = vld [vmem:[%s0 + $0x2b8] sm:$0xff]
  %v235 = vld [vmem:[%s0 + $0x2c0] sm:$0xff]
  %v236 = vld [vmem:[%s0 + $0x2c8] sm:$0xff]
  %v237 = vld [vmem:[%s0 + $0x2d0] sm:$0xff]
  %v238 = vld [vmem:[%s0 + $0x2d8] sm:$0xff]
  %v239 = vld [vmem:[%s0 + $0x2e0] sm:$0xff]
  %v240 = vld [vmem:[%s0 + $0x2e8] sm:$0xff]
  %v241 = vld [vmem:[%s0 + $0x2f0] sm:$0xff]
  %v242 = vld [vmem:[%s0 + $0x2f8] sm:$0xff]
  %v243 = vld [vmem:[%s0 + $0x300] sm:$0xff]
  %v244 = vld [vmem:[%s0 + $0x308] sm:$0xff]
  %v245 = vld [vmem:[%s0 + $0x310] sm:$0xff]
  %v246 = vld [vmem:[%s0 + $0x318] sm:$0xff]
  %v247 = vld [vmem:[%s0 + $0x320] sm:$0xff]
  %v248 = vld [vmem:[%s0 + $0x328] sm:$0xff]
  %v249 = vld [vmem:[%s0 + $0x330] sm:$0xff]
  %v250 = vld [vmem:[%s0 + $0x338] sm:$0xff]
  %v251 = vld [vmem:[%s0 + $0x340] sm:$0xff]
  %v252 = vld [vmem:[%s0 + $0x348] sm:$0xff]
  %v253 = vld [vmem:[%s0 + $0x350] sm:$0xff]
  %v254 = vld [vmem:[%s0 + $0x358] sm:$0xff]
  %v255 = vld [vmem:[%s0 + $0x360] sm:$0xff]
  %v256 = vld [vmem:[%s0 + $0x368] sm:$0xff]
  %v257 = vld [vmem:[%s0 + $0x370] sm:$0xff]
  %v258 = vld [vmem:[%s0 + $0x378] sm:$0xff]
  %v259 = vld [vmem:[%s0 + $0x380] sm:$0xff]
  %v260 = vld [vmem:[%s0 + $0x388] sm:$0xff]
  %v261 = vld [vmem:[%s0 + $0x390] sm:$0xff]
  %v262 = vld [vmem:[%s0 + $0x398] sm:$0xff]
  %v263 = vld [vmem:[%s0 + $0x3a0] sm:$0xff]
  %v264 = vld [vmem:[%s0 + $0x3a8] sm:$0xff]
  %v265 = vld [vmem:[%s0 + $0x3b0] sm:$0xff]
  %v266 = vld [vmem:[%s0 + $0x3b8] sm:$0xff]
  %v267 = vld [vmem:[%s0 + $0x3c0] sm:$0xff]
  %v268 = vld [vmem:[%s0 + $0x3c8] sm:$0xff]
  %v269 = vld [vmem:[%s0 + $0x3d0] sm:$0xff]
  %v270 = vld [vmem:[%s0 + $0x3d8] sm:$0xff]
  %v271 = vld [vmem:[%s0 + $0x3e0] sm:$0xff]
  %v272 = vld [vmem:[%s0 + $0x3e8] sm:$0xff]
  %v273 = vld [vmem:[%s0 + $0x3f0] sm:$0xff]
  %v274 = vld [vmem:[%s0 + $0x3f8] sm:$0xff]
  %v275 = vld [vmem:[%s0 + $0x400] sm:$0xff]
  %v276 = vld [vmem:[%s0 + $0x408] sm:$0xff]
  %v277 = vld [vmem:[%s0 + $0x410] sm:$0xff]
  %v278 = vld [vmem:[%s0 + $0x418] sm:$0xff]
  %v279 = vld [vmem:[%s0 + $0x420] sm:$0xff]
  %v280 = vld [vmem:[%s0 + $0x428] sm:$0xff]
  %v281 = vld [vmem:[%s0 + $0x430] sm:$0xff]
  %v282 = vld [vmem:[%s0 + $0x438] sm:$0xff]
  %v283 = vld [vmem:[%s0 + $0x440] sm:$0xff]
  %v284 = vld [vmem:[%s0 + $0x448] sm:$0xff]
  %v285 = vld [vmem:[%s0 + $0x450] sm:$0xff]
  %v286 = vld [vmem:[%s0 + $0x458] sm:$0xff]
  %v287 = vld [vmem:[%s0 + $0x460] sm:$0xff]
  %v288 = vld [vmem:[%s0 + $0x468] sm:$0xff]
  %v289 = vld [vmem:[%s0 + $0x470] sm:$0xff]
  %v290 = vld [vmem:[%s0 + $0x478] sm:$0xff]
  %v291 = vld [vmem:[%s0 + $0x480] sm:$0xff]
  %v292 = vld [vmem:[%s0 + $0x488] sm:$0xff]
  %v293 = vld [vmem:[%s0 + $0x490] sm:$0xff]
  %v294 = vld [vmem:[%s0 + $0x498] sm:$0xff]
  %v295 = vld [vmem:[%s0 + $0x4a0] sm:$0xff]
  %v296 = vld [vmem:[%s0 + $0x4a8] sm:$0xff]
  %v297 = vld [vmem:[%s0 + $0x4b0] sm:$0xff]
  %v298 = vld [vmem:[%s0 + $0x4b8] sm:$0xff]
  %v299 = vld [vmem:[%s0 + $0x4c0] sm:$0xff]
  %v300 = vld [vmem:[%s0 + $0x4c8] sm:$0xff]
  %v301 = vld [vmem:[%s0 + $0x4d0] sm:$0xff]
  %v302 = vld [vmem:[%s0 + $0x4d8] sm:$0xff]
  %v303 = vld [vmem:[%s0 + $0x4e0] sm:$0xff]
  %v304 = vld [vmem:[%s0 + $0x4e8] sm:$0xff]
  %v305 = vld [vmem:[%s0 + $0x4f0] sm:$0xff]
  %v306 = vld [vmem:[%s0 + $0x4f8] sm:$0xff]
  %v307 = vld [vmem:[%s0 + $0x500] sm:$0xff]
  %v308 = vld [vmem:[%s0 + $0x508] sm:$0xff]
  %v309 = vld [vmem:[%s0 + $0x510] sm:$0xff]
  %v310 = vld [vmem:[%s0 + $0x518] sm:$0xff]
  %v311 = vld [vmem:[%s0 + $0x520] sm:$0xff]
  %v312 = vld [vmem:[%s0 + $0x528] sm:$0xff]
  %v313 = vld [vmem:[%s0 + $0x530] sm:$0xff]
  %v314 = vld [vmem:[%s0 + $0x538] sm:$0xff]
  %v315 = vld [vmem:[%s0 + $0x540] sm:$0xff]
  %v316 = vld [vmem:[%s0 + $0x548] sm:$0xff]
  %v317 = vld [vmem:[%s0 + $0x550] sm:$0xff]
  %v318 = vld [vmem:[%s0 + $0x558] sm:$0xff]
  %v319 = vld [vmem:[%s0 + $0x560] sm:$0xff]
  %v320 = vld [vmem:[%s0 + $0x568] sm:$0xff]
  %v321 = vld [vmem:[%s0 + $0x570] sm:$0xff]
  %v322 = vld [vmem:[%s0 + $0x578] sm:$0xff]
  %v323 = vld [vmem:[%s0 + $0x580] sm:$0xff]
  %v324 = vld [vmem:[%s0 + $0x588] sm:$0xff]
  %v325 = vld [vmem:[%s0 + $0x590] sm:$0xff]
  %v326 = vld [vmem:[%s0 + $0x598] sm:$0xff]
  %v327 = vld [vmem:[%s0 + $0x5a0] sm:$0xff]
  %v328 = vld [vmem:[%s0 + $0x5a8] sm:$0xff]
  %v329 = vld [vmem:[%s0 + $0x5b0] sm:$0xff]
  %v330 = vld [vmem:[%s0 + $0x5b8] sm:$0xff]
  %v331 = vld [vmem:[%s0 + $0x5c0] sm:$0xff]
  %v332 = vld [vmem:[%s0 + $0x5c8] sm:$0xff]
  %v333 = vld [vmem:[%s0 + $0x5d0] sm:$0xff]
  %v334 = vld [vmem:[%s0 + $0x5d8] sm:$0xff]
  %v335 = vld [vmem:[%s0 + $0x5e0] sm:$0xff]
  %v336 = vld [vmem:[%s0 + $0x5e8] sm:$0xff]
  %v337 = vld [vmem:[%s0 + $0x5f0] sm:$0xff]
  %v338 = vld [vmem:[%s0 + $0x5f8] sm:$0xff]
  %v339 = vld [vmem:[%s0 + $0x600] sm:$0xff]
  %v340 = vld [vmem:[%s0 + $0x608] sm:$0xff]
  %v341 = vld [vmem:[%s0 + $0x610] sm:$0xff]
  %v342 = vld [vmem:[%s0 + $0x618] sm:$0xff]
  %v343 = vld [vmem:[%s0 + $0x620] sm:$0xff]
  %v344 = vld [vmem:[%s0 + $0x628] sm:$0xff]
  %v345 = vld [vmem:[%s0 + $0x630] sm:$0xff]
  %v346 = vld [vmem:[%s0 + $0x638] sm:$0xff]
  %v347 = vld [vmem:[%s0 + $0x640] sm:$0xff]
  %v348 = vld [vmem:[%s0 + $0x648] sm:$0xff]
  %v349 = vld [vmem:[%s0 + $0x650] sm:$0xff]
  %v350 = vld [vmem:[%s0 + $0x658] sm:$0xff]
  %v351 = vld [vmem:[%s0 + $0x660] sm:$0xff]
  %v352 = vld [vmem:[%s0 + $0x668] sm:$0xff]
  %v353 = vld [vmem:[%s0 + $0x670] sm:$0xff]
  %v354 = vld [vmem:[%s0 + $0x678] sm:$0xff]
  %v355 = vld [vmem:[%s0 + $0x680] sm:$0xff]
  %v356 = vld [vmem:[%s0 + $0x688] sm:$0xff]
  %v357 = vld [vmem:[%s0 + $0x690] sm:$0xff]
  %v358 = vld [vmem:[%s0 + $0x698] sm:$0xff]
  %v359 = vld [vmem:[%s0 + $0x6a0] sm:$0xff]
  %v360 = vld [vmem:[%s0 + $0x6a8] sm:$0xff]
  %v361 = vld [vmem:[%s0 + $0x6b0] sm:$0xff]
  %v362 = vld [vmem:[%s0 + $0x6b8] sm:$0xff]
  %v363 = vld [vmem:[%s0 + $0x6c0] sm:$0xff]
  %v364 = vld [vmem:[%s0 + $0x6c8] sm:$0xff]
  %v365 = vld [vmem:[%s0 + $0x6d0] sm:$0xff]
  %v366 = vld [vmem:[%s0 + $0x6d8] sm:$0xff]
  %v367 = vld [vmem:[%s0 + $0x6e0] sm:$0xff]
  %v368 = vld [vmem:[%s0 + $0x6e8] sm:$0xff]
  %v369 = vld [vmem:[%s0 + $0x6f0] sm:$0xff]
  %v370 = vld [vmem:[%s0 + $0x6f8] sm:$0xff]
  %v371 = vld [vmem:[%s0 + $0x700] sm:$0xff]
  %v372 = vld [vmem:[%s0 + $0x708] sm:$0xff]
  %v373 = vld [vmem:[%s0 + $0x710] sm:$0xff]
  %v374 = vld [vmem:[%s0 + $0x718] sm:$0xff]
  %v375 = vld [vmem:[%s0 + $0x720] sm:$0xff]
  %v376 = vld [vmem:[%s0 + $0x728] sm:$0xff]
  %v377 = vld [vmem:[%s0 + $0x730] sm:$0xff]
  %v378 = vld [vmem:[%s0 + $0x738] sm:$0xff]
  %v379 = vld [vmem:[%s0 + $0x740] sm:$0xff]
  %v380 = vld [vmem:[%s0 + $0x748] sm:$0xff]
  %v381 = vld [vmem:[%s0 + $0x750] sm:$0xff]
  %v382 = vld [vmem:[%s0 + $0x758] sm:$0xff]
  %v383 = vld [vmem:[%s0 + $0x760] sm:$0xff]
  %v384 = vld [vmem:[%s0 + $0x768] sm:$0xff]
  %v385 = vld [vmem:[%s0 + $0x770] sm:$0xff]
  %v386 = vld [vmem:[%s0 + $0x778] sm:$0xff]
  %v387 = vld [vmem:[%s0 + $0x780] sm:$0xff]
  %v388 = vld [vmem:[%s0 + $0x788] sm:$0xff]
  %v389 = vld [vmem:[%s0 + $0x790] sm:$0xff]
  %v390 = vld [vmem:[%s0 + $0x798] sm:$0xff]
  %v391 = vld [vmem:[%s0 + $0x7a0] sm:$0xff]
  %v392 = vld [vmem:[%s0 + $0x7a8] sm:$0xff]
  %v393 = vld [vmem:[%s0 + $0x7b0] sm:$0xff]
  %v394 = vld [vmem:[%s0 + $0x7b8] sm:$0xff]
  %v395 = vld [vmem:[%s0 + $0x7c0] sm:$0xff]
  %v396 = vld [vmem:[%s0 + $0x7c8] sm:$0xff]
  %v397 = vld [vmem:[%s0 + $0x7d0] sm:$0xff]
  %v398 = vld [vmem:[%s0 + $0x7d8] sm:$0xff]
  %v399 = vld [vmem:[%s0 + $0x7e0] sm:$0xff]
  %v400 = vld [vmem:[%s0 + $0x7e8] sm:$0xff]
  %v401 = vld [vmem:[%s0 + $0x7f0] sm:$0xff]
  %v402 = vld [vmem:[%s0 + $0x7f8] sm:$0xff]
  %v403 = vld [vmem:[%s1] sm:$0xff]
  %v404 = vld [vmem:[%s1 + $0x8] sm:$0xff]
  %v405 = vld [vmem:[%s1 + $0x10] sm:$0xff]
  %v406 = vld [vmem:[%s1 + $0x18] sm:$0xff]
  %v407 = vld [vmem:[%s1 + $0x20] sm:$0xff]
  %v408 = vld [vmem:[%s1 + $0x28] sm:$0xff]
  %v409 = vld [vmem:[%s1 + $0x30] sm:$0xff]
  %v410 = vld [vmem:[%s1 + $0x38] sm:$0xff]
  %v411 = vld [vmem:[%s1 + $0x40] sm:$0xff]
  %v412 = vld [vmem:[%s1 + $0x48] sm:$0xff]
  %v413 = vld [vmem:[%s1 + $0x50] sm:$0xff]
  %v414 = vld [vmem:[%s1 + $0x58] sm:$0xff]
  %v415 = vld [vmem:[%s1 + $0x60] sm:$0xff]
  %v416 = vld [vmem:[%s1 + $0x68] sm:$0xff]
  %v417 = vld [vmem:[%s1 + $0x70] sm:$0xff]
  %v418 = vld [vmem:[%s1 + $0x78] sm:$0xff]
  %v419 = vld [vmem:[%s1 + $0x80] sm:$0xff]
  %v420 = vld [vmem:[%s1 + $0x88] sm:$0xff]
  %v421 = vld [vmem:[%s1 + $0x90] sm:$0xff]
  %v422 = vld [vmem:[%s1 + $0x98] sm:$0xff]
  %v423 = vld [vmem:[%s1 + $0xa0] sm:$0xff]
  %v424 = vld [vmem:[%s1 + $0xa8] sm:$0xff]
  %v425 = vld [vmem:[%s1 + $0xb0] sm:$0xff]
  %v426 = vld [vmem:[%s1 + $0xb8] sm:$0xff]
  %v427 = vld [vmem:[%s1 + $0xc0] sm:$0xff]
  %v428 = vld [vmem:[%s1 + $0xc8] sm:$0xff]
  %v429 = vld [vmem:[%s1 + $0xd0] sm:$0xff]
  %v430 = vld [vmem:[%s1 + $0xd8] sm:$0xff]
  %v431 = vld [vmem:[%s1 + $0xe0] sm:$0xff]
  %v432 = vld [vmem:[%s1 + $0xe8] sm:$0xff]
  %v433 = vld [vmem:[%s1 + $0xf0] sm:$0xff]
  %v434 = vld [vmem:[%s1 + $0xf8] sm:$0xff]
  %v435 = vld [vmem:[%s1 + $0x100] sm:$0xff]
  %v436 = vld [vmem:[%s1 + $0x108] sm:$0xff]
  %v437 = vld [vmem:[%s1 + $0x110] sm:$0xff]
  %v438 = vld [vmem:[%s1 + $0x118] sm:$0xff]
  %v439 = vld [vmem:[%s1 + $0x120] sm:$0xff]
  %v440 = vld [vmem:[%s1 + $0x128] sm:$0xff]
  %v441 = vld [vmem:[%s1 + $0x130] sm:$0xff]
  %v442 = vld [vmem:[%s1 + $0x138] sm:$0xff]
  %v443 = vld [vmem:[%s1 + $0x140] sm:$0xff]
  %v444 = vld [vmem:[%s1 + $0x148] sm:$0xff]
  %v445 = vld [vmem:[%s1 + $0x150] sm:$0xff]
  %v446 = vld [vmem:[%s1 + $0x158] sm:$0xff]
  %v447 = vld [vmem:[%s1 + $0x160] sm:$0xff]
  %v448 = vld [vmem:[%s1 + $0x168] sm:$0xff]
  %v449 = vld [vmem:[%s1 + $0x170] sm:$0xff]
  %v450 = vld [vmem:[%s1 + $0x178] sm:$0xff]
  %v451 = vld [vmem:[%s1 + $0x180] sm:$0xff]
  %v452 = vld [vmem:[%s1 + $0x188] sm:$0xff]
  %v453 = vld [vmem:[%s1 + $0x190] sm:$0xff]
  %v454 = vld [vmem:[%s1 + $0x198] sm:$0xff]
  %v455 = vld [vmem:[%s1 + $0x1a0] sm:$0xff]
  %v456 = vld [vmem:[%s1 + $0x1a8] sm:$0xff]
  %v457 = vld [vmem:[%s1 + $0x1b0] sm:$0xff]
  %v458 = vld [vmem:[%s1 + $0x1b8] sm:$0xff]
  %v459 = vld [vmem:[%s1 + $0x1c0] sm:$0xff]
  %v460 = vld [vmem:[%s1 + $0x1c8] sm:$0xff]
  %v461 = vld [vmem:[%s1 + $0x1d0] sm:$0xff]
  %v462 = vld [vmem:[%s1 + $0x1d8] sm:$0xff]
  %v463 = vld [vmem:[%s1 + $0x1e0] sm:$0xff]
  %v464 = vld [vmem:[%s1 + $0x1e8] sm:$0xff]
  %v465 = vld [vmem:[%s1 + $0x1f0] sm:$0xff]
  %v466 = vld [vmem:[%s1 + $0x1f8] sm:$0xff]
  %467 = vmatpush.msra.mxu0 %v418
  %468 = vmatpush.msra.mxu0 %v417
  %469 = vmatpush.msra.mxu0 %v416
  %470 = vmatpush.msra.mxu0 %v415
  %471 = vmatpush.msra.mxu0 %v414
  %472 = vmatpush.msra.mxu0 %v413
  %473 = vmatpush.msra.mxu0 %v412
  %474 = vmatpush.msra.mxu0 %v411
  %475 = vmatpush.msra.mxu0 %v410
  %476 = vmatpush.msra.mxu0 %v409
  %477 = vmatpush.msra.mxu0 %v408
  %478 = vmatpush.msra.mxu0 %v407
  %479 = vmatpush.msra.mxu0 %v406
  %480 = vmatpush.msra.mxu0 %v405
  %481 = vmatpush.msra.mxu0 %v404
  %482 = vmatpush.msra.mxu0 %v403
  %483 = vmatmul.f32.gmra.mxu0 %v147
  %v484 = vpop.f32.mrf.mxu0
  %v485 = vadd.f32 0.0, %v484
  %486 = vmatmul.f32.gmra.mxu0 %v151
  %v487 = vpop.f32.mrf.mxu0
  %v488 = vadd.f32 0.0, %v487
  %489 = vmatmul.f32.gmra.mxu0 %v155
  %v490 = vpop.f32.mrf.mxu0
  %v491 = vadd.f32 0.0, %v490
  %492 = vmatmul.f32.gmra.mxu0 %v159
  %v493 = vpop.f32.mrf.mxu0
  %v494 = vadd.f32 0.0, %v493
  %495 = vmatmul.f32.gmra.mxu0 %v163
  %v496 = vpop.f32.mrf.mxu0
  %v497 = vadd.f32 0.0, %v496
  %498 = vmatmul.f32.gmra.mxu0 %v167
  %v499 = vpop.f32.mrf.mxu0
  %v500 = vadd.f32 0.0, %v499
  %501 = vmatmul.f32.gmra.mxu0 %v171
  %v502 = vpop.f32.mrf.mxu0
  %v503 = vadd.f32 0.0, %v502
  %504 = vmatmul.f32.gmra.mxu0 %v175
  %v505 = vpop.f32.mrf.mxu0
  %v506 = vadd.f32 0.0, %v505
  %507 = vmatmul.f32.gmra.mxu0 %v179
  %v508 = vpop.f32.mrf.mxu0
  %v509 = vadd.f32 0.0, %v508
  %510 = vmatmul.f32.gmra.mxu0 %v183
  %v511 = vpop.f32.mrf.mxu0
  %v512 = vadd.f32 0.0, %v511
  %513 = vmatmul.f32.gmra.mxu0 %v187
  %v514 = vpop.f32.mrf.mxu0
  %v515 = vadd.f32 0.0, %v514
  %516 = vmatmul.f32.gmra.mxu0 %v191
  %v517 = vpop.f32.mrf.mxu0
  %v518 = vadd.f32 0.0, %v517
  %519 = vmatmul.f32.gmra.mxu0 %v195
  %v520 = vpop.f32.mrf.mxu0
  %v521 = vadd.f32 0.0, %v520
  %522 = vmatmul.f32.gmra.mxu0 %v199
  %v523 = vpop.f32.mrf.mxu0
  %v524 = vadd.f32 0.0, %v523
  %525 = vmatmul.f32.gmra.mxu0 %v203
  %v526 = vpop.f32.mrf.mxu0
  %v527 = vadd.f32 0.0, %v526
  %528 = vmatmul.f32.gmra.mxu0 %v207
  %v529 = vpop.f32.mrf.mxu0
  %v530 = vadd.f32 0.0, %v529
  %531 = vmatmul.f32.gmra.mxu0 %v211
  %v532 = vpop.f32.mrf.mxu0
  %v533 = vadd.f32 0.0, %v532
  %534 = vmatmul.f32.gmra.mxu0 %v215
  %v535 = vpop.f32.mrf.mxu0
  %v536 = vadd.f32 0.0, %v535
  %537 = vmatmul.f32.gmra.mxu0 %v219
  %v538 = vpop.f32.mrf.mxu0
  %v539 = vadd.f32 0.0, %v538
  %540 = vmatmul.f32.gmra.mxu0 %v223
  %v541 = vpop.f32.mrf.mxu0
  %v542 = vadd.f32 0.0, %v541
  %543 = vmatmul.f32.gmra.mxu0 %v227
  %v544 = vpop.f32.mrf.mxu0
  %v545 = vadd.f32 0.0, %v544
  %546 = vmatmul.f32.gmra.mxu0 %v231
  %v547 = vpop.f32.mrf.mxu0
  %v548 = vadd.f32 0.0, %v547
  %549 = vmatmul.f32.gmra.mxu0 %v235
  %v550 = vpop.f32.mrf.mxu0
  %v551 = vadd.f32 0.0, %v550
  %552 = vmatmul.f32.gmra.mxu0 %v239
  %v553 = vpop.f32.mrf.mxu0
  %v554 = vadd.f32 0.0, %v553
  %555 = vmatmul.f32.gmra.mxu0 %v243
  %v556 = vpop.f32.mrf.mxu0
  %v557 = vadd.f32 0.0, %v556
  %558 = vmatmul.f32.gmra.mxu0 %v247
  %v559 = vpop.f32.mrf.mxu0
  %v560 = vadd.f32 0.0, %v559
  %561 = vmatmul.f32.gmra.mxu0 %v251
  %v562 = vpop.f32.mrf.mxu0
  %v563 = vadd.f32 0.0, %v562
  %564 = vmatmul.f32.gmra.mxu0 %v255
  %v565 = vpop.f32.mrf.mxu0
  %v566 = vadd.f32 0.0, %v565
  %567 = vmatmul.f32.gmra.mxu0 %v259
  %v568 = vpop.f32.mrf.mxu0
  %v569 = vadd.f32 0.0, %v568
  %570 = vmatmul.f32.gmra.mxu0 %v263
  %v571 = vpop.f32.mrf.mxu0
  %v572 = vadd.f32 0.0, %v571
  %573 = vmatmul.f32.gmra.mxu0 %v267
  %v574 = vpop.f32.mrf.mxu0
  %v575 = vadd.f32 0.0, %v574
  %576 = vmatmul.f32.gmra.mxu0 %v271
  %v577 = vpop.f32.mrf.mxu0
  %v578 = vadd.f32 0.0, %v577
  %579 = vmatmul.f32.gmra.mxu0 %v275
  %v580 = vpop.f32.mrf.mxu0
  %v581 = vadd.f32 0.0, %v580
  %582 = vmatmul.f32.gmra.mxu0 %v279
  %v583 = vpop.f32.mrf.mxu0
  %v584 = vadd.f32 0.0, %v583
  %585 = vmatmul.f32.gmra.mxu0 %v283
  %v586 = vpop.f32.mrf.mxu0
  %v587 = vadd.f32 0.0, %v586
  %588 = vmatmul.f32.gmra.mxu0 %v287
  %v589 = vpop.f32.mrf.mxu0
  %v590 = vadd.f32 0.0, %v589
  %591 = vmatmul.f32.gmra.mxu0 %v291
  %v592 = vpop.f32.mrf.mxu0
  %v593 = vadd.f32 0.0, %v592
  %594 = vmatmul.f32.gmra.mxu0 %v295
  %v595 = vpop.f32.mrf.mxu0
  %v596 = vadd.f32 0.0, %v595
  %597 = vmatmul.f32.gmra.mxu0 %v299
  %v598 = vpop.f32.mrf.mxu0
  %v599 = vadd.f32 0.0, %v598
  %600 = vmatmul.f32.gmra.mxu0 %v303
  %v601 = vpop.f32.mrf.mxu0
  %v602 = vadd.f32 0.0, %v601
  %603 = vmatmul.f32.gmra.mxu0 %v307
  %v604 = vpop.f32.mrf.mxu0
  %v605 = vadd.f32 0.0, %v604
  %606 = vmatmul.f32.gmra.mxu0 %v311
  %v607 = vpop.f32.mrf.mxu0
  %v608 = vadd.f32 0.0, %v607
  %609 = vmatmul.f32.gmra.mxu0 %v315
  %v610 = vpop.f32.mrf.mxu0
  %v611 = vadd.f32 0.0, %v610
  %612 = vmatmul.f32.gmra.mxu0 %v319
  %v613 = vpop.f32.mrf.mxu0
  %v614 = vadd.f32 0.0, %v613
  %615 = vmatmul.f32.gmra.mxu0 %v323
  %v616 = vpop.f32.mrf.mxu0
  %v617 = vadd.f32 0.0, %v616
  %618 = vmatmul.f32.gmra.mxu0 %v327
  %v619 = vpop.f32.mrf.mxu0
  %v620 = vadd.f32 0.0, %v619
  %621 = vmatmul.f32.gmra.mxu0 %v331
  %v622 = vpop.f32.mrf.mxu0
  %v623 = vadd.f32 0.0, %v622
  %624 = vmatmul.f32.gmra.mxu0 %v335
  %v625 = vpop.f32.mrf.mxu0
  %v626 = vadd.f32 0.0, %v625
  %627 = vmatmul.f32.gmra.mxu0 %v339
  %v628 = vpop.f32.mrf.mxu0
  %v629 = vadd.f32 0.0, %v628
  %630 = vmatmul.f32.gmra.mxu0 %v343
  %v631 = vpop.f32.mrf.mxu0
  %v632 = vadd.f32 0.0, %v631
  %633 = vmatmul.f32.gmra.mxu0 %v347
  %v634 = vpop.f32.mrf.mxu0
  %v635 = vadd.f32 0.0, %v634
  %636 = vmatmul.f32.gmra.mxu0 %v351
  %v637 = vpop.f32.mrf.mxu0
  %v638 = vadd.f32 0.0, %v637
  %639 = vmatmul.f32.gmra.mxu0 %v355
  %v640 = vpop.f32.mrf.mxu0
  %v641 = vadd.f32 0.0, %v640
  %642 = vmatmul.f32.gmra.mxu0 %v359
  %v643 = vpop.f32.mrf.mxu0
  %v644 = vadd.f32 0.0, %v643
  %645 = vmatmul.f32.gmra.mxu0 %v363
  %v646 = vpop.f32.mrf.mxu0
  %v647 = vadd.f32 0.0, %v646
  %648 = vmatmul.f32.gmra.mxu0 %v367
  %v649 = vpop.f32.mrf.mxu0
  %v650 = vadd.f32 0.0, %v649
  %651 = vmatmul.f32.gmra.mxu0 %v371
  %v652 = vpop.f32.mrf.mxu0
  %v653 = vadd.f32 0.0, %v652
  %654 = vmatmul.f32.gmra.mxu0 %v375
  %v655 = vpop.f32.mrf.mxu0
  %v656 = vadd.f32 0.0, %v655
  %657 = vmatmul.f32.gmra.mxu0 %v379
  %v658 = vpop.f32.mrf.mxu0
  %v659 = vadd.f32 0.0, %v658
  %660 = vmatmul.f32.gmra.mxu0 %v383
  %v661 = vpop.f32.mrf.mxu0
  %v662 = vadd.f32 0.0, %v661
  %663 = vmatmul.f32.gmra.mxu0 %v387
  %v664 = vpop.f32.mrf.mxu0
  %v665 = vadd.f32 0.0, %v664
  %666 = vmatmul.f32.gmra.mxu0 %v391
  %v667 = vpop.f32.mrf.mxu0
  %v668 = vadd.f32 0.0, %v667
  %669 = vmatmul.f32.gmra.mxu0 %v395
  %v670 = vpop.f32.mrf.mxu0
  %v671 = vadd.f32 0.0, %v670
  %672 = vmatmul.f32.gmra.mxu0 %v399
  %v673 = vpop.f32.mrf.mxu0
  %v674 = vadd.f32 0.0, %v673
  %675 = vdwg.mxu0
  %676 = vmatpush.msra.mxu0 %v434
  %677 = vmatpush.msra.mxu0 %v433
  %678 = vmatpush.msra.mxu0 %v432
  %679 = vmatpush.msra.mxu0 %v431
  %680 = vmatpush.msra.mxu0 %v430
  %681 = vmatpush.msra.mxu0 %v429
  %682 = vmatpush.msra.mxu0 %v428
  %683 = vmatpush.msra.mxu0 %v427
  %684 = vmatpush.msra.mxu0 %v426
  %685 = vmatpush.msra.mxu0 %v425
  %686 = vmatpush.msra.mxu0 %v424
  %687 = vmatpush.msra.mxu0 %v423
  %688 = vmatpush.msra.mxu0 %v422
  %689 = vmatpush.msra.mxu0 %v421
  %690 = vmatpush.msra.mxu0 %v420
  %691 = vmatpush.msra.mxu0 %v419
  %692 = vmatmul.f32.gmra.mxu0 %v148
  %v693 = vpop.f32.mrf.mxu0
  %v694 = vadd.f32 %v485, %v693
  %695 = vmatmul.f32.gmra.mxu0 %v152
  %v696 = vpop.f32.mrf.mxu0
  %v697 = vadd.f32 %v488, %v696
  %698 = vmatmul.f32.gmra.mxu0 %v156
  %v699 = vpop.f32.mrf.mxu0
  %v700 = vadd.f32 %v491, %v699
  %701 = vmatmul.f32.gmra.mxu0 %v160
  %v702 = vpop.f32.mrf.mxu0
  %v703 = vadd.f32 %v494, %v702
  %704 = vmatmul.f32.gmra.mxu0 %v164
  %v705 = vpop.f32.mrf.mxu0
  %v706 = vadd.f32 %v497, %v705
  %707 = vmatmul.f32.gmra.mxu0 %v168
  %v708 = vpop.f32.mrf.mxu0
  %v709 = vadd.f32 %v500, %v708
  %710 = vmatmul.f32.gmra.mxu0 %v172
  %v711 = vpop.f32.mrf.mxu0
  %v712 = vadd.f32 %v503, %v711
  %713 = vmatmul.f32.gmra.mxu0 %v176
  %v714 = vpop.f32.mrf.mxu0
  %v715 = vadd.f32 %v506, %v714
  %716 = vmatmul.f32.gmra.mxu0 %v180
  %v717 = vpop.f32.mrf.mxu0
  %v718 = vadd.f32 %v509, %v717
  %719 = vmatmul.f32.gmra.mxu0 %v184
  %v720 = vpop.f32.mrf.mxu0
  %v721 = vadd.f32 %v512, %v720
  %722 = vmatmul.f32.gmra.mxu0 %v188
  %v723 = vpop.f32.mrf.mxu0
  %v724 = vadd.f32 %v515, %v723
  %725 = vmatmul.f32.gmra.mxu0 %v192
  %v726 = vpop.f32.mrf.mxu0
  %v727 = vadd.f32 %v518, %v726
  %728 = vmatmul.f32.gmra.mxu0 %v196
  %v729 = vpop.f32.mrf.mxu0
  %v730 = vadd.f32 %v521, %v729
  %731 = vmatmul.f32.gmra.mxu0 %v200
  %v732 = vpop.f32.mrf.mxu0
  %v733 = vadd.f32 %v524, %v732
  %734 = vmatmul.f32.gmra.mxu0 %v204
  %v735 = vpop.f32.mrf.mxu0
  %v736 = vadd.f32 %v527, %v735
  %737 = vmatmul.f32.gmra.mxu0 %v208
  %v738 = vpop.f32.mrf.mxu0
  %v739 = vadd.f32 %v530, %v738
  %740 = vmatmul.f32.gmra.mxu0 %v212
  %v741 = vpop.f32.mrf.mxu0
  %v742 = vadd.f32 %v533, %v741
  %743 = vmatmul.f32.gmra.mxu0 %v216
  %v744 = vpop.f32.mrf.mxu0
  %v745 = vadd.f32 %v536, %v744
  %746 = vmatmul.f32.gmra.mxu0 %v220
  %v747 = vpop.f32.mrf.mxu0
  %v748 = vadd.f32 %v539, %v747
  %749 = vmatmul.f32.gmra.mxu0 %v224
  %v750 = vpop.f32.mrf.mxu0
  %v751 = vadd.f32 %v542, %v750
  %752 = vmatmul.f32.gmra.mxu0 %v228
  %v753 = vpop.f32.mrf.mxu0
  %v754 = vadd.f32 %v545, %v753
  %755 = vmatmul.f32.gmra.mxu0 %v232
  %v756 = vpop.f32.mrf.mxu0
  %v757 = vadd.f32 %v548, %v756
  %758 = vmatmul.f32.gmra.mxu0 %v236
  %v759 = vpop.f32.mrf.mxu0
  %v760 = vadd.f32 %v551, %v759
  %761 = vmatmul.f32.gmra.mxu0 %v240
  %v762 = vpop.f32.mrf.mxu0
  %v763 = vadd.f32 %v554, %v762
  %764 = vmatmul.f32.gmra.mxu0 %v244
  %v765 = vpop.f32.mrf.mxu0
  %v766 = vadd.f32 %v557, %v765
  %767 = vmatmul.f32.gmra.mxu0 %v248
  %v768 = vpop.f32.mrf.mxu0
  %v769 = vadd.f32 %v560, %v768
  %770 = vmatmul.f32.gmra.mxu0 %v252
  %v771 = vpop.f32.mrf.mxu0
  %v772 = vadd.f32 %v563, %v771
  %773 = vmatmul.f32.gmra.mxu0 %v256
  %v774 = vpop.f32.mrf.mxu0
  %v775 = vadd.f32 %v566, %v774
  %776 = vmatmul.f32.gmra.mxu0 %v260
  %v777 = vpop.f32.mrf.mxu0
  %v778 = vadd.f32 %v569, %v777
  %779 = vmatmul.f32.gmra.mxu0 %v264
  %v780 = vpop.f32.mrf.mxu0
  %v781 = vadd.f32 %v572, %v780
  %782 = vmatmul.f32.gmra.mxu0 %v268
  %v783 = vpop.f32.mrf.mxu0
  %v784 = vadd.f32 %v575, %v783
  %785 = vmatmul.f32.gmra.mxu0 %v272
  %v786 = vpop.f32.mrf.mxu0
  %v787 = vadd.f32 %v578, %v786
  %788 = vmatmul.f32.gmra.mxu0 %v276
  %v789 = vpop.f32.mrf.mxu0
  %v790 = vadd.f32 %v581, %v789
  %791 = vmatmul.f32.gmra.mxu0 %v280
  %v792 = vpop.f32.mrf.mxu0
  %v793 = vadd.f32 %v584, %v792
  %794 = vmatmul.f32.gmra.mxu0 %v284
  %v795 = vpop.f32.mrf.mxu0
  %v796 = vadd.f32 %v587, %v795
  %797 = vmatmul.f32.gmra.mxu0 %v288
  %v798 = vpop.f32.mrf.mxu0
  %v799 = vadd.f32 %v590, %v798
  %800 = vmatmul.f32.gmra.mxu0 %v292
  %v801 = vpop.f32.mrf.mxu0
  %v802 = vadd.f32 %v593, %v801
  %803 = vmatmul.f32.gmra.mxu0 %v296
  %v804 = vpop.f32.mrf.mxu0
  %v805 = vadd.f32 %v596, %v804
  %806 = vmatmul.f32.gmra.mxu0 %v300
  %v807 = vpop.f32.mrf.mxu0
  %v808 = vadd.f32 %v599, %v807
  %809 = vmatmul.f32.gmra.mxu0 %v304
  %v810 = vpop.f32.mrf.mxu0
  %v811 = vadd.f32 %v602, %v810
  %812 = vmatmul.f32.gmra.mxu0 %v308
  %v813 = vpop.f32.mrf.mxu0
  %v814 = vadd.f32 %v605, %v813
  %815 = vmatmul.f32.gmra.mxu0 %v312
  %v816 = vpop.f32.mrf.mxu0
  %v817 = vadd.f32 %v608, %v816
  %818 = vmatmul.f32.gmra.mxu0 %v316
  %v819 = vpop.f32.mrf.mxu0
  %v820 = vadd.f32 %v611, %v819
  %821 = vmatmul.f32.gmra.mxu0 %v320
  %v822 = vpop.f32.mrf.mxu0
  %v823 = vadd.f32 %v614, %v822
  %824 = vmatmul.f32.gmra.mxu0 %v324
  %v825 = vpop.f32.mrf.mxu0
  %v826 = vadd.f32 %v617, %v825
  %827 = vmatmul.f32.gmra.mxu0 %v328
  %v828 = vpop.f32.mrf.mxu0
  %v829 = vadd.f32 %v620, %v828
  %830 = vmatmul.f32.gmra.mxu0 %v332
  %v831 = vpop.f32.mrf.mxu0
  %v832 = vadd.f32 %v623, %v831
  %833 = vmatmul.f32.gmra.mxu0 %v336
  %v834 = vpop.f32.mrf.mxu0
  %v835 = vadd.f32 %v626, %v834
  %836 = vmatmul.f32.gmra.mxu0 %v340
  %v837 = vpop.f32.mrf.mxu0
  %v838 = vadd.f32 %v629, %v837
  %839 = vmatmul.f32.gmra.mxu0 %v344
  %v840 = vpop.f32.mrf.mxu0
  %v841 = vadd.f32 %v632, %v840
  %842 = vmatmul.f32.gmra.mxu0 %v348
  %v843 = vpop.f32.mrf.mxu0
  %v844 = vadd.f32 %v635, %v843
  %845 = vmatmul.f32.gmra.mxu0 %v352
  %v846 = vpop.f32.mrf.mxu0
  %v847 = vadd.f32 %v638, %v846
  %848 = vmatmul.f32.gmra.mxu0 %v356
  %v849 = vpop.f32.mrf.mxu0
  %v850 = vadd.f32 %v641, %v849
  %851 = vmatmul.f32.gmra.mxu0 %v360
  %v852 = vpop.f32.mrf.mxu0
  %v853 = vadd.f32 %v644, %v852
  %854 = vmatmul.f32.gmra.mxu0 %v364
  %v855 = vpop.f32.mrf.mxu0
  %v856 = vadd.f32 %v647, %v855
  %857 = vmatmul.f32.gmra.mxu0 %v368
  %v858 = vpop.f32.mrf.mxu0
  %v859 = vadd.f32 %v650, %v858
  %860 = vmatmul.f32.gmra.mxu0 %v372
  %v861 = vpop.f32.mrf.mxu0
  %v862 = vadd.f32 %v653, %v861
  %863 = vmatmul.f32.gmra.mxu0 %v376
  %v864 = vpop.f32.mrf.mxu0
  %v865 = vadd.f32 %v656, %v864
  %866 = vmatmul.f32.gmra.mxu0 %v380
  %v867 = vpop.f32.mrf.mxu0
  %v868 = vadd.f32 %v659, %v867
  %869 = vmatmul.f32.gmra.mxu0 %v384
  %v870 = vpop.f32.mrf.mxu0
  %v871 = vadd.f32 %v662, %v870
  %872 = vmatmul.f32.gmra.mxu0 %v388
  %v873 = vpop.f32.mrf.mxu0
  %v874 = vadd.f32 %v665, %v873
  %875 = vmatmul.f32.gmra.mxu0 %v392
  %v876 = vpop.f32.mrf.mxu0
  %v877 = vadd.f32 %v668, %v876
  %878 = vmatmul.f32.gmra.mxu0 %v396
  %v879 = vpop.f32.mrf.mxu0
  %v880 = vadd.f32 %v671, %v879
  %881 = vmatmul.f32.gmra.mxu0 %v400
  %v882 = vpop.f32.mrf.mxu0
  %v883 = vadd.f32 %v674, %v882
  %884 = vdwg.mxu0
  %885 = vmatpush.msra.mxu0 %v450
  %886 = vmatpush.msra.mxu0 %v449
  %887 = vmatpush.msra.mxu0 %v448
  %888 = vmatpush.msra.mxu0 %v447
  %889 = vmatpush.msra.mxu0 %v446
  %890 = vmatpush.msra.mxu0 %v445
  %891 = vmatpush.msra.mxu0 %v444
  %892 = vmatpush.msra.mxu0 %v443
  %893 = vmatpush.msra.mxu0 %v442
  %894 = vmatpush.msra.mxu0 %v441
  %895 = vmatpush.msra.mxu0 %v440
  %896 = vmatpush.msra.mxu0 %v439
  %897 = vmatpush.msra.mxu0 %v438
  %898 = vmatpush.msra.mxu0 %v437
  %899 = vmatpush.msra.mxu0 %v436
  %900 = vmatpush.msra.mxu0 %v435
  %901 = vmatmul.f32.gmra.mxu0 %v149
  %v902 = vpop.f32.mrf.mxu0
  %v903 = vadd.f32 %v694, %v902
  %904 = vmatmul.f32.gmra.mxu0 %v153
  %v905 = vpop.f32.mrf.mxu0
  %v906 = vadd.f32 %v697, %v905
  %907 = vmatmul.f32.gmra.mxu0 %v157
  %v908 = vpop.f32.mrf.mxu0
  %v909 = vadd.f32 %v700, %v908
  %910 = vmatmul.f32.gmra.mxu0 %v161
  %v911 = vpop.f32.mrf.mxu0
  %v912 = vadd.f32 %v703, %v911
  %913 = vmatmul.f32.gmra.mxu0 %v165
  %v914 = vpop.f32.mrf.mxu0
  %v915 = vadd.f32 %v706, %v914
  %916 = vmatmul.f32.gmra.mxu0 %v169
  %v917 = vpop.f32.mrf.mxu0
  %v918 = vadd.f32 %v709, %v917
  %919 = vmatmul.f32.gmra.mxu0 %v173
  %v920 = vpop.f32.mrf.mxu0
  %v921 = vadd.f32 %v712, %v920
  %922 = vmatmul.f32.gmra.mxu0 %v177
  %v923 = vpop.f32.mrf.mxu0
  %v924 = vadd.f32 %v715, %v923
  %925 = vmatmul.f32.gmra.mxu0 %v181
  %v926 = vpop.f32.mrf.mxu0
  %v927 = vadd.f32 %v718, %v926
  %928 = vmatmul.f32.gmra.mxu0 %v185
  %v929 = vpop.f32.mrf.mxu0
  %v930 = vadd.f32 %v721, %v929
  %931 = vmatmul.f32.gmra.mxu0 %v189
  %v932 = vpop.f32.mrf.mxu0
  %v933 = vadd.f32 %v724, %v932
  %934 = vmatmul.f32.gmra.mxu0 %v193
  %v935 = vpop.f32.mrf.mxu0
  %v936 = vadd.f32 %v727, %v935
  %937 = vmatmul.f32.gmra.mxu0 %v197
  %v938 = vpop.f32.mrf.mxu0
  %v939 = vadd.f32 %v730, %v938
  %940 = vmatmul.f32.gmra.mxu0 %v201
  %v941 = vpop.f32.mrf.mxu0
  %v942 = vadd.f32 %v733, %v941
  %943 = vmatmul.f32.gmra.mxu0 %v205
  %v944 = vpop.f32.mrf.mxu0
  %v945 = vadd.f32 %v736, %v944
  %946 = vmatmul.f32.gmra.mxu0 %v209
  %v947 = vpop.f32.mrf.mxu0
  %v948 = vadd.f32 %v739, %v947
  %949 = vmatmul.f32.gmra.mxu0 %v213
  %v950 = vpop.f32.mrf.mxu0
  %v951 = vadd.f32 %v742, %v950
  %952 = vmatmul.f32.gmra.mxu0 %v217
  %v953 = vpop.f32.mrf.mxu0
  %v954 = vadd.f32 %v745, %v953
  %955 = vmatmul.f32.gmra.mxu0 %v221
  %v956 = vpop.f32.mrf.mxu0
  %v957 = vadd.f32 %v748, %v956
  %958 = vmatmul.f32.gmra.mxu0 %v225
  %v959 = vpop.f32.mrf.mxu0
  %v960 = vadd.f32 %v751, %v959
  %961 = vmatmul.f32.gmra.mxu0 %v229
  %v962 = vpop.f32.mrf.mxu0
  %v963 = vadd.f32 %v754, %v962
  %964 = vmatmul.f32.gmra.mxu0 %v233
  %v965 = vpop.f32.mrf.mxu0
  %v966 = vadd.f32 %v757, %v965
  %967 = vmatmul.f32.gmra.mxu0 %v237
  %v968 = vpop.f32.mrf.mxu0
  %v969 = vadd.f32 %v760, %v968
  %970 = vmatmul.f32.gmra.mxu0 %v241
  %v971 = vpop.f32.mrf.mxu0
  %v972 = vadd.f32 %v763, %v971
  %973 = vmatmul.f32.gmra.mxu0 %v245
  %v974 = vpop.f32.mrf.mxu0
  %v975 = vadd.f32 %v766, %v974
  %976 = vmatmul.f32.gmra.mxu0 %v249
  %v977 = vpop.f32.mrf.mxu0
  %v978 = vadd.f32 %v769, %v977
  %979 = vmatmul.f32.gmra.mxu0 %v253
  %v980 = vpop.f32.mrf.mxu0
  %v981 = vadd.f32 %v772, %v980
  %982 = vmatmul.f32.gmra.mxu0 %v257
  %v983 = vpop.f32.mrf.mxu0
  %v984 = vadd.f32 %v775, %v983
  %985 = vmatmul.f32.gmra.mxu0 %v261
  %v986 = vpop.f32.mrf.mxu0
  %v987 = vadd.f32 %v778, %v986
  %988 = vmatmul.f32.gmra.mxu0 %v265
  %v989 = vpop.f32.mrf.mxu0
  %v990 = vadd.f32 %v781, %v989
  %991 = vmatmul.f32.gmra.mxu0 %v269
  %v992 = vpop.f32.mrf.mxu0
  %v993 = vadd.f32 %v784, %v992
  %994 = vmatmul.f32.gmra.mxu0 %v273
  %v995 = vpop.f32.mrf.mxu0
  %v996 = vadd.f32 %v787, %v995
  %997 = vmatmul.f32.gmra.mxu0 %v277
  %v998 = vpop.f32.mrf.mxu0
  %v999 = vadd.f32 %v790, %v998
  %1000 = vmatmul.f32.gmra.mxu0 %v281
  %v1001 = vpop.f32.mrf.mxu0
  %v1002 = vadd.f32 %v793, %v1001
  %1003 = vmatmul.f32.gmra.mxu0 %v285
  %v1004 = vpop.f32.mrf.mxu0
  %v1005 = vadd.f32 %v796, %v1004
  %1006 = vmatmul.f32.gmra.mxu0 %v289
  %v1007 = vpop.f32.mrf.mxu0
  %v1008 = vadd.f32 %v799, %v1007
  %1009 = vmatmul.f32.gmra.mxu0 %v293
  %v1010 = vpop.f32.mrf.mxu0
  %v1011 = vadd.f32 %v802, %v1010
  %1012 = vmatmul.f32.gmra.mxu0 %v297
  %v1013 = vpop.f32.mrf.mxu0
  %v1014 = vadd.f32 %v805, %v1013
  %1015 = vmatmul.f32.gmra.mxu0 %v301
  %v1016 = vpop.f32.mrf.mxu0
  %v1017 = vadd.f32 %v808, %v1016
  %1018 = vmatmul.f32.gmra.mxu0 %v305
  %v1019 = vpop.f32.mrf.mxu0
  %v1020 = vadd.f32 %v811, %v1019
  %1021 = vmatmul.f32.gmra.mxu0 %v309
  %v1022 = vpop.f32.mrf.mxu0
  %v1023 = vadd.f32 %v814, %v1022
  %1024 = vmatmul.f32.gmra.mxu0 %v313
  %v1025 = vpop.f32.mrf.mxu0
  %v1026 = vadd.f32 %v817, %v1025
  %1027 = vmatmul.f32.gmra.mxu0 %v317
  %v1028 = vpop.f32.mrf.mxu0
  %v1029 = vadd.f32 %v820, %v1028
  %1030 = vmatmul.f32.gmra.mxu0 %v321
  %v1031 = vpop.f32.mrf.mxu0
  %v1032 = vadd.f32 %v823, %v1031
  %1033 = vmatmul.f32.gmra.mxu0 %v325
  %v1034 = vpop.f32.mrf.mxu0
  %v1035 = vadd.f32 %v826, %v1034
  %1036 = vmatmul.f32.gmra.mxu0 %v329
  %v1037 = vpop.f32.mrf.mxu0
  %v1038 = vadd.f32 %v829, %v1037
  %1039 = vmatmul.f32.gmra.mxu0 %v333
  %v1040 = vpop.f32.mrf.mxu0
  %v1041 = vadd.f32 %v832, %v1040
  %1042 = vmatmul.f32.gmra.mxu0 %v337
  %v1043 = vpop.f32.mrf.mxu0
  %v1044 = vadd.f32 %v835, %v1043
  %1045 = vmatmul.f32.gmra.mxu0 %v341
  %v1046 = vpop.f32.mrf.mxu0
  %v1047 = vadd.f32 %v838, %v1046
  %1048 = vmatmul.f32.gmra.mxu0 %v345
  %v1049 = vpop.f32.mrf.mxu0
  %v1050 = vadd.f32 %v841, %v1049
  %1051 = vmatmul.f32.gmra.mxu0 %v349
  %v1052 = vpop.f32.mrf.mxu0
  %v1053 = vadd.f32 %v844, %v1052
  %1054 = vmatmul.f32.gmra.mxu0 %v353
  %v1055 = vpop.f32.mrf.mxu0
  %v1056 = vadd.f32 %v847, %v1055
  %1057 = vmatmul.f32.gmra.mxu0 %v357
  %v1058 = vpop.f32.mrf.mxu0
  %v1059 = vadd.f32 %v850, %v1058
  %1060 = vmatmul.f32.gmra.mxu0 %v361
  %v1061 = vpop.f32.mrf.mxu0
  %v1062 = vadd.f32 %v853, %v1061
  %1063 = vmatmul.f32.gmra.mxu0 %v365
  %v1064 = vpop.f32.mrf.mxu0
  %v1065 = vadd.f32 %v856, %v1064
  %1066 = vmatmul.f32.gmra.mxu0 %v369
  %v1067 = vpop.f32.mrf.mxu0
  %v1068 = vadd.f32 %v859, %v1067
  %1069 = vmatmul.f32.gmra.mxu0 %v373
  %v1070 = vpop.f32.mrf.mxu0
  %v1071 = vadd.f32 %v862, %v1070
  %1072 = vmatmul.f32.gmra.mxu0 %v377
  %v1073 = vpop.f32.mrf.mxu0
  %v1074 = vadd.f32 %v865, %v1073
  %1075 = vmatmul.f32.gmra.mxu0 %v381
  %v1076 = vpop.f32.mrf.mxu0
  %v1077 = vadd.f32 %v868, %v1076
  %1078 = vmatmul.f32.gmra.mxu0 %v385
  %v1079 = vpop.f32.mrf.mxu0
  %v1080 = vadd.f32 %v871, %v1079
  %1081 = vmatmul.f32.gmra.mxu0 %v389
  %v1082 = vpop.f32.mrf.mxu0
  %v1083 = vadd.f32 %v874, %v1082
  %1084 = vmatmul.f32.gmra.mxu0 %v393
  %v1085 = vpop.f32.mrf.mxu0
  %v1086 = vadd.f32 %v877, %v1085
  %1087 = vmatmul.f32.gmra.mxu0 %v397
  %v1088 = vpop.f32.mrf.mxu0
  %v1089 = vadd.f32 %v880, %v1088
  %1090 = vmatmul.f32.gmra.mxu0 %v401
  %v1091 = vpop.f32.mrf.mxu0
  %v1092 = vadd.f32 %v883, %v1091
  %1093 = vdwg.mxu0
  %1094 = vmatpush.msra.mxu0 %v466
  %1095 = vmatpush.msra.mxu0 %v465
  %1096 = vmatpush.msra.mxu0 %v464
  %1097 = vmatpush.msra.mxu0 %v463
  %1098 = vmatpush.msra.mxu0 %v462
  %1099 = vmatpush.msra.mxu0 %v461
  %1100 = vmatpush.msra.mxu0 %v460
  %1101 = vmatpush.msra.mxu0 %v459
  %1102 = vmatpush.msra.mxu0 %v458
  %1103 = vmatpush.msra.mxu0 %v457
  %1104 = vmatpush.msra.mxu0 %v456
  %1105 = vmatpush.msra.mxu0 %v455
  %1106 = vmatpush.msra.mxu0 %v454
  %1107 = vmatpush.msra.mxu0 %v453
  %1108 = vmatpush.msra.mxu0 %v452
  %1109 = vmatpush.msra.mxu0 %v451
  %1110 = vmatmul.f32.gmra.mxu0 %v150
  %v1111 = vpop.f32.mrf.mxu0
  %v1112 = vadd.f32 %v903, %v1111
  %1113 = vmatmul.f32.gmra.mxu0 %v154
  %v1114 = vpop.f32.mrf.mxu0
  %v1115 = vadd.f32 %v906, %v1114
  %1116 = vmatmul.f32.gmra.mxu0 %v158
  %v1117 = vpop.f32.mrf.mxu0
  %v1118 = vadd.f32 %v909, %v1117
  %1119 = vmatmul.f32.gmra.mxu0 %v162
  %v1120 = vpop.f32.mrf.mxu0
  %v1121 = vadd.f32 %v912, %v1120
  %1122 = vmatmul.f32.gmra.mxu0 %v166
  %v1123 = vpop.f32.mrf.mxu0
  %v1124 = vadd.f32 %v915, %v1123
  %1125 = vmatmul.f32.gmra.mxu0 %v170
  %v1126 = vpop.f32.mrf.mxu0
  %v1127 = vadd.f32 %v918, %v1126
  %1128 = vmatmul.f32.gmra.mxu0 %v174
  %v1129 = vpop.f32.mrf.mxu0
  %v1130 = vadd.f32 %v921, %v1129
  %1131 = vmatmul.f32.gmra.mxu0 %v178
  %v1132 = vpop.f32.mrf.mxu0
  %v1133 = vadd.f32 %v924, %v1132
  %1134 = vmatmul.f32.gmra.mxu0 %v182
  %v1135 = vpop.f32.mrf.mxu0
  %v1136 = vadd.f32 %v927, %v1135
  %1137 = vmatmul.f32.gmra.mxu0 %v186
  %v1138 = vpop.f32.mrf.mxu0
  %v1139 = vadd.f32 %v930, %v1138
  %1140 = vmatmul.f32.gmra.mxu0 %v190
  %v1141 = vpop.f32.mrf.mxu0
  %v1142 = vadd.f32 %v933, %v1141
  %1143 = vmatmul.f32.gmra.mxu0 %v194
  %v1144 = vpop.f32.mrf.mxu0
  %v1145 = vadd.f32 %v936, %v1144
  %1146 = vmatmul.f32.gmra.mxu0 %v198
  %v1147 = vpop.f32.mrf.mxu0
  %v1148 = vadd.f32 %v939, %v1147
  %1149 = vmatmul.f32.gmra.mxu0 %v202
  %v1150 = vpop.f32.mrf.mxu0
  %v1151 = vadd.f32 %v942, %v1150
  %1152 = vmatmul.f32.gmra.mxu0 %v206
  %v1153 = vpop.f32.mrf.mxu0
  %v1154 = vadd.f32 %v945, %v1153
  %1155 = vmatmul.f32.gmra.mxu0 %v210
  %v1156 = vpop.f32.mrf.mxu0
  %v1157 = vadd.f32 %v948, %v1156
  %1158 = vmatmul.f32.gmra.mxu0 %v214
  %v1159 = vpop.f32.mrf.mxu0
  %v1160 = vadd.f32 %v951, %v1159
  %1161 = vmatmul.f32.gmra.mxu0 %v218
  %v1162 = vpop.f32.mrf.mxu0
  %v1163 = vadd.f32 %v954, %v1162
  %1164 = vmatmul.f32.gmra.mxu0 %v222
  %v1165 = vpop.f32.mrf.mxu0
  %v1166 = vadd.f32 %v957, %v1165
  %1167 = vmatmul.f32.gmra.mxu0 %v226
  %v1168 = vpop.f32.mrf.mxu0
  %v1169 = vadd.f32 %v960, %v1168
  %1170 = vmatmul.f32.gmra.mxu0 %v230
  %v1171 = vpop.f32.mrf.mxu0
  %v1172 = vadd.f32 %v963, %v1171
  %1173 = vmatmul.f32.gmra.mxu0 %v234
  %v1174 = vpop.f32.mrf.mxu0
  %v1175 = vadd.f32 %v966, %v1174
  %1176 = vmatmul.f32.gmra.mxu0 %v238
  %v1177 = vpop.f32.mrf.mxu0
  %v1178 = vadd.f32 %v969, %v1177
  %1179 = vmatmul.f32.gmra.mxu0 %v242
  %v1180 = vpop.f32.mrf.mxu0
  %v1181 = vadd.f32 %v972, %v1180
  %1182 = vmatmul.f32.gmra.mxu0 %v246
  %v1183 = vpop.f32.mrf.mxu0
  %v1184 = vadd.f32 %v975, %v1183
  %1185 = vmatmul.f32.gmra.mxu0 %v250
  %v1186 = vpop.f32.mrf.mxu0
  %v1187 = vadd.f32 %v978, %v1186
  %1188 = vmatmul.f32.gmra.mxu0 %v254
  %v1189 = vpop.f32.mrf.mxu0
  %v1190 = vadd.f32 %v981, %v1189
  %1191 = vmatmul.f32.gmra.mxu0 %v258
  %v1192 = vpop.f32.mrf.mxu0
  %v1193 = vadd.f32 %v984, %v1192
  %1194 = vmatmul.f32.gmra.mxu0 %v262
  %v1195 = vpop.f32.mrf.mxu0
  %v1196 = vadd.f32 %v987, %v1195
  %1197 = vmatmul.f32.gmra.mxu0 %v266
  %v1198 = vpop.f32.mrf.mxu0
  %v1199 = vadd.f32 %v990, %v1198
  %1200 = vmatmul.f32.gmra.mxu0 %v270
  %v1201 = vpop.f32.mrf.mxu0
  %v1202 = vadd.f32 %v993, %v1201
  %1203 = vmatmul.f32.gmra.mxu0 %v274
  %v1204 = vpop.f32.mrf.mxu0
  %v1205 = vadd.f32 %v996, %v1204
  %1206 = vmatmul.f32.gmra.mxu0 %v278
  %v1207 = vpop.f32.mrf.mxu0
  %v1208 = vadd.f32 %v999, %v1207
  %1209 = vmatmul.f32.gmra.mxu0 %v282
  %v1210 = vpop.f32.mrf.mxu0
  %v1211 = vadd.f32 %v1002, %v1210
  %1212 = vmatmul.f32.gmra.mxu0 %v286
  %v1213 = vpop.f32.mrf.mxu0
  %v1214 = vadd.f32 %v1005, %v1213
  %1215 = vmatmul.f32.gmra.mxu0 %v290
  %v1216 = vpop.f32.mrf.mxu0
  %v1217 = vadd.f32 %v1008, %v1216
  %1218 = vmatmul.f32.gmra.mxu0 %v294
  %v1219 = vpop.f32.mrf.mxu0
  %v1220 = vadd.f32 %v1011, %v1219
  %1221 = vmatmul.f32.gmra.mxu0 %v298
  %v1222 = vpop.f32.mrf.mxu0
  %v1223 = vadd.f32 %v1014, %v1222
  %1224 = vmatmul.f32.gmra.mxu0 %v302
  %v1225 = vpop.f32.mrf.mxu0
  %v1226 = vadd.f32 %v1017, %v1225
  %1227 = vmatmul.f32.gmra.mxu0 %v306
  %v1228 = vpop.f32.mrf.mxu0
  %v1229 = vadd.f32 %v1020, %v1228
  %1230 = vmatmul.f32.gmra.mxu0 %v310
  %v1231 = vpop.f32.mrf.mxu0
  %v1232 = vadd.f32 %v1023, %v1231
  %1233 = vmatmul.f32.gmra.mxu0 %v314
  %v1234 = vpop.f32.mrf.mxu0
  %v1235 = vadd.f32 %v1026, %v1234
  %1236 = vmatmul.f32.gmra.mxu0 %v318
  %v1237 = vpop.f32.mrf.mxu0
  %v1238 = vadd.f32 %v1029, %v1237
  %1239 = vmatmul.f32.gmra.mxu0 %v322
  %v1240 = vpop.f32.mrf.mxu0
  %v1241 = vadd.f32 %v1032, %v1240
  %1242 = vmatmul.f32.gmra.mxu0 %v326
  %v1243 = vpop.f32.mrf.mxu0
  %v1244 = vadd.f32 %v1035, %v1243
  %1245 = vmatmul.f32.gmra.mxu0 %v330
  %v1246 = vpop.f32.mrf.mxu0
  %v1247 = vadd.f32 %v1038, %v1246
  %1248 = vmatmul.f32.gmra.mxu0 %v334
  %v1249 = vpop.f32.mrf.mxu0
  %v1250 = vadd.f32 %v1041, %v1249
  %1251 = vmatmul.f32.gmra.mxu0 %v338
  %v1252 = vpop.f32.mrf.mxu0
  %v1253 = vadd.f32 %v1044, %v1252
  %1254 = vmatmul.f32.gmra.mxu0 %v342
  %v1255 = vpop.f32.mrf.mxu0
  %v1256 = vadd.f32 %v1047, %v1255
  %1257 = vmatmul.f32.gmra.mxu0 %v346
  %v1258 = vpop.f32.mrf.mxu0
  %v1259 = vadd.f32 %v1050, %v1258
  %1260 = vmatmul.f32.gmra.mxu0 %v350
  %v1261 = vpop.f32.mrf.mxu0
  %v1262 = vadd.f32 %v1053, %v1261
  %1263 = vmatmul.f32.gmra.mxu0 %v354
  %v1264 = vpop.f32.mrf.mxu0
  %v1265 = vadd.f32 %v1056, %v1264
  %1266 = vmatmul.f32.gmra.mxu0 %v358
  %v1267 = vpop.f32.mrf.mxu0
  %v1268 = vadd.f32 %v1059, %v1267
  %1269 = vmatmul.f32.gmra.mxu0 %v362
  %v1270 = vpop.f32.mrf.mxu0
  %v1271 = vadd.f32 %v1062, %v1270
  %1272 = vmatmul.f32.gmra.mxu0 %v366
  %v1273 = vpop.f32.mrf.mxu0
  %v1274 = vadd.f32 %v1065, %v1273
  %1275 = vmatmul.f32.gmra.mxu0 %v370
  %v1276 = vpop.f32.mrf.mxu0
  %v1277 = vadd.f32 %v1068, %v1276
  %1278 = vmatmul.f32.gmra.mxu0 %v374
  %v1279 = vpop.f32.mrf.mxu0
  %v1280 = vadd.f32 %v1071, %v1279
  %1281 = vmatmul.f32.gmra.mxu0 %v378
  %v1282 = vpop.f32.mrf.mxu0
  %v1283 = vadd.f32 %v1074, %v1282
  %1284 = vmatmul.f32.gmra.mxu0 %v382
  %v1285 = vpop.f32.mrf.mxu0
  %v1286 = vadd.f32 %v1077, %v1285
  %1287 = vmatmul.f32.gmra.mxu0 %v386
  %v1288 = vpop.f32.mrf.mxu0
  %v1289 = vadd.f32 %v1080, %v1288
  %1290 = vmatmul.f32.gmra.mxu0 %v390
  %v1291 = vpop.f32.mrf.mxu0
  %v1292 = vadd.f32 %v1083, %v1291
  %1293 = vmatmul.f32.gmra.mxu0 %v394
  %v1294 = vpop.f32.mrf.mxu0
  %v1295 = vadd.f32 %v1086, %v1294
  %1296 = vmatmul.f32.gmra.mxu0 %v398
  %v1297 = vpop.f32.mrf.mxu0
  %v1298 = vadd.f32 %v1089, %v1297
  %1299 = vmatmul.f32.gmra.mxu0 %v402
  %v1300 = vpop.f32.mrf.mxu0
  %v1301 = vadd.f32 %v1092, %v1300
  %1302 = vdwg.mxu0
  %v1303 = vadd.f32 %v83, %v1112
  %v1304 = vadd.f32 %v84, %v1115
  %v1305 = vadd.f32 %v85, %v1118
  %v1306 = vadd.f32 %v86, %v1121
  %v1307 = vadd.f32 %v87, %v1124
  %v1308 = vadd.f32 %v88, %v1127
  %v1309 = vadd.f32 %v89, %v1130
  %v1310 = vadd.f32 %v90, %v1133
  %v1311 = vadd.f32 %v91, %v1136
  %v1312 = vadd.f32 %v92, %v1139
  %v1313 = vadd.f32 %v93, %v1142
  %v1314 = vadd.f32 %v94, %v1145
  %v1315 = vadd.f32 %v95, %v1148
  %v1316 = vadd.f32 %v96, %v1151
  %v1317 = vadd.f32 %v97, %v1154
  %v1318 = vadd.f32 %v98, %v1157
  %v1319 = vadd.f32 %v99, %v1160
  %v1320 = vadd.f32 %v100, %v1163
  %v1321 = vadd.f32 %v101, %v1166
  %v1322 = vadd.f32 %v102, %v1169
  %v1323 = vadd.f32 %v103, %v1172
  %v1324 = vadd.f32 %v104, %v1175
  %v1325 = vadd.f32 %v105, %v1178
  %v1326 = vadd.f32 %v106, %v1181
  %v1327 = vadd.f32 %v107, %v1184
  %v1328 = vadd.f32 %v108, %v1187
  %v1329 = vadd.f32 %v109, %v1190
  %v1330 = vadd.f32 %v110, %v1193
  %v1331 = vadd.f32 %v111, %v1196
  %v1332 = vadd.f32 %v112, %v1199
  %v1333 = vadd.f32 %v113, %v1202
  %v1334 = vadd.f32 %v114, %v1205
  %v1335 = vadd.f32 %v115, %v1208
  %v1336 = vadd.f32 %v116, %v1211
  %v1337 = vadd.f32 %v117, %v1214
  %v1338 = vadd.f32 %v118, %v1217
  %v1339 = vadd.f32 %v119, %v1220
  %v1340 = vadd.f32 %v120, %v1223
  %v1341 = vadd.f32 %v121, %v1226
  %v1342 = vadd.f32 %v122, %v1229
  %v1343 = vadd.f32 %v123, %v1232
  %v1344 = vadd.f32 %v124, %v1235
  %v1345 = vadd.f32 %v125, %v1238
  %v1346 = vadd.f32 %v126, %v1241
  %v1347 = vadd.f32 %v127, %v1244
  %v1348 = vadd.f32 %v128, %v1247
  %v1349 = vadd.f32 %v129, %v1250
  %v1350 = vadd.f32 %v130, %v1253
  %v1351 = vadd.f32 %v131, %v1256
  %v1352 = vadd.f32 %v132, %v1259
  %v1353 = vadd.f32 %v133, %v1262
  %v1354 = vadd.f32 %v134, %v1265
  %v1355 = vadd.f32 %v135, %v1268
  %v1356 = vadd.f32 %v136, %v1271
  %v1357 = vadd.f32 %v137, %v1274
  %v1358 = vadd.f32 %v138, %v1277
  %v1359 = vadd.f32 %v139, %v1280
  %v1360 = vadd.f32 %v140, %v1283
  %v1361 = vadd.f32 %v141, %v1286
  %v1362 = vadd.f32 %v142, %v1289
  %v1363 = vadd.f32 %v143, %v1292
  %v1364 = vadd.f32 %v144, %v1295
  %v1365 = vadd.f32 %v145, %v1298
  %v1366 = vadd.f32 %v146, %v1301
  %vm1367 = vcmask 523264
  %1368 = vst.msk [vmem:[#allocation2] sm:$0xff] %vm1367, %v1303
  %1369 = vst.msk [vmem:[#allocation2 + $0x8] sm:$0xff] %vm1367, %v1304
  %1370 = vst.msk [vmem:[#allocation2 + $0x10] sm:$0xff] %vm1367, %v1305
  %1371 = vst.msk [vmem:[#allocation2 + $0x18] sm:$0xff] %vm1367, %v1306
  %1372 = vst.msk [vmem:[#allocation2 + $0x20] sm:$0xff] %vm1367, %v1307
  %1373 = vst.msk [vmem:[#allocation2 + $0x28] sm:$0xff] %vm1367, %v1308
  %1374 = vst.msk [vmem:[#allocation2 + $0x30] sm:$0xff] %vm1367, %v1309
  %1375 = vst.msk [vmem:[#allocation2 + $0x38] sm:$0xff] %vm1367, %v1310
  %1376 = vst.msk [vmem:[#allocation2 + $0x40] sm:$0xff] %vm1367, %v1311
  %1377 = vst.msk [vmem:[#allocation2 + $0x48] sm:$0xff] %vm1367, %v1312
  %1378 = vst.msk [vmem:[#allocation2 + $0x50] sm:$0xff] %vm1367, %v1313
  %1379 = vst.msk [vmem:[#allocation2 + $0x58] sm:$0xff] %vm1367, %v1314
  %1380 = vst.msk [vmem:[#allocation2 + $0x60] sm:$0xff] %vm1367, %v1315
  %1381 = vst.msk [vmem:[#allocation2 + $0x68] sm:$0xff] %vm1367, %v1316
  %1382 = vst.msk [vmem:[#allocation2 + $0x70] sm:$0xff] %vm1367, %v1317
  %1383 = vst.msk [vmem:[#allocation2 + $0x78] sm:$0xff] %vm1367, %v1318
  %1384 = vst.msk [vmem:[#allocation2 + $0x80] sm:$0xff] %vm1367, %v1319
  %1385 = vst.msk [vmem:[#allocation2 + $0x88] sm:$0xff] %vm1367, %v1320
  %1386 = vst.msk [vmem:[#allocation2 + $0x90] sm:$0xff] %vm1367, %v1321
  %1387 = vst.msk [vmem:[#allocation2 + $0x98] sm:$0xff] %vm1367, %v1322
  %1388 = vst.msk [vmem:[#allocation2 + $0xa0] sm:$0xff] %vm1367, %v1323
  %1389 = vst.msk [vmem:[#allocation2 + $0xa8] sm:$0xff] %vm1367, %v1324
  %1390 = vst.msk [vmem:[#allocation2 + $0xb0] sm:$0xff] %vm1367, %v1325
  %1391 = vst.msk [vmem:[#allocation2 + $0xb8] sm:$0xff] %vm1367, %v1326
  %1392 = vst.msk [vmem:[#allocation2 + $0xc0] sm:$0xff] %vm1367, %v1327
  %1393 = vst.msk [vmem:[#allocation2 + $0xc8] sm:$0xff] %vm1367, %v1328
  %1394 = vst.msk [vmem:[#allocation2 + $0xd0] sm:$0xff] %vm1367, %v1329
  %1395 = vst.msk [vmem:[#allocation2 + $0xd8] sm:$0xff] %vm1367, %v1330
  %1396 = vst.msk [vmem:[#allocation2 + $0xe0] sm:$0xff] %vm1367, %v1331
  %1397 = vst.msk [vmem:[#allocation2 + $0xe8] sm:$0xff] %vm1367, %v1332
  %1398 = vst.msk [vmem:[#allocation2 + $0xf0] sm:$0xff] %vm1367, %v1333
  %1399 = vst.msk [vmem:[#allocation2 + $0xf8] sm:$0xff] %vm1367, %v1334
  %1400 = vst.msk [vmem:[#allocation2 + $0x100] sm:$0xff] %vm1367, %v1335
  %1401 = vst.msk [vmem:[#allocation2 + $0x108] sm:$0xff] %vm1367, %v1336
  %1402 = vst.msk [vmem:[#allocation2 + $0x110] sm:$0xff] %vm1367, %v1337
  %1403 = vst.msk [vmem:[#allocation2 + $0x118] sm:$0xff] %vm1367, %v1338
  %1404 = vst.msk [vmem:[#allocation2 + $0x120] sm:$0xff] %vm1367, %v1339
  %1405 = vst.msk [vmem:[#allocation2 + $0x128] sm:$0xff] %vm1367, %v1340
  %1406 = vst.msk [vmem:[#allocation2 + $0x130] sm:$0xff] %vm1367, %v1341
  %1407 = vst.msk [vmem:[#allocation2 + $0x138] sm:$0xff] %vm1367, %v1342
  %1408 = vst.msk [vmem:[#allocation2 + $0x140] sm:$0xff] %vm1367, %v1343
  %1409 = vst.msk [vmem:[#allocation2 + $0x148] sm:$0xff] %vm1367, %v1344
  %1410 = vst.msk [vmem:[#allocation2 + $0x150] sm:$0xff] %vm1367, %v1345
  %1411 = vst.msk [vmem:[#allocation2 + $0x158] sm:$0xff] %vm1367, %v1346
  %1412 = vst.msk [vmem:[#allocation2 + $0x160] sm:$0xff] %vm1367, %v1347
  %1413 = vst.msk [vmem:[#allocation2 + $0x168] sm:$0xff] %vm1367, %v1348
  %1414 = vst.msk [vmem:[#allocation2 + $0x170] sm:$0xff] %vm1367, %v1349
  %1415 = vst.msk [vmem:[#allocation2 + $0x178] sm:$0xff] %vm1367, %v1350
  %1416 = vst.msk [vmem:[#allocation2 + $0x180] sm:$0xff] %vm1367, %v1351
  %1417 = vst.msk [vmem:[#allocation2 + $0x188] sm:$0xff] %vm1367, %v1352
  %1418 = vst.msk [vmem:[#allocation2 + $0x190] sm:$0xff] %vm1367, %v1353
  %1419 = vst.msk [vmem:[#allocation2 + $0x198] sm:$0xff] %vm1367, %v1354
  %1420 = vst.msk [vmem:[#allocation2 + $0x1a0] sm:$0xff] %vm1367, %v1355
  %1421 = vst.msk [vmem:[#allocation2 + $0x1a8] sm:$0xff] %vm1367, %v1356
  %1422 = vst.msk [vmem:[#allocation2 + $0x1b0] sm:$0xff] %vm1367, %v1357
  %1423 = vst.msk [vmem:[#allocation2 + $0x1b8] sm:$0xff] %vm1367, %v1358
  %1424 = vst.msk [vmem:[#allocation2 + $0x1c0] sm:$0xff] %vm1367, %v1359
  %1425 = vst.msk [vmem:[#allocation2 + $0x1c8] sm:$0xff] %vm1367, %v1360
  %1426 = vst.msk [vmem:[#allocation2 + $0x1d0] sm:$0xff] %vm1367, %v1361
  %1427 = vst.msk [vmem:[#allocation2 + $0x1d8] sm:$0xff] %vm1367, %v1362
  %1428 = vst.msk [vmem:[#allocation2 + $0x1e0] sm:$0xff] %vm1367, %v1363
  %1429 = vst.msk [vmem:[#allocation2 + $0x1e8] sm:$0xff] %vm1367, %v1364
  %1430 = vst.msk [vmem:[#allocation2 + $0x1f0] sm:$0xff] %vm1367, %v1365
  %1431 = vst.msk [vmem:[#allocation2 + $0x1f8] sm:$0xff] %vm1367, %v1366
  // Predicated region
  $region18: #{cnn_encoder_forward.6} parent=0 // pred_check
    %p1432 = pneg %p14
  $region19: #{cnn_encoder_forward.6} parent=0 // pred_check_branch
    %1434 = sbr.rel (%p1432) target = $region21
  $region20: #{cnn_encoder_forward.6} parent=0 // pred_region
    %v1435 = vld [vmem:[#allocation2] sm:$0xff]
    %v1436 = vld [vmem:[#allocation2 + $0x8] sm:$0xff]
    %v1437 = vld [vmem:[#allocation2 + $0x10] sm:$0xff]
    %v1438 = vld [vmem:[#allocation2 + $0x18] sm:$0xff]
    %v1439 = vld [vmem:[#allocation2 + $0x20] sm:$0xff]
    %v1440 = vld [vmem:[#allocation2 + $0x28] sm:$0xff]
    %v1441 = vld [vmem:[#allocation2 + $0x30] sm:$0xff]
    %v1442 = vld [vmem:[#allocation2 + $0x38] sm:$0xff]
    %v1443 = vld [vmem:[#allocation2 + $0x40] sm:$0xff]
    %v1444 = vld [vmem:[#allocation2 + $0x48] sm:$0xff]
    %v1445 = vld [vmem:[#allocation2 + $0x50] sm:$0xff]
    %v1446 = vld [vmem:[#allocation2 + $0x58] sm:$0xff]
    %v1447 = vld [vmem:[#allocation2 + $0x60] sm:$0xff]
    %v1448 = vld [vmem:[#allocation2 + $0x68] sm:$0xff]
    %v1449 = vld [vmem:[#allocation2 + $0x70] sm:$0xff]
    %v1450 = vld [vmem:[#allocation2 + $0x78] sm:$0xff]
    %v1451 = vld [vmem:[#allocation2 + $0x80] sm:$0xff]
    %v1452 = vld [vmem:[#allocation2 + $0x88] sm:$0xff]
    %v1453 = vld [vmem:[#allocation2 + $0x90] sm:$0xff]
    %v1454 = vld [vmem:[#allocation2 + $0x98] sm:$0xff]
    %v1455 = vld [vmem:[#allocation2 + $0xa0] sm:$0xff]
    %v1456 = vld [vmem:[#allocation2 + $0xa8] sm:$0xff]
    %v1457 = vld [vmem:[#allocation2 + $0xb0] sm:$0xff]
    %v1458 = vld [vmem:[#allocation2 + $0xb8] sm:$0xff]
    %v1459 = vld [vmem:[#allocation2 + $0xc0] sm:$0xff]
    %v1460 = vld [vmem:[#allocation2 + $0xc8] sm:$0xff]
    %v1461 = vld [vmem:[#allocation2 + $0xd0] sm:$0xff]
    %v1462 = vld [vmem:[#allocation2 + $0xd8] sm:$0xff]
    %v1463 = vld [vmem:[#allocation2 + $0xe0] sm:$0xff]
    %v1464 = vld [vmem:[#allocation2 + $0xe8] sm:$0xff]
    %v1465 = vld [vmem:[#allocation2 + $0xf0] sm:$0xff]
    %v1466 = vld [vmem:[#allocation2 + $0xf8] sm:$0xff]
    %v1467 = vld [vmem:[#allocation2 + $0x100] sm:$0xff]
    %v1468 = vld [vmem:[#allocation2 + $0x108] sm:$0xff]
    %v1469 = vld [vmem:[#allocation2 + $0x110] sm:$0xff]
    %v1470 = vld [vmem:[#allocation2 + $0x118] sm:$0xff]
    %v1471 = vld [vmem:[#allocation2 + $0x120] sm:$0xff]
    %v1472 = vld [vmem:[#allocation2 + $0x128] sm:$0xff]
    %v1473 = vld [vmem:[#allocation2 + $0x130] sm:$0xff]
    %v1474 = vld [vmem:[#allocation2 + $0x138] sm:$0xff]
    %v1475 = vld [vmem:[#allocation2 + $0x140] sm:$0xff]
    %v1476 = vld [vmem:[#allocation2 + $0x148] sm:$0xff]
    %v1477 = vld [vmem:[#allocation2 + $0x150] sm:$0xff]
    %v1478 = vld [vmem:[#allocation2 + $0x158] sm:$0xff]
    %v1479 = vld [vmem:[#allocation2 + $0x160] sm:$0xff]
    %v1480 = vld [vmem:[#allocation2 + $0x168] sm:$0xff]
    %v1481 = vld [vmem:[#allocation2 + $0x170] sm:$0xff]
    %v1482 = vld [vmem:[#allocation2 + $0x178] sm:$0xff]
    %v1483 = vld [vmem:[#allocation2 + $0x180] sm:$0xff]
    %v1484 = vld [vmem:[#allocation2 + $0x188] sm:$0xff]
    %v1485 = vld [vmem:[#allocation2 + $0x190] sm:$0xff]
    %v1486 = vld [vmem:[#allocation2 + $0x198] sm:$0xff]
    %v1487 = vld [vmem:[#allocation2 + $0x1a0] sm:$0xff]
    %v1488 = vld [vmem:[#allocation2 + $0x1a8] sm:$0xff]
    %v1489 = vld [vmem:[#allocation2 + $0x1b0] sm:$0xff]
    %v1490 = vld [vmem:[#allocation2 + $0x1b8] sm:$0xff]
    %v1491 = vld [vmem:[#allocation2 + $0x1c0] sm:$0xff]
    %v1492 = vld [vmem:[#allocation2 + $0x1c8] sm:$0xff]
    %v1493 = vld [vmem:[#allocation2 + $0x1d0] sm:$0xff]
    %v1494 = vld [vmem:[#allocation2 + $0x1d8] sm:$0xff]
    %v1495 = vld [vmem:[#allocation2 + $0x1e0] sm:$0xff]
    %v1496 = vld [vmem:[#allocation2 + $0x1e8] sm:$0xff]
    %v1497 = vld [vmem:[#allocation2 + $0x1f0] sm:$0xff]
    %v1498 = vld [vmem:[#allocation2 + $0x1f8] sm:$0xff]
    %v1499 = vld [vmem:[%s2] sm:$0x1]
    %v1501 = vperm.slane %v1499, 0
    %v1503 = vadd.f32 %v1435, %v1501
    %v1504 = vadd.f32 %v1436, %v1501
    %v1505 = vadd.f32 %v1437, %v1501
    %v1506 = vadd.f32 %v1438, %v1501
    %v1507 = vadd.f32 %v1439, %v1501
    %v1508 = vadd.f32 %v1440, %v1501
    %v1509 = vadd.f32 %v1441, %v1501
    %v1510 = vadd.f32 %v1442, %v1501
    %v1511 = vadd.f32 %v1443, %v1501
    %v1512 = vadd.f32 %v1444, %v1501
    %v1513 = vadd.f32 %v1445, %v1501
    %v1514 = vadd.f32 %v1446, %v1501
    %v1515 = vadd.f32 %v1447, %v1501
    %v1516 = vadd.f32 %v1448, %v1501
    %v1517 = vadd.f32 %v1449, %v1501
    %v1518 = vadd.f32 %v1450, %v1501
    %v1519 = vadd.f32 %v1451, %v1501
    %v1520 = vadd.f32 %v1452, %v1501
    %v1521 = vadd.f32 %v1453, %v1501
    %v1522 = vadd.f32 %v1454, %v1501
    %v1523 = vadd.f32 %v1455, %v1501
    %v1524 = vadd.f32 %v1456, %v1501
    %v1525 = vadd.f32 %v1457, %v1501
    %v1526 = vadd.f32 %v1458, %v1501
    %v1527 = vadd.f32 %v1459, %v1501
    %v1528 = vadd.f32 %v1460, %v1501
    %v1529 = vadd.f32 %v1461, %v1501
    %v1530 = vadd.f32 %v1462, %v1501
    %v1531 = vadd.f32 %v1463, %v1501
    %v1532 = vadd.f32 %v1464, %v1501
    %v1533 = vadd.f32 %v1465, %v1501
    %v1534 = vadd.f32 %v1466, %v1501
    %v1535 = vadd.f32 %v1467, %v1501
    %v1536 = vadd.f32 %v1468, %v1501
    %v1537 = vadd.f32 %v1469, %v1501
    %v1538 = vadd.f32 %v1470, %v1501
    %v1539 = vadd.f32 %v1471, %v1501
    %v1540 = vadd.f32 %v1472, %v1501
    %v1541 = vadd.f32 %v1473, %v1501
    %v1542 = vadd.f32 %v1474, %v1501
    %v1543 = vadd.f32 %v1475, %v1501
    %v1544 = vadd.f32 %v1476, %v1501
    %v1545 = vadd.f32 %v1477, %v1501
    %v1546 = vadd.f32 %v1478, %v1501
    %v1547 = vadd.f32 %v1479, %v1501
    %v1548 = vadd.f32 %v1480, %v1501
    %v1549 = vadd.f32 %v1481, %v1501
    %v1550 = vadd.f32 %v1482, %v1501
    %v1551 = vadd.f32 %v1483, %v1501
    %v1552 = vadd.f32 %v1484, %v1501
    %v1553 = vadd.f32 %v1485, %v1501
    %v1554 = vadd.f32 %v1486, %v1501
    %v1555 = vadd.f32 %v1487, %v1501
    %v1556 = vadd.f32 %v1488, %v1501
    %v1557 = vadd.f32 %v1489, %v1501
    %v1558 = vadd.f32 %v1490, %v1501
    %v1559 = vadd.f32 %v1491, %v1501
    %v1560 = vadd.f32 %v1492, %v1501
    %v1561 = vadd.f32 %v1493, %v1501
    %v1562 = vadd.f32 %v1494, %v1501
    %v1563 = vadd.f32 %v1495, %v1501
    %v1564 = vadd.f32 %v1496, %v1501
    %v1565 = vadd.f32 %v1497, %v1501
    %v1566 = vadd.f32 %v1498, %v1501
    %v1567 = vmax.f32 %v1503, 0.0
    %v1568 = vmax.f32 %v1504, 0.0
    %v1569 = vmax.f32 %v1505, 0.0
    %v1570 = vmax.f32 %v1506, 0.0
    %v1571 = vmax.f32 %v1507, 0.0
    %v1572 = vmax.f32 %v1508, 0.0
    %v1573 = vmax.f32 %v1509, 0.0
    %v1574 = vmax.f32 %v1510, 0.0
    %v1575 = vmax.f32 %v1511, 0.0
    %v1576 = vmax.f32 %v1512, 0.0
    %v1577 = vmax.f32 %v1513, 0.0
    %v1578 = vmax.f32 %v1514, 0.0
    %v1579 = vmax.f32 %v1515, 0.0
    %v1580 = vmax.f32 %v1516, 0.0
    %v1581 = vmax.f32 %v1517, 0.0
    %v1582 = vmax.f32 %v1518, 0.0
    %v1583 = vmax.f32 %v1519, 0.0
    %v1584 = vmax.f32 %v1520, 0.0
    %v1585 = vmax.f32 %v1521, 0.0
    %v1586 = vmax.f32 %v1522, 0.0
    %v1587 = vmax.f32 %v1523, 0.0
    %v1588 = vmax.f32 %v1524, 0.0
    %v1589 = vmax.f32 %v1525, 0.0
    %v1590 = vmax.f32 %v1526, 0.0
    %v1591 = vmax.f32 %v1527, 0.0
    %v1592 = vmax.f32 %v1528, 0.0
    %v1593 = vmax.f32 %v1529, 0.0
    %v1594 = vmax.f32 %v1530, 0.0
    %v1595 = vmax.f32 %v1531, 0.0
    %v1596 = vmax.f32 %v1532, 0.0
    %v1597 = vmax.f32 %v1533, 0.0
    %v1598 = vmax.f32 %v1534, 0.0
    %v1599 = vmax.f32 %v1535, 0.0
    %v1600 = vmax.f32 %v1536, 0.0
    %v1601 = vmax.f32 %v1537, 0.0
    %v1602 = vmax.f32 %v1538, 0.0
    %v1603 = vmax.f32 %v1539, 0.0
    %v1604 = vmax.f32 %v1540, 0.0
    %v1605 = vmax.f32 %v1541, 0.0
    %v1606 = vmax.f32 %v1542, 0.0
    %v1607 = vmax.f32 %v1543, 0.0
    %v1608 = vmax.f32 %v1544, 0.0
    %v1609 = vmax.f32 %v1545, 0.0
    %v1610 = vmax.f32 %v1546, 0.0
    %v1611 = vmax.f32 %v1547, 0.0
    %v1612 = vmax.f32 %v1548, 0.0
    %v1613 = vmax.f32 %v1549, 0.0
    %v1614 = vmax.f32 %v1550, 0.0
    %v1615 = vmax.f32 %v1551, 0.0
    %v1616 = vmax.f32 %v1552, 0.0
    %v1617 = vmax.f32 %v1553, 0.0
    %v1618 = vmax.f32 %v1554, 0.0
    %v1619 = vmax.f32 %v1555, 0.0
    %v1620 = vmax.f32 %v1556, 0.0
    %v1621 = vmax.f32 %v1557, 0.0
    %v1622 = vmax.f32 %v1558, 0.0
    %v1623 = vmax.f32 %v1559, 0.0
    %v1624 = vmax.f32 %v1560, 0.0
    %v1625 = vmax.f32 %v1561, 0.0
    %v1626 = vmax.f32 %v1562, 0.0
    %v1627 = vmax.f32 %v1563, 0.0
    %v1628 = vmax.f32 %v1564, 0.0
    %v1629 = vmax.f32 %v1565, 0.0
    %v1630 = vmax.f32 %v1566, 0.0
    %1631 = vst.msk [vmem:[%s3] sm:$0xff] %vm1367, %v1567
    %1632 = vst.msk [vmem:[%s3 + $0x8] sm:$0xff] %vm1367, %v1568
    %1633 = vst.msk [vmem:[%s3 + $0x10] sm:$0xff] %vm1367, %v1569
    %1634 = vst.msk [vmem:[%s3 + $0x18] sm:$0xff] %vm1367, %v1570
    %1635 = vst.msk [vmem:[%s3 + $0x20] sm:$0xff] %vm1367, %v1571
    %1636 = vst.msk [vmem:[%s3 + $0x28] sm:$0xff] %vm1367, %v1572
    %1637 = vst.msk [vmem:[%s3 + $0x30] sm:$0xff] %vm1367, %v1573
    %1638 = vst.msk [vmem:[%s3 + $0x38] sm:$0xff] %vm1367, %v1574
    %1639 = vst.msk [vmem:[%s3 + $0x40] sm:$0xff] %vm1367, %v1575
    %1640 = vst.msk [vmem:[%s3 + $0x48] sm:$0xff] %vm1367, %v1576
    %1641 = vst.msk [vmem:[%s3 + $0x50] sm:$0xff] %vm1367, %v1577
    %1642 = vst.msk [vmem:[%s3 + $0x58] sm:$0xff] %vm1367, %v1578
    %1643 = vst.msk [vmem:[%s3 + $0x60] sm:$0xff] %vm1367, %v1579
    %1644 = vst.msk [vmem:[%s3 + $0x68] sm:$0xff] %vm1367, %v1580
    %1645 = vst.msk [vmem:[%s3 + $0x70] sm:$0xff] %vm1367, %v1581
    %1646 = vst.msk [vmem:[%s3 + $0x78] sm:$0xff] %vm1367, %v1582
    %1647 = vst.msk [vmem:[%s3 + $0x80] sm:$0xff] %vm1367, %v1583
    %1648 = vst.msk [vmem:[%s3 + $0x88] sm:$0xff] %vm1367, %v1584
    %1649 = vst.msk [vmem:[%s3 + $0x90] sm:$0xff] %vm1367, %v1585
    %1650 = vst.msk [vmem:[%s3 + $0x98] sm:$0xff] %vm1367, %v1586
    %1651 = vst.msk [vmem:[%s3 + $0xa0] sm:$0xff] %vm1367, %v1587
    %1652 = vst.msk [vmem:[%s3 + $0xa8] sm:$0xff] %vm1367, %v1588
    %1653 = vst.msk [vmem:[%s3 + $0xb0] sm:$0xff] %vm1367, %v1589
    %1654 = vst.msk [vmem:[%s3 + $0xb8] sm:$0xff] %vm1367, %v1590
    %1655 = vst.msk [vmem:[%s3 + $0xc0] sm:$0xff] %vm1367, %v1591
    %1656 = vst.msk [vmem:[%s3 + $0xc8] sm:$0xff] %vm1367, %v1592
    %1657 = vst.msk [vmem:[%s3 + $0xd0] sm:$0xff] %vm1367, %v1593
    %1658 = vst.msk [vmem:[%s3 + $0xd8] sm:$0xff] %vm1367, %v1594
    %1659 = vst.msk [vmem:[%s3 + $0xe0] sm:$0xff] %vm1367, %v1595
    %1660 = vst.msk [vmem:[%s3 + $0xe8] sm:$0xff] %vm1367, %v1596
    %1661 = vst.msk [vmem:[%s3 + $0xf0] sm:$0xff] %vm1367, %v1597
    %1662 = vst.msk [vmem:[%s3 + $0xf8] sm:$0xff] %vm1367, %v1598
    %1663 = vst.msk [vmem:[%s3 + $0x100] sm:$0xff] %vm1367, %v1599
    %1664 = vst.msk [vmem:[%s3 + $0x108] sm:$0xff] %vm1367, %v1600
    %1665 = vst.msk [vmem:[%s3 + $0x110] sm:$0xff] %vm1367, %v1601
    %1666 = vst.msk [vmem:[%s3 + $0x118] sm:$0xff] %vm1367, %v1602
    %1667 = vst.msk [vmem:[%s3 + $0x120] sm:$0xff] %vm1367, %v1603
    %1668 = vst.msk [vmem:[%s3 + $0x128] sm:$0xff] %vm1367, %v1604
    %1669 = vst.msk [vmem:[%s3 + $0x130] sm:$0xff] %vm1367, %v1605
    %1670 = vst.msk [vmem:[%s3 + $0x138] sm:$0xff] %vm1367, %v1606
    %1671 = vst.msk [vmem:[%s3 + $0x140] sm:$0xff] %vm1367, %v1607
    %1672 = vst.msk [vmem:[%s3 + $0x148] sm:$0xff] %vm1367, %v1608
    %1673 = vst.msk [vmem:[%s3 + $0x150] sm:$0xff] %vm1367, %v1609
    %1674 = vst.msk [vmem:[%s3 + $0x158] sm:$0xff] %vm1367, %v1610
    %1675 = vst.msk [vmem:[%s3 + $0x160] sm:$0xff] %vm1367, %v1611
    %1676 = vst.msk [vmem:[%s3 + $0x168] sm:$0xff] %vm1367, %v1612
    %1677 = vst.msk [vmem:[%s3 + $0x170] sm:$0xff] %vm1367, %v1613
    %1678 = vst.msk [vmem:[%s3 + $0x178] sm:$0xff] %vm1367, %v1614
    %1679 = vst.msk [vmem:[%s3 + $0x180] sm:$0xff] %vm1367, %v1615
    %1680 = vst.msk [vmem:[%s3 + $0x188] sm:$0xff] %vm1367, %v1616
    %1681 = vst.msk [vmem:[%s3 + $0x190] sm:$0xff] %vm1367, %v1617
    %1682 = vst.msk [vmem:[%s3 + $0x198] sm:$0xff] %vm1367, %v1618
    %1683 = vst.msk [vmem:[%s3 + $0x1a0] sm:$0xff] %vm1367, %v1619
    %1684 = vst.msk [vmem:[%s3 + $0x1a8] sm:$0xff] %vm1367, %v1620
    %1685 = vst.msk [vmem:[%s3 + $0x1b0] sm:$0xff] %vm1367, %v1621
    %1686 = vst.msk [vmem:[%s3 + $0x1b8] sm:$0xff] %vm1367, %v1622
    %1687 = vst.msk [vmem:[%s3 + $0x1c0] sm:$0xff] %vm1367, %v1623
    %1688 = vst.msk [vmem:[%s3 + $0x1c8] sm:$0xff] %vm1367, %v1624
    %1689 = vst.msk [vmem:[%s3 + $0x1d0] sm:$0xff] %vm1367, %v1625
    %1690 = vst.msk [vmem:[%s3 + $0x1d8] sm:$0xff] %vm1367, %v1626
    %1691 = vst.msk [vmem:[%s3 + $0x1e0] sm:$0xff] %vm1367, %v1627
    %1692 = vst.msk [vmem:[%s3 + $0x1e8] sm:$0xff] %vm1367, %v1628
    %1693 = vst.msk [vmem:[%s3 + $0x1f0] sm:$0xff] %vm1367, %v1629
    %1694 = vst.msk [vmem:[%s3 + $0x1f8] sm:$0xff] %vm1367, %v1630
  $region21: #{cnn_encoder_forward.6} parent=0 // pred_fallthru
    _
  // Predicated region
  $region22: #{cnn_encoder_forward.6} parent=0 // pred_check
    _
  $region23: #{cnn_encoder_forward.6} parent=0 // pred_check_branch
    %1696 = sbr.rel (0) target = $region25
  $region24: #{cnn_encoder_forward.6} parent=0 // pred_region
    _
  $region25: #{cnn_encoder_forward.6} parent=0 // pred_fallthru
    _
  // Predicated region
  $region26: #{cnn_encoder_forward.6} parent=0 // pred_check
    _
  $region27: #{cnn_encoder_forward.6} parent=0 // pred_check_branch
    %1698 = sbr.rel (0) target = $region29
  $region28: #{cnn_encoder_forward.6} parent=0 // pred_region
    _
  $region29: #{cnn_encoder_forward.6} parent=0 // pred_fallthru
    _

// kernel: cnn_encoder_forward.7
$region0: #{cnn_encoder_forward.7}
  #allocation0 [shape = 'u32[]', space=smem, size = 0x4, offset = 0x4, fixed_abs, tag = 'smem constant byte address 0x4 - core index']
  #allocation1 [shape = 'u32[72,128]{1,0:T(1,128)}', space=vmem, size = 0x9000, scoped, tag = 'internal scratch']
  #allocation2 [shape = 'f32[128,128]{1,0:T(8,128)}', space=vmem, size = 0x10000, scoped, tag = 'scratch operand']
  %s0 = inlined_call_operand.vmem [shape: f32[128,1024], index: 0, kind: input, shape index: {}]
  %s1 = inlined_call_operand.vmem [shape: f32[1024,128], index: 1, kind: input, shape index: {}]
  %s2 = inlined_call_operand.vmem [shape: f32[1,128], index: 2, kind: input, shape index: {}]
  %s3 = inlined_call_operand.vmem [shape: f32[128,128], index: 3, kind: output, shape index: {}]
  %s4 = sld [smem:[#allocation0]]
  $region76: #{cnn_encoder_forward.7} parent=0
    _
  %s6 = ssub.s32 1, %s4
  %s7 = scalar_select 0, %s6, %s4
  $region1: #{cnn_encoder_forward.7} parent=0
    #allocation3 [shape = 'u8[524288]{0}', space=vmem, size = 0x80000, scoped, tag = 'input window, operand 0']
    loop: start=0, step=1, limit=4
    $region2: #{cnn_encoder_forward.7} parent=1 // loop_pre_header
      _
    $region3: #{cnn_encoder_forward.7} parent=1 // loop_header
      %s9 = sphi 0, %s13
      %p10 = scmp.ge.s32.totalorder %s9, 4
      %s16 = sphi 0, %s35
      %s17 = sphi 0, %s31
      %s18 = sphi 0, %s27
      %s19 = sphi 0, %s16
      %s20 = sphi 0, %s17
      %s21 = sphi 0, %s18
      %s22 = sphi 0, %s19
      %s23 = sphi 0, %s20
      %s24 = sphi 0, %s21
      %s40 = sphi 0, %s42
      %s43 = sphi 0, %s40
      %s44 = sphi 0, %s43
      %s60 = sphi 0, %s44
      %s68 = sphi 0, %s70
      %s71 = sphi 0, %s68
      %s72 = sphi 0, %s71
      %s88 = sphi 0, %s72
      %s94 = sphi 0, %s96
      %s97 = sphi 0, %s94
      %s98 = sphi 0, %s97
      %s114 = sphi 0, %s98
      %s122 = sphi 0, %s124
      %s125 = sphi 0, %s122
      %s126 = sphi 0, %s125
      %s142 = sphi 0, %s126
    $region4: #{cnn_encoder_forward.7} parent=1 // loop_header_branch
      %12 = sbr.rel (%p10) target = $region8
    $region5: #{cnn_encoder_forward.7} parent=1 // loop_body
      %s14 = ssub.s32 %s9, 1
      %s15 = ssub.s32 %s9, 2
      %s25 = sadd.s32 1, %s18
      %p26 = scmp.ge.s32.totalorder %s25, 2
      %s27 = scalar_select %p26, 0, %s25
      %s28 = sadd.s32 1, %s17
      %s29 = scalar_select %p26, %s28, %s17
      %p30 = scmp.ge.s32.totalorder %s29, 1
      %s31 = scalar_select %p30, 0, %s29
      %s32 = sadd.s32 1, %s16
      %s33 = scalar_select %p30, %s32, %s16
      %p34 = scmp.ge.s32.totalorder %s33, 1
      %s35 = scalar_select %p34, 0, %s33
      %s36 = ssub.s32 %s16, %s35
      %s37 = ssub.s32 %s18, %s27
      %s38 = sor.u32 %s36, %s37
      %p39 = scmp.eq.s32.totalorder %s38, 0
      %s41 = sadd.s32 %s40, 1
      %s42 = scalar_select %p39, %s40, %s41
      %p45 = pneg %p39
      %p46 = scmp.eq.s32.totalorder %s9, 1
      %p47 = por %p45, %p46
      %p48 = scmp.ne.s32.totalorder %s40, %s43
      %p49 = scmp.eq.s32.totalorder %s9, 0
      %p50 = por %p48, %p49
      %p51 = scmp.ne.s32.totalorder %s40, %s43
      %p52 = scmp.eq.s32.totalorder %s14, 1
      %p53 = por %p51, %p52
      %p54 = scmp.ne.s32.totalorder %s43, %s44
      %p55 = scmp.eq.s32.totalorder %s14, 0
      %p56 = por %p54, %p55
      %p57 = scmp.ne.s32.totalorder %s43, %s44
      %p58 = scmp.eq.s32.totalorder %s15, 1
      %p59 = por %p57, %p58
      %p61 = scmp.ne.s32.totalorder %s44, %s60
      %p62 = scmp.eq.s32.totalorder %s15, 0
      %p63 = por %p61, %p62
      %s64 = ssub.s32 %s18, %s27
      %s65 = ssub.s32 %s17, %s31
      %s66 = sor.u32 %s64, %s65
      %p67 = scmp.eq.s32.totalorder %s66, 0
      %s69 = sadd.s32 %s68, 1
      %s70 = scalar_select %p67, %s68, %s69
      %p73 = pneg %p67
      %p74 = scmp.eq.s32.totalorder %s9, 1
      %p75 = por %p73, %p74
      %p76 = scmp.ne.s32.totalorder %s68, %s71
      %p77 = scmp.eq.s32.totalorder %s9, 0
      %p78 = por %p76, %p77
      %p79 = scmp.ne.s32.totalorder %s68, %s71
      %p80 = scmp.eq.s32.totalorder %s14, 1
      %p81 = por %p79, %p80
      %p82 = scmp.ne.s32.totalorder %s71, %s72
      %p83 = scmp.eq.s32.totalorder %s14, 0
      %p84 = por %p82, %p83
      %p85 = scmp.ne.s32.totalorder %s71, %s72
      %p86 = scmp.eq.s32.totalorder %s15, 1
      %p87 = por %p85, %p86
      %p89 = scmp.ne.s32.totalorder %s72, %s88
      %p90 = scmp.eq.s32.totalorder %s15, 0
      %p91 = por %p89, %p90
      %s92 = ssub.s32 %s17, %s31
      %p93 = scmp.eq.s32.totalorder %s92, 0
      %s95 = sadd.s32 %s94, 1
      %s96 = scalar_select %p93, %s94, %s95
      %p99 = pneg %p93
      %p100 = scmp.eq.s32.totalorder %s9, 1
      %p101 = por %p99, %p100
      %p102 = scmp.ne.s32.totalorder %s94, %s97
      %p103 = scmp.eq.s32.totalorder %s9, 0
      %p104 = por %p102, %p103
      %p105 = scmp.ne.s32.totalorder %s94, %s97
      %p106 = scmp.eq.s32.totalorder %s14, 1
      %p107 = por %p105, %p106
      %p108 = scmp.ne.s32.totalorder %s97, %s98
      %p109 = scmp.eq.s32.totalorder %s14, 0
      %p110 = por %p108, %p109
      %p111 = scmp.ne.s32.totalorder %s97, %s98
      %p112 = scmp.eq.s32.totalorder %s15, 1
      %p113 = por %p111, %p112
      %p115 = scmp.ne.s32.totalorder %s98, %s114
      %p116 = scmp.eq.s32.totalorder %s15, 0
      %p117 = por %p115, %p116
      %s118 = ssub.s32 %s16, %s35
      %s119 = ssub.s32 %s17, %s31
      %s120 = sor.u32 %s118, %s119
      %p121 = scmp.eq.s32.totalorder %s120, 0
      %s123 = sadd.s32 %s122, 1
      %s124 = scalar_select %p121, %s122, %s123
      %p127 = pneg %p121
      %p128 = scmp.eq.s32.totalorder %s9, 1
      %p129 = por %p127, %p128
      %p130 = scmp.ne.s32.totalorder %s122, %s125
      %p131 = scmp.eq.s32.totalorder %s9, 0
      %p132 = por %p130, %p131
      %p133 = scmp.ne.s32.totalorder %s122, %s125
      %p134 = scmp.eq.s32.totalorder %s14, 1
      %p135 = por %p133, %p134
      %p136 = scmp.ne.s32.totalorder %s125, %s126
      %p137 = scmp.eq.s32.totalorder %s14, 0
      %p138 = por %p136, %p137
      %p139 = scmp.ne.s32.totalorder %s125, %s126
      %p140 = scmp.eq.s32.totalorder %s15, 1
      %p141 = por %p139, %p140
      %p143 = scmp.ne.s32.totalorder %s126, %s142
      %p144 = scmp.eq.s32.totalorder %s15, 0
      %p145 = por %p143, %p144
      %p146 = scmp.le.s32.totalorder 1, %s9
      %p147 = scmp.lt.s32.totalorder %s9, 3
      %p148 = pnand %p146, %p147
      %p149 = pneg %p148
      // Predicated region
      $region9: #{cnn_encoder_forward.7} parent=5 // pred_check
        _
      $region10: #{cnn_encoder_forward.7} parent=5 // pred_check_branch
        %151 = sbr.rel (%p148) target = $region12
      $region11: #{cnn_encoder_forward.7} parent=5 // pred_region
        %s152 = ssub.s32 %s9, 1
        // Predicated region
        $region13: #{cnn_encoder_forward.7} parent=11 // pred_check
          %p153 = pneg %p110
        $region14: #{cnn_encoder_forward.7} parent=11 // pred_check_branch
          %155 = sbr.rel (%p153) target = $region16
        $region15: #{cnn_encoder_forward.7} parent=11 // pred_region
          %p156 = scmp.lt.s32.totalorder %s20, 0
          %s157 = scalar_select %p156, %s20, 0
          %s158 = scalar_lea.vmem %s2, %s157
        $region16: #{cnn_encoder_forward.7} parent=11 // pred_fallthru
          _
      $region12: #{cnn_encoder_forward.7} parent=5 // pred_fallthru
        _
      %p159 = scmp.lt.s32.totalorder %s9, 2
      // Predicated region
      $region17: #{cnn_encoder_forward.7} parent=5 // pred_check
        %p160 = pneg %p159
      $region18: #{cnn_encoder_forward.7} parent=5 // pred_check_branch
        %162 = sbr.rel (%p160) target = $region20
      $region19: #{cnn_encoder_forward.7} parent=5 // pred_region
        // Predicated region
        $region21: #{cnn_encoder_forward.7} parent=19 // pred_check
          %p163 = pneg %p50
        $region22: #{cnn_encoder_forward.7} parent=19 // pred_check_branch
          %165 = sbr.rel (%p163) target = $region24
        $region23: #{cnn_encoder_forward.7} parent=19 // pred_region
          %s166 = sand.u32 %s40, 1
          %s167 = sand.u32 %s40, 1
          %s168 = smul.addr %s167, 512
          %s169 = scalar_lea.vmem [#allocation3], %s168
          %s170 = smul.u32 16, %s16
          %s171 = smul.u32 4, %s18
          %s172 = smul.addr %s170, 8
          %s173 = sadd.s32 %s171, %s172
          %s174 = smul.addr %s173, 8
          %s175 = scalar_lea.vmem %s0, %s174
          // Predicated region
          $region25: #{cnn_encoder_forward.7} parent=23 // pred_check
            _
          $region26: #{cnn_encoder_forward.7} parent=23 // pred_check_branch
            %177 = sbr.rel (0) target = $region28
          $region27: #{cnn_encoder_forward.7} parent=23 // pred_region
            // Predicated region
            $region29: #{cnn_encoder_forward.7} parent=27 // pred_check
              _
            $region30: #{cnn_encoder_forward.7} parent=27 // pred_check_branch
              %179 = sbr.rel (0) target = $region32
            $region31: #{cnn_encoder_forward.7} parent=27 // pred_region
              loop: start=0, step=1, limit=1
              $region33: #{cnn_encoder_forward.7} parent=31 // loop_pre_header
                _
              $region34: #{cnn_encoder_forward.7} parent=31 // loop_header
                %s181 = sphi 0, %s185
                %p182 = scmp.ge.s32.totalorder %s181, 1
                %s186 = sphi %s175, %s175
                %s187 = sphi %s169, %s169
              $region35: #{cnn_encoder_forward.7} parent=31 // loop_header_branch
                %184 = sbr.rel (%p182) target = $region39
              $region36: #{cnn_encoder_forward.7} parent=31 // loop_body
                %v188 = vld [vmem:[%s186] sm:$0xff]
                %189 = vst [vmem:[%s187] sm:$0xff] %v188
                %v190 = vld [vmem:[%s186 + $0x8] sm:$0xff]
                %191 = vst [vmem:[%s187 + $0x8] sm:$0xff] %v190
                %v192 = vld [vmem:[%s186 + $0x10] sm:$0xff]
                %193 = vst [vmem:[%s187 + $0x10] sm:$0xff] %v192
                %v194 = vld [vmem:[%s186 + $0x18] sm:$0xff]
                %195 = vst [vmem:[%s187 + $0x18] sm:$0xff] %v194
                %v196 = vld [vmem:[%s186 + $0x40] sm:$0xff]
                %197 = vst [vmem:[%s187 + $0x20] sm:$0xff] %v196
                %v198 = vld [vmem:[%s186 + $0x48] sm:$0xff]
                %199 = vst [vmem:[%s187 + $0x28] sm:$0xff] %v198
                %v200 = vld [vmem:[%s186 + $0x50] sm:$0xff]
                %201 = vst [vmem:[%s187 + $0x30] sm:$0xff] %v200
                %v202 = vld [vmem:[%s186 + $0x58] sm:$0xff]
                %203 = vst [vmem:[%s187 + $0x38] sm:$0xff] %v202
                %v204 = vld [vmem:[%s186 + $0x80] sm:$0xff]
                %205 = vst [vmem:[%s187 + $0x40] sm:$0xff] %v204
                %v206 = vld [vmem:[%s186 + $0x88] sm:$0xff]
                %207 = vst [vmem:[%s187 + $0x48] sm:$0xff] %v206
                %v208 = vld [vmem:[%s186 + $0x90] sm:$0xff]
                %209 = vst [vmem:[%s187 + $0x50] sm:$0xff] %v208
                %v210 = vld [vmem:[%s186 + $0x98] sm:$0xff]
                %211 = vst [vmem:[%s187 + $0x58] sm:$0xff] %v210
                %v212 = vld [vmem:[%s186 + $0xc0] sm:$0xff]
                %213 = vst [vmem:[%s187 + $0x60] sm:$0xff] %v212
                %v214 = vld [vmem:[%s186 + $0xc8] sm:$0xff]
                %215 = vst [vmem:[%s187 + $0x68] sm:$0xff] %v214
                %v216 = vld [vmem:[%s186 + $0xd0] sm:$0xff]
                %217 = vst [vmem:[%s187 + $0x70] sm:$0xff] %v216
                %v218 = vld [vmem:[%s186 + $0xd8] sm:$0xff]
                %219 = vst [vmem:[%s187 + $0x78] sm:$0xff] %v218
                %v220 = vld [vmem:[%s186 + $0x100] sm:$0xff]
                %221 = vst [vmem:[%s187 + $0x80] sm:$0xff] %v220
                %v222 = vld [vmem:[%s186 + $0x108] sm:$0xff]
                %223 = vst [vmem:[%s187 + $0x88] sm:$0xff] %v222
                %v224 = vld [vmem:[%s186 + $0x110] sm:$0xff]
                %225 = vst [vmem:[%s187 + $0x90] sm:$0xff] %v224
                %v226 = vld [vmem:[%s186 + $0x118] sm:$0xff]
                %227 = vst [vmem:[%s187 + $0x98] sm:$0xff] %v226
                %v228 = vld [vmem:[%s186 + $0x140] sm:$0xff]
                %229 = vst [vmem:[%s187 + $0xa0] sm:$0xff] %v228
                %v230 = vld [vmem:[%s186 + $0x148] sm:$0xff]
                %231 = vst [vmem:[%s187 + $0xa8] sm:$0xff] %v230
                %v232 = vld [vmem:[%s186 + $0x150] sm:$0xff]
                %233 = vst [vmem:[%s187 + $0xb0] sm:$0xff] %v232
                %v234 = vld [vmem:[%s186 + $0x158] sm:$0xff]
                %235 = vst [vmem:[%s187 + $0xb8] sm:$0xff] %v234
                %v236 = vld [vmem:[%s186 + $0x180] sm:$0xff]
                %237 = vst [vmem:[%s187 + $0xc0] sm:$0xff] %v236
                %v238 = vld [vmem:[%s186 + $0x188] sm:$0xff]
                %239 = vst [vmem:[%s187 + $0xc8] sm:$0xff] %v238
                %v240 = vld [vmem:[%s186 + $0x190] sm:$0xff]
                %241 = vst [vmem:[%s187 + $0xd0] sm:$0xff] %v240
                %v242 = vld [vmem:[%s186 + $0x198] sm:$0xff]
                %243 = vst [vmem:[%s187 + $0xd8] sm:$0xff] %v242
                %v244 = vld [vmem:[%s186 + $0x1c0] sm:$0xff]
                %245 = vst [vmem:[%s187 + $0xe0] sm:$0xff] %v244
                %v246 = vld [vmem:[%s186 + $0x1c8] sm:$0xff]
                %247 = vst [vmem:[%s187 + $0xe8] sm:$0xff] %v246
                %v248 = vld [vmem:[%s186 + $0x1d0] sm:$0xff]
                %249 = vst [vmem:[%s187 + $0xf0] sm:$0xff] %v248
                %v250 = vld [vmem:[%s186 + $0x1d8] sm:$0xff]
                %251 = vst [vmem:[%s187 + $0xf8] sm:$0xff] %v250
                %v252 = vld [vmem:[%s186 + $0x200] sm:$0xff]
                %253 = vst [vmem:[%s187 + $0x100] sm:$0xff] %v252
                %v254 = vld [vmem:[%s186 + $0x208] sm:$0xff]
                %255 = vst [vmem:[%s187 + $0x108] sm:$0xff] %v254
                %v256 = vld [vmem:[%s186 + $0x210] sm:$0xff]
                %257 = vst [vmem:[%s187 + $0x110] sm:$0xff] %v256
                %v258 = vld [vmem:[%s186 + $0x218] sm:$0xff]
                %259 = vst [vmem:[%s187 + $0x118] sm:$0xff] %v258
                %v260 = vld [vmem:[%s186 + $0x240] sm:$0xff]
                %261 = vst [vmem:[%s187 + $0x120] sm:$0xff] %v260
                %v262 = vld [vmem:[%s186 + $0x248] sm:$0xff]
                %263 = vst [vmem:[%s187 + $0x128] sm:$0xff] %v262
                %v264 = vld [vmem:[%s186 + $0x250] sm:$0xff]
                %265 = vst [vmem:[%s187 + $0x130] sm:$0xff] %v264
                %v266 = vld [vmem:[%s186 + $0x258] sm:$0xff]
                %267 = vst [vmem:[%s187 + $0x138] sm:$0xff] %v266
                %v268 = vld [vmem:[%s186 + $0x280] sm:$0xff]
                %269 = vst [vmem:[%s187 + $0x140] sm:$0xff] %v268
                %v270 = vld [vmem:[%s186 + $0x288] sm:$0xff]
                %271 = vst [vmem:[%s187 + $0x148] sm:$0xff] %v270
                %v272 = vld [vmem:[%s186 + $0x290] sm:$0xff]
                %273 = vst [vmem:[%s187 + $0x150] sm:$0xff] %v272
                %v274 = vld [vmem:[%s186 + $0x298] sm:$0xff]
                %275 = vst [vmem:[%s187 + $0x158] sm:$0xff] %v274
                %v276 = vld [vmem:[%s186 + $0x2c0] sm:$0xff]
                %277 = vst [vmem:[%s187 + $0x160] sm:$0xff] %v276
                %v278 = vld [vmem:[%s186 + $0x2c8] sm:$0xff]
                %279 = vst [vmem:[%s187 + $0x168] sm:$0xff] %v278
                %v280 = vld [vmem:[%s186 + $0x2d0] sm:$0xff]
                %281 = vst [vmem:[%s187 + $0x170] sm:$0xff] %v280
                %v282 = vld [vmem:[%s186 + $0x2d8] sm:$0xff]
                %283 = vst [vmem:[%s187 + $0x178] sm:$0xff] %v282
                %v284 = vld [vmem:[%s186 + $0x300] sm:$0xff]
                %285 = vst [vmem:[%s187 + $0x180] sm:$0xff] %v284
                %v286 = vld [vmem:[%s186 + $0x308] sm:$0xff]
                %287 = vst [vmem:[%s187 + $0x188] sm:$0xff] %v286
                %v288 = vld [vmem:[%s186 + $0x310] sm:$0xff]
                %289 = vst [vmem:[%s187 + $0x190] sm:$0xff] %v288
                %v290 = vld [vmem:[%s186 + $0x318] sm:$0xff]
                %291 = vst [vmem:[%s187 + $0x198] sm:$0xff] %v290
                %v292 = vld [vmem:[%s186 + $0x340] sm:$0xff]
                %293 = vst [vmem:[%s187 + $0x1a0] sm:$0xff] %v292
                %v294 = vld [vmem:[%s186 + $0x348] sm:$0xff]
                %295 = vst [vmem:[%s187 + $0x1a8] sm:$0xff] %v294
                %v296 = vld [vmem:[%s186 + $0x350] sm:$0xff]
                %297 = vst [vmem:[%s187 + $0x1b0] sm:$0xff] %v296
                %v298 = vld [vmem:[%s186 + $0x358] sm:$0xff]
                %299 = vst [vmem:[%s187 + $0x1b8] sm:$0xff] %v298
                %v300 = vld [vmem:[%s186 + $0x380] sm:$0xff]
                %301 = vst [vmem:[%s187 + $0x1c0] sm:$0xff] %v300
                %v302 = vld [vmem:[%s186 + $0x388] sm:$0xff]
                %303 = vst [vmem:[%s187 + $0x1c8] sm:$0xff] %v302
                %v304 = vld [vmem:[%s186 + $0x390] sm:$0xff]
                %305 = vst [vmem:[%s187 + $0x1d0] sm:$0xff] %v304
                %v306 = vld [vmem:[%s186 + $0x398] sm:$0xff]
                %307 = vst [vmem:[%s187 + $0x1d8] sm:$0xff] %v306
                %v308 = vld [vmem:[%s186 + $0x3c0] sm:$0xff]
                %309 = vst [vmem:[%s187 + $0x1e0] sm:$0xff] %v308
                %v310 = vld [vmem:[%s186 + $0x3c8] sm:$0xff]
                %311 = vst [vmem:[%s187 + $0x1e8] sm:$0xff] %v310
                %v312 = vld [vmem:[%s186 + $0x3d0] sm:$0xff]
                %313 = vst [vmem:[%s187 + $0x1f0] sm:$0xff] %v312
                %v314 = vld [vmem:[%s186 + $0x3d8] sm:$0xff]
                %315 = vst [vmem:[%s187 + $0x1f8] sm:$0xff] %v314
              $region37: #{cnn_encoder_forward.7} parent=31 // loop_footer
                %s185 = sadd.s32 1, %s181
              $region38: #{cnn_encoder_forward.7} parent=31 // loop_footer_branch
                %180 = sbr.rel target = $region34
              $region39: #{cnn_encoder_forward.7} parent=31 // loop_exit
                _
            $region32: #{cnn_encoder_forward.7} parent=27 // pred_fallthru
              _
            // Predicated region
            $region40: #{cnn_encoder_forward.7} parent=27 // pred_check
              _
            $region41: #{cnn_encoder_forward.7} parent=27 // pred_check_branch
              %317 = sbr.rel target = $region43
            $region42: #{cnn_encoder_forward.7} parent=27 // pred_region
              _
            $region43: #{cnn_encoder_forward.7} parent=27 // pred_fallthru
              _
          $region28: #{cnn_encoder_forward.7} parent=23 // pred_fallthru
            _
          %318 = vnop
        $region24: #{cnn_encoder_forward.7} parent=19 // pred_fallthru
          _
        // Predicated region
        $region44: #{cnn_encoder_forward.7} parent=19 // pred_check
          %p319 = pneg %p78
        $region45: #{cnn_encoder_forward.7} parent=19 // pred_check_branch
          %321 = sbr.rel (%p319) target = $region47
        $region46: #{cnn_encoder_forward.7} parent=19 // pred_region
          %s322 = smul.u32 64, %s18
          %p323 = scmp.lt.s32.totalorder %s322, 127
          %s324 = scalar_select %p323, %s322, 127
          %p325 = scmp.lt.s32.totalorder %s17, 0
          %s326 = scalar_select %p325, %s17, 0
          %s327 = sadd.s32 %s326, %s324
          %s328 = smul.addr %s327, 8
          %s329 = scalar_lea.vmem %s1, %s328
          %s330 = smul.u32 64, %s18
        $region47: #{cnn_encoder_forward.7} parent=19 // pred_fallthru
          _
      $region20: #{cnn_encoder_forward.7} parent=5 // pred_fallthru
        _
      %p331 = scmp.le.s32.totalorder 1, %s9
      %p332 = scmp.lt.s32.totalorder %s9, 3
      %p333 = pnand %p331, %p332
      %p334 = pneg %p333
      // Predicated region
      $region48: #{cnn_encoder_forward.7} parent=5 // pred_check
        _
      $region49: #{cnn_encoder_forward.7} parent=5 // pred_check_branch
        %336 = sbr.rel (%p333) target = $region51
      $region50: #{cnn_encoder_forward.7} parent=5 // pred_region
        %s337 = ssub.s32 %s9, 1
        %s338 = sand.u32 %s43, 1
        %s339 = sand.u32 %s43, 1
        %s340 = smul.addr %s339, 512
        %s341 = scalar_lea.vmem [#allocation3], %s340
        // Predicated region
        $region52: #{cnn_encoder_forward.7} parent=50 // pred_check
          %p342 = pneg %p56
        $region53: #{cnn_encoder_forward.7} parent=50 // pred_check_branch
          %344 = sbr.rel (%p342) target = $region55
        $region54: #{cnn_encoder_forward.7} parent=50 // pred_region
          _
        $region55: #{cnn_encoder_forward.7} parent=50 // pred_fallthru
          _
        %s345 = sand.u32 %s43, 1
        %s346 = sand.u32 %s43, 1
        %s347 = smul.addr %s346, 512
        %s348 = scalar_lea.vmem [#allocation3], %s347
        %p349 = pneg %p56
        %p350 = pneg %p53
        %s351 = smul.u32 64, %s21
        %p352 = scmp.lt.s32.totalorder %s351, 127
        %s353 = scalar_select %p352, %s351, 127
        %p354 = scmp.lt.s32.totalorder %s20, 0
        %s355 = scalar_select %p354, %s20, 0
        %s356 = sadd.s32 %s355, %s353
        %s357 = smul.addr %s356, 8
        %s358 = scalar_lea.vmem %s1, %s357
        %p359 = pneg %p84
        %p360 = pneg %p81
        %p361 = scmp.lt.s32.totalorder %s20, 0
        %s362 = scalar_select %p361, %s20, 0
        %s363 = scalar_lea.vmem %s2, %s362
        %p364 = pneg %p110
        %p365 = pneg %p107
        %p366 = pneg %p138
        %p367 = pneg %p135
        %s368 = smul.u32 16, %s19
        %p369 = scmp.lt.s32.totalorder %s368, 15
        %s370 = scalar_select %p369, %s368, 15
        %p371 = scmp.lt.s32.totalorder %s20, 0
        %s372 = scalar_select %p371, %s20, 0
        %s373 = sadd.s32 %s372, %s370
        %s374 = smul.addr %s373, 8
        %s375 = scalar_lea.vmem %s3, %s374
        %s376 = smul.u32 16, %s19
        %s377 = smul.u32 4, %s21
        %s378 = smul.u32 64, %s21
        %p379 = scmp.lt.s32.totalorder %s378, 127
        %s380 = scalar_select %p379, %s378, 127
        %p381 = scmp.lt.s32.totalorder %s20, 0
        %s382 = scalar_select %p381, %s20, 0
        %s383 = sadd.s32 %s382, %s380
        %s384 = smul.addr %s383, 8
        %s385 = scalar_lea.vmem %s1, %s384
        %s386 = smul.u32 64, %s21
        %p387 = scmp.lt.s32.totalorder %s20, 0
        %s388 = scalar_select %p387, %s20, 0
        %s389 = scalar_lea.vmem %s2, %s388
        %s390 = smul.u32 16, %s19
        %p391 = scmp.lt.s32.totalorder %s390, 15
        %s392 = scalar_select %p391, %s390, 15
        %p393 = scmp.lt.s32.totalorder %s20, 0
        %s394 = scalar_select %p393, %s20, 0
        %s395 = sadd.s32 %s394, %s392
        %s396 = smul.addr %s395, 8
        %s397 = scalar_lea.vmem %s3, %s396
        %s398 = smul.u32 16, %s19
        %p399 = scmp.eq.s32.totalorder %s21, 0
        // Predicated region
        $region56: #{cnn_encoder_forward.7} parent=50 // pred_check
          %p400 = pneg %p399
        $region57: #{cnn_encoder_forward.7} parent=50 // pred_check_branch
          %402 = sbr.rel (%p400) target = $region59
        $region58: #{cnn_encoder_forward.7} parent=50 // pred_region
          %403 = vst [vmem:[#allocation2] sm:$0xff] 0.0
          %404 = vst [vmem:[#allocation2 + $0x8] sm:$0xff] 0.0
          %405 = vst [vmem:[#allocation2 + $0x10] sm:$0xff] 0.0
          %406 = vst [vmem:[#allocation2 + $0x18] sm:$0xff] 0.0
          %407 = vst [vmem:[#allocation2 + $0x20] sm:$0xff] 0.0
          %408 = vst [vmem:[#allocation2 + $0x28] sm:$0xff] 0.0
          %409 = vst [vmem:[#allocation2 + $0x30] sm:$0xff] 0.0
          %410 = vst [vmem:[#allocation2 + $0x38] sm:$0xff] 0.0
          %411 = vst [vmem:[#allocation2 + $0x40] sm:$0xff] 0.0
          %412 = vst [vmem:[#allocation2 + $0x48] sm:$0xff] 0.0
          %413 = vst [vmem:[#allocation2 + $0x50] sm:$0xff] 0.0
          %414 = vst [vmem:[#allocation2 + $0x58] sm:$0xff] 0.0
          %415 = vst [vmem:[#allocation2 + $0x60] sm:$0xff] 0.0
          %416 = vst [vmem:[#allocation2 + $0x68] sm:$0xff] 0.0
          %417 = vst [vmem:[#allocation2 + $0x70] sm:$0xff] 0.0
          %418 = vst [vmem:[#allocation2 + $0x78] sm:$0xff] 0.0
        $region59: #{cnn_encoder_forward.7} parent=50 // pred_fallthru
          _
        %v419 = vld [vmem:[#allocation2] sm:$0xff]
        %v420 = vld [vmem:[#allocation2 + $0x8] sm:$0xff]
        %v421 = vld [vmem:[#allocation2 + $0x10] sm:$0xff]
        %v422 = vld [vmem:[#allocation2 + $0x18] sm:$0xff]
        %v423 = vld [vmem:[#allocation2 + $0x20] sm:$0xff]
        %v424 = vld [vmem:[#allocation2 + $0x28] sm:$0xff]
        %v425 = vld [vmem:[#allocation2 + $0x30] sm:$0xff]
        %v426 = vld [vmem:[#allocation2 + $0x38] sm:$0xff]
        %v427 = vld [vmem:[#allocation2 + $0x40] sm:$0xff]
        %v428 = vld [vmem:[#allocation2 + $0x48] sm:$0xff]
        %v429 = vld [vmem:[#allocation2 + $0x50] sm:$0xff]
        %v430 = vld [vmem:[#allocation2 + $0x58] sm:$0xff]
        %v431 = vld [vmem:[#allocation2 + $0x60] sm:$0xff]
        %v432 = vld [vmem:[#allocation2 + $0x68] sm:$0xff]
        %v433 = vld [vmem:[#allocation2 + $0x70] sm:$0xff]
        %v434 = vld [vmem:[#allocation2 + $0x78] sm:$0xff]
        %v435 = vld [vmem:[%s341] sm:$0xff]
        %v436 = vld [vmem:[%s341 + $0x8] sm:$0xff]
        %v437 = vld [vmem:[%s341 + $0x10] sm:$0xff]
        %v438 = vld [vmem:[%s341 + $0x18] sm:$0xff]
        %v439 = vld [vmem:[%s341 + $0x20] sm:$0xff]
        %v440 = vld [vmem:[%s341 + $0x28] sm:$0xff]
        %v441 = vld [vmem:[%s341 + $0x30] sm:$0xff]
        %v442 = vld [vmem:[%s341 + $0x38] sm:$0xff]
        %v443 = vld [vmem:[%s341 + $0x40] sm:$0xff]
        %v444 = vld [vmem:[%s341 + $0x48] sm:$0xff]
        %v445 = vld [vmem:[%s341 + $0x50] sm:$0xff]
        %v446 = vld [vmem:[%s341 + $0x58] sm:$0xff]
        %v447 = vld [vmem:[%s341 + $0x60] sm:$0xff]
        %v448 = vld [vmem:[%s341 + $0x68] sm:$0xff]
        %v449 = vld [vmem:[%s341 + $0x70] sm:$0xff]
        %v450 = vld [vmem:[%s341 + $0x78] sm:$0xff]
        %v451 = vld [vmem:[%s341 + $0x80] sm:$0xff]
        %v452 = vld [vmem:[%s341 + $0x88] sm:$0xff]
        %v453 = vld [vmem:[%s341 + $0x90] sm:$0xff]
        %v454 = vld [vmem:[%s341 + $0x98] sm:$0xff]
        %v455 = vld [vmem:[%s341 + $0xa0] sm:$0xff]
        %v456 = vld [vmem:[%s341 + $0xa8] sm:$0xff]
        %v457 = vld [vmem:[%s341 + $0xb0] sm:$0xff]
        %v458 = vld [vmem:[%s341 + $0xb8] sm:$0xff]
        %v459 = vld [vmem:[%s341 + $0xc0] sm:$0xff]
        %v460 = vld [vmem:[%s341 + $0xc8] sm:$0xff]
        %v461 = vld [vmem:[%s341 + $0xd0] sm:$0xff]
        %v462 = vld [vmem:[%s341 + $0xd8] sm:$0xff]
        %v463 = vld [vmem:[%s341 + $0xe0] sm:$0xff]
        %v464 = vld [vmem:[%s341 + $0xe8] sm:$0xff]
        %v465 = vld [vmem:[%s341 + $0xf0] sm:$0xff]
        %v466 = vld [vmem:[%s341 + $0xf8] sm:$0xff]
        %v467 = vld [vmem:[%s341 + $0x100] sm:$0xff]
        %v468 = vld [vmem:[%s341 + $0x108] sm:$0xff]
        %v469 = vld [vmem:[%s341 + $0x110] sm:$0xff]
        %v470 = vld [vmem:[%s341 + $0x118] sm:$0xff]
        %v471 = vld [vmem:[%s341 + $0x120] sm:$0xff]
        %v472 = vld [vmem:[%s341 + $0x128] sm:$0xff]
        %v473 = vld [vmem:[%s341 + $0x130] sm:$0xff]
        %v474 = vld [vmem:[%s341 + $0x138] sm:$0xff]
        %v475 = vld [vmem:[%s341 + $0x140] sm:$0xff]
        %v476 = vld [vmem:[%s341 + $0x148] sm:$0xff]
        %v477 = vld [vmem:[%s341 + $0x150] sm:$0xff]
        %v478 = vld [vmem:[%s341 + $0x158] sm:$0xff]
        %v479 = vld [vmem:[%s341 + $0x160] sm:$0xff]
        %v480 = vld [vmem:[%s341 + $0x168] sm:$0xff]
        %v481 = vld [vmem:[%s341 + $0x170] sm:$0xff]
        %v482 = vld [vmem:[%s341 + $0x178] sm:$0xff]
        %v483 = vld [vmem:[%s341 + $0x180] sm:$0xff]
        %v484 = vld [vmem:[%s341 + $0x188] sm:$0xff]
        %v485 = vld [vmem:[%s341 + $0x190] sm:$0xff]
        %v486 = vld [vmem:[%s341 + $0x198] sm:$0xff]
        %v487 = vld [vmem:[%s341 + $0x1a0] sm:$0xff]
        %v488 = vld [vmem:[%s341 + $0x1a8] sm:$0xff]
        %v489 = vld [vmem:[%s341 + $0x1b0] sm:$0xff]
        %v490 = vld [vmem:[%s341 + $0x1b8] sm:$0xff]
        %v491 = vld [vmem:[%s341 + $0x1c0] sm:$0xff]
        %v492 = vld [vmem:[%s341 + $0x1c8] sm:$0xff]
        %v493 = vld [vmem:[%s341 + $0x1d0] sm:$0xff]
        %v494 = vld [vmem:[%s341 + $0x1d8] sm:$0xff]
        %v495 = vld [vmem:[%s341 + $0x1e0] sm:$0xff]
        %v496 = vld [vmem:[%s341 + $0x1e8] sm:$0xff]
        %v497 = vld [vmem:[%s341 + $0x1f0] sm:$0xff]
        %v498 = vld [vmem:[%s341 + $0x1f8] sm:$0xff]
        %v499 = vld [vmem:[%s385] sm:$0xff]
        %v500 = vld [vmem:[%s385 + $0x8] sm:$0xff]
        %v501 = vld [vmem:[%s385 + $0x10] sm:$0xff]
        %v502 = vld [vmem:[%s385 + $0x18] sm:$0xff]
        %v503 = vld [vmem:[%s385 + $0x20] sm:$0xff]
        %v504 = vld [vmem:[%s385 + $0x28] sm:$0xff]
        %v505 = vld [vmem:[%s385 + $0x30] sm:$0xff]
        %v506 = vld [vmem:[%s385 + $0x38] sm:$0xff]
        %v507 = vld [vmem:[%s385 + $0x40] sm:$0xff]
        %v508 = vld [vmem:[%s385 + $0x48] sm:$0xff]
        %v509 = vld [vmem:[%s385 + $0x50] sm:$0xff]
        %v510 = vld [vmem:[%s385 + $0x58] sm:$0xff]
        %v511 = vld [vmem:[%s385 + $0x60] sm:$0xff]
        %v512 = vld [vmem:[%s385 + $0x68] sm:$0xff]
        %v513 = vld [vmem:[%s385 + $0x70] sm:$0xff]
        %v514 = vld [vmem:[%s385 + $0x78] sm:$0xff]
        %v515 = vld [vmem:[%s385 + $0x80] sm:$0xff]
        %v516 = vld [vmem:[%s385 + $0x88] sm:$0xff]
        %v517 = vld [vmem:[%s385 + $0x90] sm:$0xff]
        %v518 = vld [vmem:[%s385 + $0x98] sm:$0xff]
        %v519 = vld [vmem:[%s385 + $0xa0] sm:$0xff]
        %v520 = vld [vmem:[%s385 + $0xa8] sm:$0xff]
        %v521 = vld [vmem:[%s385 + $0xb0] sm:$0xff]
        %v522 = vld [vmem:[%s385 + $0xb8] sm:$0xff]
        %v523 = vld [vmem:[%s385 + $0xc0] sm:$0xff]
        %v524 = vld [vmem:[%s385 + $0xc8] sm:$0xff]
        %v525 = vld [vmem:[%s385 + $0xd0] sm:$0xff]
        %v526 = vld [vmem:[%s385 + $0xd8] sm:$0xff]
        %v527 = vld [vmem:[%s385 + $0xe0] sm:$0xff]
        %v528 = vld [vmem:[%s385 + $0xe8] sm:$0xff]
        %v529 = vld [vmem:[%s385 + $0xf0] sm:$0xff]
        %v530 = vld [vmem:[%s385 + $0xf8] sm:$0xff]
        %v531 = vld [vmem:[%s385 + $0x100] sm:$0xff]
        %v532 = vld [vmem:[%s385 + $0x108] sm:$0xff]
        %v533 = vld [vmem:[%s385 + $0x110] sm:$0xff]
        %v534 = vld [vmem:[%s385 + $0x118] sm:$0xff]
        %v535 = vld [vmem:[%s385 + $0x120] sm:$0xff]
        %v536 = vld [vmem:[%s385 + $0x128] sm:$0xff]
        %v537 = vld [vmem:[%s385 + $0x130] sm:$0xff]
        %v538 = vld [vmem:[%s385 + $0x138] sm:$0xff]
        %v539 = vld [vmem:[%s385 + $0x140] sm:$0xff]
        %v540 = vld [vmem:[%s385 + $0x148] sm:$0xff]
        %v541 = vld [vmem:[%s385 + $0x150] sm:$0xff]
        %v542 = vld [vmem:[%s385 + $0x158] sm:$0xff]
        %v543 = vld [vmem:[%s385 + $0x160] sm:$0xff]
        %v544 = vld [vmem:[%s385 + $0x168] sm:$0xff]
        %v545 = vld [vmem:[%s385 + $0x170] sm:$0xff]
        %v546 = vld [vmem:[%s385 + $0x178] sm:$0xff]
        %v547 = vld [vmem:[%s385 + $0x180] sm:$0xff]
        %v548 = vld [vmem:[%s385 + $0x188] sm:$0xff]
        %v549 = vld [vmem:[%s385 + $0x190] sm:$0xff]
        %v550 = vld [vmem:[%s385 + $0x198] sm:$0xff]
        %v551 = vld [vmem:[%s385 + $0x1a0] sm:$0xff]
        %v552 = vld [vmem:[%s385 + $0x1a8] sm:$0xff]
        %v553 = vld [vmem:[%s385 + $0x1b0] sm:$0xff]
        %v554 = vld [vmem:[%s385 + $0x1b8] sm:$0xff]
        %v555 = vld [vmem:[%s385 + $0x1c0] sm:$0xff]
        %v556 = vld [vmem:[%s385 + $0x1c8] sm:$0xff]
        %v557 = vld [vmem:[%s385 + $0x1d0] sm:$0xff]
        %v558 = vld [vmem:[%s385 + $0x1d8] sm:$0xff]
        %v559 = vld [vmem:[%s385 + $0x1e0] sm:$0xff]
        %v560 = vld [vmem:[%s385 + $0x1e8] sm:$0xff]
        %v561 = vld [vmem:[%s385 + $0x1f0] sm:$0xff]
        %v562 = vld [vmem:[%s385 + $0x1f8] sm:$0xff]
        %563 = vmatpush.msra.mxu0 %v514
        %564 = vmatpush.msra.mxu0 %v513
        %565 = vmatpush.msra.mxu0 %v512
        %566 = vmatpush.msra.mxu0 %v511
        %567 = vmatpush.msra.mxu0 %v510
        %568 = vmatpush.msra.mxu0 %v509
        %569 = vmatpush.msra.mxu0 %v508
        %570 = vmatpush.msra.mxu0 %v507
        %571 = vmatpush.msra.mxu0 %v506
        %572 = vmatpush.msra.mxu0 %v505
        %573 = vmatpush.msra.mxu0 %v504
        %574 = vmatpush.msra.mxu0 %v503
        %575 = vmatpush.msra.mxu0 %v502
        %576 = vmatpush.msra.mxu0 %v501
        %577 = vmatpush.msra.mxu0 %v500
        %578 = vmatpush.msra.mxu0 %v499
        %579 = vmatmul.f32.gmra.mxu0 %v435
        %v580 = vpop.f32.mrf.mxu0
        %v581 = vadd.f32 0.0, %v580
        %582 = vmatmul.f32.gmra.mxu0 %v439
        %v583 = vpop.f32.mrf.mxu0
        %v584 = vadd.f32 0.0, %v583
        %585 = vmatmul.f32.gmra.mxu0 %v443
        %v586 = vpop.f32.mrf.mxu0
        %v587 = vadd.f32 0.0, %v586
        %588 = vmatmul.f32.gmra.mxu0 %v447
        %v589 = vpop.f32.mrf.mxu0
        %v590 = vadd.f32 0.0, %v589
        %591 = vmatmul.f32.gmra.mxu0 %v451
        %v592 = vpop.f32.mrf.mxu0
        %v593 = vadd.f32 0.0, %v592
        %594 = vmatmul.f32.gmra.mxu0 %v455
        %v595 = vpop.f32.mrf.mxu0
        %v596 = vadd.f32 0.0, %v595
        %597 = vmatmul.f32.gmra.mxu0 %v459
        %v598 = vpop.f32.mrf.mxu0
        %v599 = vadd.f32 0.0, %v598
        %600 = vmatmul.f32.gmra.mxu0 %v463
        %v601 = vpop.f32.mrf.mxu0
        %v602 = vadd.f32 0.0, %v601
        %603 = vmatmul.f32.gmra.mxu0 %v467
        %v604 = vpop.f32.mrf.mxu0
        %v605 = vadd.f32 0.0, %v604
        %606 = vmatmul.f32.gmra.mxu0 %v471
        %v607 = vpop.f32.mrf.mxu0
        %v608 = vadd.f32 0.0, %v607
        %609 = vmatmul.f32.gmra.mxu0 %v475
        %v610 = vpop.f32.mrf.mxu0
        %v611 = vadd.f32 0.0, %v610
        %612 = vmatmul.f32.gmra.mxu0 %v479
        %v613 = vpop.f32.mrf.mxu0
        %v614 = vadd.f32 0.0, %v613
        %615 = vmatmul.f32.gmra.mxu0 %v483
        %v616 = vpop.f32.mrf.mxu0
        %v617 = vadd.f32 0.0, %v616
        %618 = vmatmul.f32.gmra.mxu0 %v487
        %v619 = vpop.f32.mrf.mxu0
        %v620 = vadd.f32 0.0, %v619
        %621 = vmatmul.f32.gmra.mxu0 %v491
        %v622 = vpop.f32.mrf.mxu0
        %v623 = vadd.f32 0.0, %v622
        %624 = vmatmul.f32.gmra.mxu0 %v495
        %v625 = vpop.f32.mrf.mxu0
        %v626 = vadd.f32 0.0, %v625
        %627 = vdwg.mxu0
        %628 = vmatpush.msra.mxu0 %v530
        %629 = vmatpush.msra.mxu0 %v529
        %630 = vmatpush.msra.mxu0 %v528
        %631 = vmatpush.msra.mxu0 %v527
        %632 = vmatpush.msra.mxu0 %v526
        %633 = vmatpush.msra.mxu0 %v525
        %634 = vmatpush.msra.mxu0 %v524
        %635 = vmatpush.msra.mxu0 %v523
        %636 = vmatpush.msra.mxu0 %v522
        %637 = vmatpush.msra.mxu0 %v521
        %638 = vmatpush.msra.mxu0 %v520
        %639 = vmatpush.msra.mxu0 %v519
        %640 = vmatpush.msra.mxu0 %v518
        %641 = vmatpush.msra.mxu0 %v517
        %642 = vmatpush.msra.mxu0 %v516
        %643 = vmatpush.msra.mxu0 %v515
        %644 = vmatmul.f32.gmra.mxu0 %v436
        %v645 = vpop.f32.mrf.mxu0
        %v646 = vadd.f32 %v581, %v645
        %647 = vmatmul.f32.gmra.mxu0 %v440
        %v648 = vpop.f32.mrf.mxu0
        %v649 = vadd.f32 %v584, %v648
        %650 = vmatmul.f32.gmra.mxu0 %v444
        %v651 = vpop.f32.mrf.mxu0
        %v652 = vadd.f32 %v587, %v651
        %653 = vmatmul.f32.gmra.mxu0 %v448
        %v654 = vpop.f32.mrf.mxu0
        %v655 = vadd.f32 %v590, %v654
        %656 = vmatmul.f32.gmra.mxu0 %v452
        %v657 = vpop.f32.mrf.mxu0
        %v658 = vadd.f32 %v593, %v657
        %659 = vmatmul.f32.gmra.mxu0 %v456
        %v660 = vpop.f32.mrf.mxu0
        %v661 = vadd.f32 %v596, %v660
        %662 = vmatmul.f32.gmra.mxu0 %v460
        %v663 = vpop.f32.mrf.mxu0
        %v664 = vadd.f32 %v599, %v663
        %665 = vmatmul.f32.gmra.mxu0 %v464
        %v666 = vpop.f32.mrf.mxu0
        %v667 = vadd.f32 %v602, %v666
        %668 = vmatmul.f32.gmra.mxu0 %v468
        %v669 = vpop.f32.mrf.mxu0
        %v670 = vadd.f32 %v605, %v669
        %671 = vmatmul.f32.gmra.mxu0 %v472
        %v672 = vpop.f32.mrf.mxu0
        %v673 = vadd.f32 %v608, %v672
        %674 = vmatmul.f32.gmra.mxu0 %v476
        %v675 = vpop.f32.mrf.mxu0
        %v676 = vadd.f32 %v611, %v675
        %677 = vmatmul.f32.gmra.mxu0 %v480
        %v678 = vpop.f32.mrf.mxu0
        %v679 = vadd.f32 %v614, %v678
        %680 = vmatmul.f32.gmra.mxu0 %v484
        %v681 = vpop.f32.mrf.mxu0
        %v682 = vadd.f32 %v617, %v681
        %683 = vmatmul.f32.gmra.mxu0 %v488
        %v684 = vpop.f32.mrf.mxu0
        %v685 = vadd.f32 %v620, %v684
        %686 = vmatmul.f32.gmra.mxu0 %v492
        %v687 = vpop.f32.mrf.mxu0
        %v688 = vadd.f32 %v623, %v687
        %689 = vmatmul.f32.gmra.mxu0 %v496
        %v690 = vpop.f32.mrf.mxu0
        %v691 = vadd.f32 %v626, %v690
        %692 = vdwg.mxu0
        %693 = vmatpush.msra.mxu0 %v546
        %694 = vmatpush.msra.mxu0 %v545
        %695 = vmatpush.msra.mxu0 %v544
        %696 = vmatpush.msra.mxu0 %v543
        %697 = vmatpush.msra.mxu0 %v542
        %698 = vmatpush.msra.mxu0 %v541
        %699 = vmatpush.msra.mxu0 %v540
        %700 = vmatpush.msra.mxu0 %v539
        %701 = vmatpush.msra.mxu0 %v538
        %702 = vmatpush.msra.mxu0 %v537
        %703 = vmatpush.msra.mxu0 %v536
        %704 = vmatpush.msra.mxu0 %v535
        %705 = vmatpush.msra.mxu0 %v534
        %706 = vmatpush.msra.mxu0 %v533
        %707 = vmatpush.msra.mxu0 %v532
        %708 = vmatpush.msra.mxu0 %v531
        %709 = vmatmul.f32.gmra.mxu0 %v437
        %v710 = vpop.f32.mrf.mxu0
        %v711 = vadd.f32 %v646, %v710
        %712 = vmatmul.f32.gmra.mxu0 %v441
        %v713 = vpop.f32.mrf.mxu0
        %v714 = vadd.f32 %v649, %v713
        %715 = vmatmul.f32.gmra.mxu0 %v445
        %v716 = vpop.f32.mrf.mxu0
        %v717 = vadd.f32 %v652, %v716
        %718 = vmatmul.f32.gmra.mxu0 %v449
        %v719 = vpop.f32.mrf.mxu0
        %v720 = vadd.f32 %v655, %v719
        %721 = vmatmul.f32.gmra.mxu0 %v453
        %v722 = vpop.f32.mrf.mxu0
        %v723 = vadd.f32 %v658, %v722
        %724 = vmatmul.f32.gmra.mxu0 %v457
        %v725 = vpop.f32.mrf.mxu0
        %v726 = vadd.f32 %v661, %v725
        %727 = vmatmul.f32.gmra.mxu0 %v461
        %v728 = vpop.f32.mrf.mxu0
        %v729 = vadd.f32 %v664, %v728
        %730 = vmatmul.f32.gmra.mxu0 %v465
        %v731 = vpop.f32.mrf.mxu0
        %v732 = vadd.f32 %v667, %v731
        %733 = vmatmul.f32.gmra.mxu0 %v469
        %v734 = vpop.f32.mrf.mxu0
        %v735 = vadd.f32 %v670, %v734
        %736 = vmatmul.f32.gmra.mxu0 %v473
        %v737 = vpop.f32.mrf.mxu0
        %v738 = vadd.f32 %v673, %v737
        %739 = vmatmul.f32.gmra.mxu0 %v477
        %v740 = vpop.f32.mrf.mxu0
        %v741 = vadd.f32 %v676, %v740
        %742 = vmatmul.f32.gmra.mxu0 %v481
        %v743 = vpop.f32.mrf.mxu0
        %v744 = vadd.f32 %v679, %v743
        %745 = vmatmul.f32.gmra.mxu0 %v485
        %v746 = vpop.f32.mrf.mxu0
        %v747 = vadd.f32 %v682, %v746
        %748 = vmatmul.f32.gmra.mxu0 %v489
        %v749 = vpop.f32.mrf.mxu0
        %v750 = vadd.f32 %v685, %v749
        %751 = vmatmul.f32.gmra.mxu0 %v493
        %v752 = vpop.f32.mrf.mxu0
        %v753 = vadd.f32 %v688, %v752
        %754 = vmatmul.f32.gmra.mxu0 %v497
        %v755 = vpop.f32.mrf.mxu0
        %v756 = vadd.f32 %v691, %v755
        %757 = vdwg.mxu0
        %758 = vmatpush.msra.mxu0 %v562
        %759 = vmatpush.msra.mxu0 %v561
        %760 = vmatpush.msra.mxu0 %v560
        %761 = vmatpush.msra.mxu0 %v559
        %762 = vmatpush.msra.mxu0 %v558
        %763 = vmatpush.msra.mxu0 %v557
        %764 = vmatpush.msra.mxu0 %v556
        %765 = vmatpush.msra.mxu0 %v555
        %766 = vmatpush.msra.mxu0 %v554
        %767 = vmatpush.msra.mxu0 %v553
        %768 = vmatpush.msra.mxu0 %v552
        %769 = vmatpush.msra.mxu0 %v551
        %770 = vmatpush.msra.mxu0 %v550
        %771 = vmatpush.msra.mxu0 %v549
        %772 = vmatpush.msra.mxu0 %v548
        %773 = vmatpush.msra.mxu0 %v547
        %774 = vmatmul.f32.gmra.mxu0 %v438
        %v775 = vpop.f32.mrf.mxu0
        %v776 = vadd.f32 %v711, %v775
        %777 = vmatmul.f32.gmra.mxu0 %v442
        %v778 = vpop.f32.mrf.mxu0
        %v779 = vadd.f32 %v714, %v778
        %780 = vmatmul.f32.gmra.mxu0 %v446
        %v781 = vpop.f32.mrf.mxu0
        %v782 = vadd.f32 %v717, %v781
        %783 = vmatmul.f32.gmra.mxu0 %v450
        %v784 = vpop.f32.mrf.mxu0
        %v785 = vadd.f32 %v720, %v784
        %786 = vmatmul.f32.gmra.mxu0 %v454
        %v787 = vpop.f32.mrf.mxu0
        %v788 = vadd.f32 %v723, %v787
        %789 = vmatmul.f32.gmra.mxu0 %v458
        %v790 = vpop.f32.mrf.mxu0
        %v791 = vadd.f32 %v726, %v790
        %792 = vmatmul.f32.gmra.mxu0 %v462
        %v793 = vpop.f32.mrf.mxu0
        %v794 = vadd.f32 %v729, %v793
        %795 = vmatmul.f32.gmra.mxu0 %v466
        %v796 = vpop.f32.mrf.mxu0
        %v797 = vadd.f32 %v732, %v796
        %798 = vmatmul.f32.gmra.mxu0 %v470
        %v799 = vpop.f32.mrf.mxu0
        %v800 = vadd.f32 %v735, %v799
        %801 = vmatmul.f32.gmra.mxu0 %v474
        %v802 = vpop.f32.mrf.mxu0
        %v803 = vadd.f32 %v738, %v802
        %804 = vmatmul.f32.gmra.mxu0 %v478
        %v805 = vpop.f32.mrf.mxu0
        %v806 = vadd.f32 %v741, %v805
        %807 = vmatmul.f32.gmra.mxu0 %v482
        %v808 = vpop.f32.mrf.mxu0
        %v809 = vadd.f32 %v744, %v808
        %810 = vmatmul.f32.gmra.mxu0 %v486
        %v811 = vpop.f32.mrf.mxu0
        %v812 = vadd.f32 %v747, %v811
        %813 = vmatmul.f32.gmra.mxu0 %v490
        %v814 = vpop.f32.mrf.mxu0
        %v815 = vadd.f32 %v750, %v814
        %816 = vmatmul.f32.gmra.mxu0 %v494
        %v817 = vpop.f32.mrf.mxu0
        %v818 = vadd.f32 %v753, %v817
        %819 = vmatmul.f32.gmra.mxu0 %v498
        %v820 = vpop.f32.mrf.mxu0
        %v821 = vadd.f32 %v756, %v820
        %822 = vdwg.mxu0
        %v823 = vadd.f32 %v419, %v776
        %v824 = vadd.f32 %v420, %v779
        %v825 = vadd.f32 %v421, %v782
        %v826 = vadd.f32 %v422, %v785
        %v827 = vadd.f32 %v423, %v788
        %v828 = vadd.f32 %v424, %v791
        %v829 = vadd.f32 %v425, %v794
        %v830 = vadd.f32 %v426, %v797
        %v831 = vadd.f32 %v427, %v800
        %v832 = vadd.f32 %v428, %v803
        %v833 = vadd.f32 %v429, %v806
        %v834 = vadd.f32 %v430, %v809
        %v835 = vadd.f32 %v431, %v812
        %v836 = vadd.f32 %v432, %v815
        %v837 = vadd.f32 %v433, %v818
        %v838 = vadd.f32 %v434, %v821
        %839 = vst [vmem:[#allocation2] sm:$0xff] %v823
        %840 = vst [vmem:[#allocation2 + $0x8] sm:$0xff] %v824
        %841 = vst [vmem:[#allocation2 + $0x10] sm:$0xff] %v825
        %842 = vst [vmem:[#allocation2 + $0x18] sm:$0xff] %v826
        %843 = vst [vmem:[#allocation2 + $0x20] sm:$0xff] %v827
        %844 = vst [vmem:[#allocation2 + $0x28] sm:$0xff] %v828
        %845 = vst [vmem:[#allocation2 + $0x30] sm:$0xff] %v829
        %846 = vst [vmem:[#allocation2 + $0x38] sm:$0xff] %v830
        %847 = vst [vmem:[#allocation2 + $0x40] sm:$0xff] %v831
        %848 = vst [vmem:[#allocation2 + $0x48] sm:$0xff] %v832
        %849 = vst [vmem:[#allocation2 + $0x50] sm:$0xff] %v833
        %850 = vst [vmem:[#allocation2 + $0x58] sm:$0xff] %v834
        %851 = vst [vmem:[#allocation2 + $0x60] sm:$0xff] %v835
        %852 = vst [vmem:[#allocation2 + $0x68] sm:$0xff] %v836
        %853 = vst [vmem:[#allocation2 + $0x70] sm:$0xff] %v837
        %854 = vst [vmem:[#allocation2 + $0x78] sm:$0xff] %v838
        %p855 = scmp.eq.s32.totalorder %s21, 1
        // Predicated region
        $region60: #{cnn_encoder_forward.7} parent=50 // pred_check
          %p856 = pneg %p855
        $region61: #{cnn_encoder_forward.7} parent=50 // pred_check_branch
          %858 = sbr.rel (%p856) target = $region63
        $region62: #{cnn_encoder_forward.7} parent=50 // pred_region
          %v859 = vld [vmem:[#allocation2] sm:$0xff]
          %v860 = vld [vmem:[#allocation2 + $0x8] sm:$0xff]
          %v861 = vld [vmem:[#allocation2 + $0x10] sm:$0xff]
          %v862 = vld [vmem:[#allocation2 + $0x18] sm:$0xff]
          %v863 = vld [vmem:[#allocation2 + $0x20] sm:$0xff]
          %v864 = vld [vmem:[#allocation2 + $0x28] sm:$0xff]
          %v865 = vld [vmem:[#allocation2 + $0x30] sm:$0xff]
          %v866 = vld [vmem:[#allocation2 + $0x38] sm:$0xff]
          %v867 = vld [vmem:[#allocation2 + $0x40] sm:$0xff]
          %v868 = vld [vmem:[#allocation2 + $0x48] sm:$0xff]
          %v869 = vld [vmem:[#allocation2 + $0x50] sm:$0xff]
          %v870 = vld [vmem:[#allocation2 + $0x58] sm:$0xff]
          %v871 = vld [vmem:[#allocation2 + $0x60] sm:$0xff]
          %v872 = vld [vmem:[#allocation2 + $0x68] sm:$0xff]
          %v873 = vld [vmem:[#allocation2 + $0x70] sm:$0xff]
          %v874 = vld [vmem:[#allocation2 + $0x78] sm:$0xff]
          %v875 = vld [vmem:[%s389] sm:$0x1]
          %v877 = vperm.slane %v875, 0
          %v879 = vadd.f32 %v859, %v877
          %v880 = vadd.f32 %v860, %v877
          %v881 = vadd.f32 %v861, %v877
          %v882 = vadd.f32 %v862, %v877
          %v883 = vadd.f32 %v863, %v877
          %v884 = vadd.f32 %v864, %v877
          %v885 = vadd.f32 %v865, %v877
          %v886 = vadd.f32 %v866, %v877
          %v887 = vadd.f32 %v867, %v877
          %v888 = vadd.f32 %v868, %v877
          %v889 = vadd.f32 %v869, %v877
          %v890 = vadd.f32 %v870, %v877
          %v891 = vadd.f32 %v871, %v877
          %v892 = vadd.f32 %v872, %v877
          %v893 = vadd.f32 %v873, %v877
          %v894 = vadd.f32 %v874, %v877
          %v895 = vmax.f32 %v879, 0.0
          %v896 = vmax.f32 %v880, 0.0
          %v897 = vmax.f32 %v881, 0.0
          %v898 = vmax.f32 %v882, 0.0
          %v899 = vmax.f32 %v883, 0.0
          %v900 = vmax.f32 %v884, 0.0
          %v901 = vmax.f32 %v885, 0.0
          %v902 = vmax.f32 %v886, 0.0
          %v903 = vmax.f32 %v887, 0.0
          %v904 = vmax.f32 %v888, 0.0
          %v905 = vmax.f32 %v889, 0.0
          %v906 = vmax.f32 %v890, 0.0
          %v907 = vmax.f32 %v891, 0.0
          %v908 = vmax.f32 %v892, 0.0
          %v909 = vmax.f32 %v893, 0.0
          %v910 = vmax.f32 %v894, 0.0
          %911 = vst [vmem:[%s397] sm:$0xff] %v895
          %912 = vst [vmem:[%s397 + $0x8] sm:$0xff] %v896
          %913 = vst [vmem:[%s397 + $0x10] sm:$0xff] %v897
          %914 = vst [vmem:[%s397 + $0x18] sm:$0xff] %v898
          %915 = vst [vmem:[%s397 + $0x20] sm:$0xff] %v899
          %916 = vst [vmem:[%s397 + $0x28] sm:$0xff] %v900
          %917 = vst [vmem:[%s397 + $0x30] sm:$0xff] %v901
          %918 = vst [vmem:[%s397 + $0x38] sm:$0xff] %v902
          %919 = vst [vmem:[%s397 + $0x40] sm:$0xff] %v903
          %920 = vst [vmem:[%s397 + $0x48] sm:$0xff] %v904
          %921 = vst [vmem:[%s397 + $0x50] sm:$0xff] %v905
          %922 = vst [vmem:[%s397 + $0x58] sm:$0xff] %v906
          %923 = vst [vmem:[%s397 + $0x60] sm:$0xff] %v907
          %924 = vst [vmem:[%s397 + $0x68] sm:$0xff] %v908
          %925 = vst [vmem:[%s397 + $0x70] sm:$0xff] %v909
          %926 = vst [vmem:[%s397 + $0x78] sm:$0xff] %v910
        $region63: #{cnn_encoder_forward.7} parent=50 // pred_fallthru
          _
        %s927 = smul.u32 16, %s19
        %p928 = scmp.lt.s32.totalorder %s927, 15
        %s929 = scalar_select %p928, %s927, 15
        %p930 = scmp.lt.s32.totalorder %s20, 0
        %s931 = scalar_select %p930, %s20, 0
        %s932 = sadd.s32 %s931, %s929
        %s933 = smul.addr %s932, 8
        %s934 = scalar_lea.vmem %s3, %s933
        // Predicated region
        $region64: #{cnn_encoder_forward.7} parent=50 // pred_check
          %p935 = pneg %p135
        $region65: #{cnn_encoder_forward.7} parent=50 // pred_check_branch
          %937 = sbr.rel (%p935) target = $region67
        $region66: #{cnn_encoder_forward.7} parent=50 // pred_region
          %s938 = smul.u32 16, %s19
        $region67: #{cnn_encoder_forward.7} parent=50 // pred_fallthru
          _
        // Predicated region
        $region68: #{cnn_encoder_forward.7} parent=50 // pred_check
          %p939 = pneg %p135
        $region69: #{cnn_encoder_forward.7} parent=50 // pred_check_branch
          %941 = sbr.rel (%p939) target = $region71
        $region70: #{cnn_encoder_forward.7} parent=50 // pred_region
          %s942 = smul.u32 16, %s19
          %p943 = scmp.lt.s32.totalorder %s942, 15
          %s944 = scalar_select %p943, %s942, 15
          %p945 = scmp.lt.s32.totalorder %s20, 0
          %s946 = scalar_select %p945, %s20, 0
          %s947 = sadd.s32 %s946, %s944
          %s948 = smul.addr %s947, 8
          %s949 = scalar_lea.vmem %s3, %s948
        $region71: #{cnn_encoder_forward.7} parent=50 // pred_fallthru
          _
      $region51: #{cnn_encoder_forward.7} parent=5 // pred_fallthru
        _
      %p950 = scmp.le.s32.totalorder 2, %s9
      // Predicated region
      $region72: #{cnn_encoder_forward.7} parent=5 // pred_check
        %p951 = pneg %p950
      $region73: #{cnn_encoder_forward.7} parent=5 // pred_check_branch
        %953 = sbr.rel (%p951) target = $region75
      $region74: #{cnn_encoder_forward.7} parent=5 // pred_region
        %s954 = ssub.s32 %s9, 2
      $region75: #{cnn_encoder_forward.7} parent=5 // pred_fallthru
        _
    $region6: #{cnn_encoder_forward.7} parent=1 // loop_footer
      %s13 = sadd.s32 1, %s9
    $region7: #{cnn_encoder_forward.7} parent=1 // loop_footer_branch
      %8 = sbr.rel target = $region3
    $region8: #{cnn_encoder_forward.7} parent=1 // loop_exit
      _

// kernel: cnn_encoder_forward.8
$region0: #{cnn_encoder_forward.8}
  #allocation0 [shape = 'u32[]', space=smem, size = 0x4, offset = 0x4, fixed_abs, tag = 'smem constant byte address 0x4 - core index']
  #allocation1 [shape = 'u32[72,128]{1,0:T(1,128)}', space=vmem, size = 0x9000, scoped, tag = 'internal scratch']
  #allocation2 [shape = 'f32[32,256]{1,0:T(8,128)}', space=vmem, size = 0x8000, scoped, tag = 'scratch operand']
  %s0 = inlined_call_operand.vmem [shape: f32[32,2048], index: 0, kind: input, shape index: {}]
  %s1 = inlined_call_operand.vmem [shape: f32[2048,256], index: 1, kind: input, shape index: {}]
  %s2 = inlined_call_operand.vmem [shape: f32[1,256], index: 2, kind: input, shape index: {}]
  %s3 = inlined_call_operand.vmem [shape: f32[32,256], index: 3, kind: output, shape index: {}]
  %s4 = sld [smem:[#allocation0]]
  $region76: #{cnn_encoder_forward.8} parent=0
    _
  %s6 = ssub.s32 1, %s4
  %s7 = scalar_select 0, %s6, %s4
  $region1: #{cnn_encoder_forward.8} parent=0
    #allocation3 [shape = 'u8[131072]{0}', space=vmem, size = 0x20000, scoped, tag = 'input window, operand 0']
    loop: start=0, step=1, limit=6
    $region2: #{cnn_encoder_forward.8} parent=1 // loop_pre_header
      _
    $region3: #{cnn_encoder_forward.8} parent=1 // loop_header
      %s9 = sphi 0, %s13
      %p10 = scmp.ge.s32.totalorder %s9, 6
      %s16 = sphi 0, %s35
      %s17 = sphi 0, %s31
      %s18 = sphi 0, %s27
      %s19 = sphi 0, %s16
      %s20 = sphi 0, %s17
      %s21 = sphi 0, %s18
      %s22 = sphi 0, %s19
      %s23 = sphi 0, %s20
      %s24 = sphi 0, %s21
      %s40 = sphi 0, %s42
      %s43 = sphi 0, %s40
      %s44 = sphi 0, %s43
      %s60 = sphi 0, %s44
      %s68 = sphi 0, %s70
      %s71 = sphi 0, %s68
      %s72 = sphi 0, %s71
      %s88 = sphi 0, %s72
      %s94 = sphi 0, %s96
      %s97 = sphi 0, %s94
      %s98 = sphi 0, %s97
      %s114 = sphi 0, %s98
      %s122 = sphi 0, %s124
      %s125 = sphi 0, %s122
      %s126 = sphi 0, %s125
      %s142 = sphi 0, %s126
    $region4: #{cnn_encoder_forward.8} parent=1 // loop_header_branch
      %12 = sbr.rel (%p10) target = $region8
    $region5: #{cnn_encoder_forward.8} parent=1 // loop_body
      %s14 = ssub.s32 %s9, 1
      %s15 = ssub.s32 %s9, 2
      %s25 = sadd.s32 1, %s18
      %p26 = scmp.ge.s32.totalorder %s25, 4
      %s27 = scalar_select %p26, 0, %s25
      %s28 = sadd.s32 1, %s17
      %s29 = scalar_select %p26, %s28, %s17
      %p30 = scmp.ge.s32.totalorder %s29, 1
      %s31 = scalar_select %p30, 0, %s29
      %s32 = sadd.s32 1, %s16
      %s33 = scalar_select %p30, %s32, %s16
      %p34 = scmp.ge.s32.totalorder %s33, 1
      %s35 = scalar_select %p34, 0, %s33
      %s36 = ssub.s32 %s16, %s35
      %s37 = ssub.s32 %s18, %s27
      %s38 = sor.u32 %s36, %s37
      %p39 = scmp.eq.s32.totalorder %s38, 0
      %s41 = sadd.s32 %s40, 1
      %s42 = scalar_select %p39, %s40, %s41
      %p45 = pneg %p39
      %p46 = scmp.eq.s32.totalorder %s9, 3
      %p47 = por %p45, %p46
      %p48 = scmp.ne.s32.totalorder %s40, %s43
      %p49 = scmp.eq.s32.totalorder %s9, 0
      %p50 = por %p48, %p49
      %p51 = scmp.ne.s32.totalorder %s40, %s43
      %p52 = scmp.eq.s32.totalorder %s14, 3
      %p53 = por %p51, %p52
      %p54 = scmp.ne.s32.totalorder %s43, %s44
      %p55 = scmp.eq.s32.totalorder %s14, 0
      %p56 = por %p54, %p55
      %p57 = scmp.ne.s32.totalorder %s43, %s44
      %p58 = scmp.eq.s32.totalorder %s15, 3
      %p59 = por %p57, %p58
      %p61 = scmp.ne.s32.totalorder %s44, %s60
      %p62 = scmp.eq.s32.totalorder %s15, 0
      %p63 = por %p61, %p62
      %s64 = ssub.s32 %s18, %s27
      %s65 = ssub.s32 %s17, %s31
      %s66 = sor.u32 %s64, %s65
      %p67 = scmp.eq.s32.totalorder %s66, 0
      %s69 = sadd.s32 %s68, 1
      %s70 = scalar_select %p67, %s68, %s69
      %p73 = pneg %p67
      %p74 = scmp.eq.s32.totalorder %s9, 3
      %p75 = por %p73, %p74
      %p76 = scmp.ne.s32.totalorder %s68, %s71
      %p77 = scmp.eq.s32.totalorder %s9, 0
      %p78 = por %p76, %p77
      %p79 = scmp.ne.s32.totalorder %s68, %s71
      %p80 = scmp.eq.s32.totalorder %s14, 3
      %p81 = por %p79, %p80
      %p82 = scmp.ne.s32.totalorder %s71, %s72
      %p83 = scmp.eq.s32.totalorder %s14, 0
      %p84 = por %p82, %p83
      %p85 = scmp.ne.s32.totalorder %s71, %s72
      %p86 = scmp.eq.s32.totalorder %s15, 3
      %p87 = por %p85, %p86
      %p89 = scmp.ne.s32.totalorder %s72, %s88
      %p90 = scmp.eq.s32.totalorder %s15, 0
      %p91 = por %p89, %p90
      %s92 = ssub.s32 %s17, %s31
      %p93 = scmp.eq.s32.totalorder %s92, 0
      %s95 = sadd.s32 %s94, 1
      %s96 = scalar_select %p93, %s94, %s95
      %p99 = pneg %p93
      %p100 = scmp.eq.s32.totalorder %s9, 3
      %p101 = por %p99, %p100
      %p102 = scmp.ne.s32.totalorder %s94, %s97
      %p103 = scmp.eq.s32.totalorder %s9, 0
      %p104 = por %p102, %p103
      %p105 = scmp.ne.s32.totalorder %s94, %s97
      %p106 = scmp.eq.s32.totalorder %s14, 3
      %p107 = por %p105, %p106
      %p108 = scmp.ne.s32.totalorder %s97, %s98
      %p109 = scmp.eq.s32.totalorder %s14, 0
      %p110 = por %p108, %p109
      %p111 = scmp.ne.s32.totalorder %s97, %s98
      %p112 = scmp.eq.s32.totalorder %s15, 3
      %p113 = por %p111, %p112
      %p115 = scmp.ne.s32.totalorder %s98, %s114
      %p116 = scmp.eq.s32.totalorder %s15, 0
      %p117 = por %p115, %p116
      %s118 = ssub.s32 %s16, %s35
      %s119 = ssub.s32 %s17, %s31
      %s120 = sor.u32 %s118, %s119
      %p121 = scmp.eq.s32.totalorder %s120, 0
      %s123 = sadd.s32 %s122, 1
      %s124 = scalar_select %p121, %s122, %s123
      %p127 = pneg %p121
      %p128 = scmp.eq.s32.totalorder %s9, 3
      %p129 = por %p127, %p128
      %p130 = scmp.ne.s32.totalorder %s122, %s125
      %p131 = scmp.eq.s32.totalorder %s9, 0
      %p132 = por %p130, %p131
      %p133 = scmp.ne.s32.totalorder %s122, %s125
      %p134 = scmp.eq.s32.totalorder %s14, 3
      %p135 = por %p133, %p134
      %p136 = scmp.ne.s32.totalorder %s125, %s126
      %p137 = scmp.eq.s32.totalorder %s14, 0
      %p138 = por %p136, %p137
      %p139 = scmp.ne.s32.totalorder %s125, %s126
      %p140 = scmp.eq.s32.totalorder %s15, 3
      %p141 = por %p139, %p140
      %p143 = scmp.ne.s32.totalorder %s126, %s142
      %p144 = scmp.eq.s32.totalorder %s15, 0
      %p145 = por %p143, %p144
      %p146 = scmp.le.s32.totalorder 1, %s9
      %p147 = scmp.lt.s32.totalorder %s9, 5
      %p148 = pnand %p146, %p147
      %p149 = pneg %p148
      // Predicated region
      $region9: #{cnn_encoder_forward.8} parent=5 // pred_check
        _
      $region10: #{cnn_encoder_forward.8} parent=5 // pred_check_branch
        %151 = sbr.rel (%p148) target = $region12
      $region11: #{cnn_encoder_forward.8} parent=5 // pred_region
        %s152 = ssub.s32 %s9, 1
        // Predicated region
        $region13: #{cnn_encoder_forward.8} parent=11 // pred_check
          %p153 = pneg %p110
        $region14: #{cnn_encoder_forward.8} parent=11 // pred_check_branch
          %155 = sbr.rel (%p153) target = $region16
        $region15: #{cnn_encoder_forward.8} parent=11 // pred_region
          %s156 = smul.u32 2, %s20
          %p157 = scmp.lt.s32.totalorder %s156, 1
          %s158 = scalar_select %p157, %s156, 1
          %s159 = scalar_lea.vmem %s2, %s158
          %s160 = smul.u32 2, %s20
        $region16: #{cnn_encoder_forward.8} parent=11 // pred_fallthru
          _
      $region12: #{cnn_encoder_forward.8} parent=5 // pred_fallthru
        _
      %p161 = scmp.lt.s32.totalorder %s9, 4
      // Predicated region
      $region17: #{cnn_encoder_forward.8} parent=5 // pred_check
        %p162 = pneg %p161
      $region18: #{cnn_encoder_forward.8} parent=5 // pred_check_branch
        %164 = sbr.rel (%p162) target = $region20
      $region19: #{cnn_encoder_forward.8} parent=5 // pred_region
        // Predicated region
        $region21: #{cnn_encoder_forward.8} parent=19 // pred_check
          %p165 = pneg %p50
        $region22: #{cnn_encoder_forward.8} parent=19 // pred_check_branch
          %167 = sbr.rel (%p165) target = $region24
        $region23: #{cnn_encoder_forward.8} parent=19 // pred_region
          %s168 = sand.u32 %s40, 1
          %s169 = sand.u32 %s40, 1
          %s170 = smul.addr %s169, 128
          %s171 = scalar_lea.vmem [#allocation3], %s170
          %s172 = smul.u32 4, %s16
          %s173 = smul.u32 4, %s18
          %s174 = smul.addr %s172, 16
          %s175 = sadd.s32 %s173, %s174
          %s176 = smul.addr %s175, 8
          %s177 = scalar_lea.vmem %s0, %s176
          // Predicated region
          $region25: #{cnn_encoder_forward.8} parent=23 // pred_check
            _
          $region26: #{cnn_encoder_forward.8} parent=23 // pred_check_branch
            %179 = sbr.rel (0) target = $region28
          $region27: #{cnn_encoder_forward.8} parent=23 // pred_region
            // Predicated region
            $region29: #{cnn_encoder_forward.8} parent=27 // pred_check
              _
            $region30: #{cnn_encoder_forward.8} parent=27 // pred_check_branch
              %181 = sbr.rel (0) target = $region32
            $region31: #{cnn_encoder_forward.8} parent=27 // pred_region
              loop: start=0, step=1, limit=1
              $region33: #{cnn_encoder_forward.8} parent=31 // loop_pre_header
                _
              $region34: #{cnn_encoder_forward.8} parent=31 // loop_header
                %s183 = sphi 0, %s187
                %p184 = scmp.ge.s32.totalorder %s183, 1
                %s188 = sphi %s177, %s177
                %s189 = sphi %s171, %s171
              $region35: #{cnn_encoder_forward.8} parent=31 // loop_header_branch
                %186 = sbr.rel (%p184) target = $region39
              $region36: #{cnn_encoder_forward.8} parent=31 // loop_body
                %v190 = vld [vmem:[%s188] sm:$0xff]
                %191 = vst [vmem:[%s189] sm:$0xff] %v190
                %v192 = vld [vmem:[%s188 + $0x8] sm:$0xff]
                %193 = vst [vmem:[%s189 + $0x8] sm:$0xff] %v192
                %v194 = vld [vmem:[%s188 + $0x10] sm:$0xff]
                %195 = vst [vmem:[%s189 + $0x10] sm:$0xff] %v194
                %v196 = vld [vmem:[%s188 + $0x18] sm:$0xff]
                %197 = vst [vmem:[%s189 + $0x18] sm:$0xff] %v196
                %v198 = vld [vmem:[%s188 + $0x80] sm:$0xff]
                %199 = vst [vmem:[%s189 + $0x20] sm:$0xff] %v198
                %v200 = vld [vmem:[%s188 + $0x88] sm:$0xff]
                %201 = vst [vmem:[%s189 + $0x28] sm:$0xff] %v200
                %v202 = vld [vmem:[%s188 + $0x90] sm:$0xff]
                %203 = vst [vmem:[%s189 + $0x30] sm:$0xff] %v202
                %v204 = vld [vmem:[%s188 + $0x98] sm:$0xff]
                %205 = vst [vmem:[%s189 + $0x38] sm:$0xff] %v204
                %v206 = vld [vmem:[%s188 + $0x100] sm:$0xff]
                %207 = vst [vmem:[%s189 + $0x40] sm:$0xff] %v206
                %v208 = vld [vmem:[%s188 + $0x108] sm:$0xff]
                %209 = vst [vmem:[%s189 + $0x48] sm:$0xff] %v208
                %v210 = vld [vmem:[%s188 + $0x110] sm:$0xff]
                %211 = vst [vmem:[%s189 + $0x50] sm:$0xff] %v210
                %v212 = vld [vmem:[%s188 + $0x118] sm:$0xff]
                %213 = vst [vmem:[%s189 + $0x58] sm:$0xff] %v212
                %v214 = vld [vmem:[%s188 + $0x180] sm:$0xff]
                %215 = vst [vmem:[%s189 + $0x60] sm:$0xff] %v214
                %v216 = vld [vmem:[%s188 + $0x188] sm:$0xff]
                %217 = vst [vmem:[%s189 + $0x68] sm:$0xff] %v216
                %v218 = vld [vmem:[%s188 + $0x190] sm:$0xff]
                %219 = vst [vmem:[%s189 + $0x70] sm:$0xff] %v218
                %v220 = vld [vmem:[%s188 + $0x198] sm:$0xff]
                %221 = vst [vmem:[%s189 + $0x78] sm:$0xff] %v220
              $region37: #{cnn_encoder_forward.8} parent=31 // loop_footer
                %s187 = sadd.s32 1, %s183
              $region38: #{cnn_encoder_forward.8} parent=31 // loop_footer_branch
                %182 = sbr.rel target = $region34
              $region39: #{cnn_encoder_forward.8} parent=31 // loop_exit
                _
            $region32: #{cnn_encoder_forward.8} parent=27 // pred_fallthru
              _
            // Predicated region
            $region40: #{cnn_encoder_forward.8} parent=27 // pred_check
              _
            $region41: #{cnn_encoder_forward.8} parent=27 // pred_check_branch
              %223 = sbr.rel target = $region43
            $region42: #{cnn_encoder_forward.8} parent=27 // pred_region
              _
            $region43: #{cnn_encoder_forward.8} parent=27 // pred_fallthru
              _
          $region28: #{cnn_encoder_forward.8} parent=23 // pred_fallthru
            _
          %224 = vnop
        $region24: #{cnn_encoder_forward.8} parent=19 // pred_fallthru
          _
        // Predicated region
        $region44: #{cnn_encoder_forward.8} parent=19 // pred_check
          %p225 = pneg %p78
        $region45: #{cnn_encoder_forward.8} parent=19 // pred_check_branch
          %227 = sbr.rel (%p225) target = $region47
        $region46: #{cnn_encoder_forward.8} parent=19 // pred_region
          %s228 = smul.u32 64, %s18
          %s229 = smul.u32 2, %s17
          %p230 = scmp.lt.s32.totalorder %s228, 255
          %s231 = scalar_select %p230, %s228, 255
          %p232 = scmp.lt.s32.totalorder %s229, 1
          %s233 = scalar_select %p232, %s229, 1
          %s234 = smul.addr %s231, 2
          %s235 = sadd.s32 %s233, %s234
          %s236 = smul.addr %s235, 8
          %s237 = scalar_lea.vmem %s1, %s236
          %s238 = smul.u32 64, %s18
          %s239 = smul.u32 2, %s17
        $region47: #{cnn_encoder_forward.8} parent=19 // pred_fallthru
          _
      $region20: #{cnn_encoder_forward.8} parent=5 // pred_fallthru
        _
      %p240 = scmp.le.s32.totalorder 1, %s9
      %p241 = scmp.lt.s32.totalorder %s9, 5
      %p242 = pnand %p240, %p241
      %p243 = pneg %p242
      // Predicated region
      $region48: #{cnn_encoder_forward.8} parent=5 // pred_check
        _
      $region49: #{cnn_encoder_forward.8} parent=5 // pred_check_branch
        %245 = sbr.rel (%p242) target = $region51
      $region50: #{cnn_encoder_forward.8} parent=5 // pred_region
        %s246 = ssub.s32 %s9, 1
        %s247 = sand.u32 %s43, 1
        %s248 = sand.u32 %s43, 1
        %s249 = smul.addr %s248, 128
        %s250 = scalar_lea.vmem [#allocation3], %s249
        // Predicated region
        $region52: #{cnn_encoder_forward.8} parent=50 // pred_check
          %p251 = pneg %p56
        $region53: #{cnn_encoder_forward.8} parent=50 // pred_check_branch
          %253 = sbr.rel (%p251) target = $region55
        $region54: #{cnn_encoder_forward.8} parent=50 // pred_region
          _
        $region55: #{cnn_encoder_forward.8} parent=50 // pred_fallthru
          _
        %s254 = sand.u32 %s43, 1
        %s255 = sand.u32 %s43, 1
        %s256 = smul.addr %s255, 128
        %s257 = scalar_lea.vmem [#allocation3], %s256
        %p258 = pneg %p56
        %p259 = pneg %p53
        %s260 = smul.u32 64, %s21
        %s261 = smul.u32 2, %s20
        %p262 = scmp.lt.s32.totalorder %s260, 255
        %s263 = scalar_select %p262, %s260, 255
        %p264 = scmp.lt.s32.totalorder %s261, 1
        %s265 = scalar_select %p264, %s261, 1
        %s266 = smul.addr %s263, 2
        %s267 = sadd.s32 %s265, %s266
        %s268 = smul.addr %s267, 8
        %s269 = scalar_lea.vmem %s1, %s268
        %p270 = pneg %p84
        %p271 = pneg %p81
        %s272 = smul.u32 2, %s20
        %p273 = scmp.lt.s32.totalorder %s272, 1
        %s274 = scalar_select %p273, %s272, 1
        %s275 = scalar_lea.vmem %s2, %s274
        %p276 = pneg %p110
        %p277 = pneg %p107
        %p278 = pneg %p138
        %p279 = pneg %p135
        %s280 = smul.u32 4, %s19
        %s281 = smul.u32 2, %s20
        %p282 = scmp.lt.s32.totalorder %s280, 3
        %s283 = scalar_select %p282, %s280, 3
        %p284 = scmp.lt.s32.totalorder %s281, 1
        %s285 = scalar_select %p284, %s281, 1
        %s286 = smul.addr %s283, 2
        %s287 = sadd.s32 %s285, %s286
        %s288 = smul.addr %s287, 8
        %s289 = scalar_lea.vmem %s3, %s288
        %s290 = smul.u32 4, %s19
        %s291 = smul.u32 4, %s21
        %s292 = smul.u32 64, %s21
        %s293 = smul.u32 2, %s20
        %p294 = scmp.lt.s32.totalorder %s292, 255
        %s295 = scalar_select %p294, %s292, 255
        %p296 = scmp.lt.s32.totalorder %s293, 1
        %s297 = scalar_select %p296, %s293, 1
        %s298 = smul.addr %s295, 2
        %s299 = sadd.s32 %s297, %s298
        %s300 = smul.addr %s299, 8
        %s301 = scalar_lea.vmem %s1, %s300
        %s302 = smul.u32 64, %s21
        %s303 = smul.u32 2, %s20
        %s304 = smul.u32 2, %s20
        %p305 = scmp.lt.s32.totalorder %s304, 1
        %s306 = scalar_select %p305, %s304, 1
        %s307 = scalar_lea.vmem %s2, %s306
        %s308 = smul.u32 2, %s20
        %s309 = smul.u32 4, %s19
        %s310 = smul.u32 2, %s20
        %p311 = scmp.lt.s32.totalorder %s309, 3
        %s312 = scalar_select %p311, %s309, 3
        %p313 = scmp.lt.s32.totalorder %s310, 1
        %s314 = scalar_select %p313, %s310, 1
        %s315 = smul.addr %s312, 2
        %s316 = sadd.s32 %s314, %s315
        %s317 = smul.addr %s316, 8
        %s318 = scalar_lea.vmem %s3, %s317
        %s319 = smul.u32 4, %s19
        %s320 = smul.u32 2, %s20
        %p321 = scmp.eq.s32.totalorder %s21, 0
        // Predicated region
        $region56: #{cnn_encoder_forward.8} parent=50 // pred_check
          %p322 = pneg %p321
        $region57: #{cnn_encoder_forward.8} parent=50 // pred_check_branch
          %324 = sbr.rel (%p322) target = $region59
        $region58: #{cnn_encoder_forward.8} parent=50 // pred_region
          %325 = vst [vmem:[#allocation2] sm:$0xff] 0.0
          %326 = vst [vmem:[#allocation2 + $0x8] sm:$0xff] 0.0
          %327 = vst [vmem:[#allocation2 + $0x10] sm:$0xff] 0.0
          %328 = vst [vmem:[#allocation2 + $0x18] sm:$0xff] 0.0
          %329 = vst [vmem:[#allocation2 + $0x20] sm:$0xff] 0.0
          %330 = vst [vmem:[#allocation2 + $0x28] sm:$0xff] 0.0
          %331 = vst [vmem:[#allocation2 + $0x30] sm:$0xff] 0.0
          %332 = vst [vmem:[#allocation2 + $0x38] sm:$0xff] 0.0
        $region59: #{cnn_encoder_forward.8} parent=50 // pred_fallthru
          _
        %v333 = vld [vmem:[#allocation2] sm:$0xff]
        %v334 = vld [vmem:[#allocation2 + $0x8] sm:$0xff]
        %v335 = vld [vmem:[#allocation2 + $0x10] sm:$0xff]
        %v336 = vld [vmem:[#allocation2 + $0x18] sm:$0xff]
        %v337 = vld [vmem:[#allocation2 + $0x20] sm:$0xff]
        %v338 = vld [vmem:[#allocation2 + $0x28] sm:$0xff]
        %v339 = vld [vmem:[#allocation2 + $0x30] sm:$0xff]
        %v340 = vld [vmem:[#allocation2 + $0x38] sm:$0xff]
        %v341 = vld [vmem:[%s250] sm:$0xff]
        %v342 = vld [vmem:[%s250 + $0x8] sm:$0xff]
        %v343 = vld [vmem:[%s250 + $0x10] sm:$0xff]
        %v344 = vld [vmem:[%s250 + $0x18] sm:$0xff]
        %v345 = vld [vmem:[%s250 + $0x20] sm:$0xff]
        %v346 = vld [vmem:[%s250 + $0x28] sm:$0xff]
        %v347 = vld [vmem:[%s250 + $0x30] sm:$0xff]
        %v348 = vld [vmem:[%s250 + $0x38] sm:$0xff]
        %v349 = vld [vmem:[%s250 + $0x40] sm:$0xff]
        %v350 = vld [vmem:[%s250 + $0x48] sm:$0xff]
        %v351 = vld [vmem:[%s250 + $0x50] sm:$0xff]
        %v352 = vld [vmem:[%s250 + $0x58] sm:$0xff]
        %v353 = vld [vmem:[%s250 + $0x60] sm:$0xff]
        %v354 = vld [vmem:[%s250 + $0x68] sm:$0xff]
        %v355 = vld [vmem:[%s250 + $0x70] sm:$0xff]
        %v356 = vld [vmem:[%s250 + $0x78] sm:$0xff]
        %v357 = vld [vmem:[%s301] sm:$0xff]
        %v358 = vld [vmem:[%s301 + $0x8] sm:$0xff]
        %v359 = vld [vmem:[%s301 + $0x10] sm:$0xff]
        %v360 = vld [vmem:[%s301 + $0x18] sm:$0xff]
        %v361 = vld [vmem:[%s301 + $0x20] sm:$0xff]
        %v362 = vld [vmem:[%s301 + $0x28] sm:$0xff]
        %v363 = vld [vmem:[%s301 + $0x30] sm:$0xff]
        %v364 = vld [vmem:[%s301 + $0x38] sm:$0xff]
        %v365 = vld [vmem:[%s301 + $0x40] sm:$0xff]
        %v366 = vld [vmem:[%s301 + $0x48] sm:$0xff]
        %v367 = vld [vmem:[%s301 + $0x50] sm:$0xff]
        %v368 = vld [vmem:[%s301 + $0x58] sm:$0xff]
        %v369 = vld [vmem:[%s301 + $0x60] sm:$0xff]
        %v370 = vld [vmem:[%s301 + $0x68] sm:$0xff]
        %v371 = vld [vmem:[%s301 + $0x70] sm:$0xff]
        %v372 = vld [vmem:[%s301 + $0x78] sm:$0xff]
        %v373 = vld [vmem:[%s301 + $0x80] sm:$0xff]
        %v374 = vld [vmem:[%s301 + $0x88] sm:$0xff]
        %v375 = vld [vmem:[%s301 + $0x90] sm:$0xff]
        %v376 = vld [vmem:[%s301 + $0x98] sm:$0xff]
        %v377 = vld [vmem:[%s301 + $0xa0] sm:$0xff]
        %v378 = vld [vmem:[%s301 + $0xa8] sm:$0xff]
        %v379 = vld [vmem:[%s301 + $0xb0] sm:$0xff]
        %v380 = vld [vmem:[%s301 + $0xb8] sm:$0xff]
        %v381 = vld [vmem:[%s301 + $0xc0] sm:$0xff]
        %v382 = vld [vmem:[%s301 + $0xc8] sm:$0xff]
        %v383 = vld [vmem:[%s301 + $0xd0] sm:$0xff]
        %v384 = vld [vmem:[%s301 + $0xd8] sm:$0xff]
        %v385 = vld [vmem:[%s301 + $0xe0] sm:$0xff]
        %v386 = vld [vmem:[%s301 + $0xe8] sm:$0xff]
        %v387 = vld [vmem:[%s301 + $0xf0] sm:$0xff]
        %v388 = vld [vmem:[%s301 + $0xf8] sm:$0xff]
        %v389 = vld [vmem:[%s301 + $0x100] sm:$0xff]
        %v390 = vld [vmem:[%s301 + $0x108] sm:$0xff]
        %v391 = vld [vmem:[%s301 + $0x110] sm:$0xff]
        %v392 = vld [vmem:[%s301 + $0x118] sm:$0xff]
        %v393 = vld [vmem:[%s301 + $0x120] sm:$0xff]
        %v394 = vld [vmem:[%s301 + $0x128] sm:$0xff]
        %v395 = vld [vmem:[%s301 + $0x130] sm:$0xff]
        %v396 = vld [vmem:[%s301 + $0x138] sm:$0xff]
        %v397 = vld [vmem:[%s301 + $0x140] sm:$0xff]
        %v398 = vld [vmem:[%s301 + $0x148] sm:$0xff]
        %v399 = vld [vmem:[%s301 + $0x150] sm:$0xff]
        %v400 = vld [vmem:[%s301 + $0x158] sm:$0xff]
        %v401 = vld [vmem:[%s301 + $0x160] sm:$0xff]
        %v402 = vld [vmem:[%s301 + $0x168] sm:$0xff]
        %v403 = vld [vmem:[%s301 + $0x170] sm:$0xff]
        %v404 = vld [vmem:[%s301 + $0x178] sm:$0xff]
        %v405 = vld [vmem:[%s301 + $0x180] sm:$0xff]
        %v406 = vld [vmem:[%s301 + $0x188] sm:$0xff]
        %v407 = vld [vmem:[%s301 + $0x190] sm:$0xff]
        %v408 = vld [vmem:[%s301 + $0x198] sm:$0xff]
        %v409 = vld [vmem:[%s301 + $0x1a0] sm:$0xff]
        %v410 = vld [vmem:[%s301 + $0x1a8] sm:$0xff]
        %v411 = vld [vmem:[%s301 + $0x1b0] sm:$0xff]
        %v412 = vld [vmem:[%s301 + $0x1b8] sm:$0xff]
        %v413 = vld [vmem:[%s301 + $0x1c0] sm:$0xff]
        %v414 = vld [vmem:[%s301 + $0x1c8] sm:$0xff]
        %v415 = vld [vmem:[%s301 + $0x1d0] sm:$0xff]
        %v416 = vld [vmem:[%s301 + $0x1d8] sm:$0xff]
        %v417 = vld [vmem:[%s301 + $0x1e0] sm:$0xff]
        %v418 = vld [vmem:[%s301 + $0x1e8] sm:$0xff]
        %v419 = vld [vmem:[%s301 + $0x1f0] sm:$0xff]
        %v420 = vld [vmem:[%s301 + $0x1f8] sm:$0xff]
        %v421 = vld [vmem:[%s301 + $0x200] sm:$0xff]
        %v422 = vld [vmem:[%s301 + $0x208] sm:$0xff]
        %v423 = vld [vmem:[%s301 + $0x210] sm:$0xff]
        %v424 = vld [vmem:[%s301 + $0x218] sm:$0xff]
        %v425 = vld [vmem:[%s301 + $0x220] sm:$0xff]
        %v426 = vld [vmem:[%s301 + $0x228] sm:$0xff]
        %v427 = vld [vmem:[%s301 + $0x230] sm:$0xff]
        %v428 = vld [vmem:[%s301 + $0x238] sm:$0xff]
        %v429 = vld [vmem:[%s301 + $0x240] sm:$0xff]
        %v430 = vld [vmem:[%s301 + $0x248] sm:$0xff]
        %v431 = vld [vmem:[%s301 + $0x250] sm:$0xff]
        %v432 = vld [vmem:[%s301 + $0x258] sm:$0xff]
        %v433 = vld [vmem:[%s301 + $0x260] sm:$0xff]
        %v434 = vld [vmem:[%s301 + $0x268] sm:$0xff]
        %v435 = vld [vmem:[%s301 + $0x270] sm:$0xff]
        %v436 = vld [vmem:[%s301 + $0x278] sm:$0xff]
        %v437 = vld [vmem:[%s301 + $0x280] sm:$0xff]
        %v438 = vld [vmem:[%s301 + $0x288] sm:$0xff]
        %v439 = vld [vmem:[%s301 + $0x290] sm:$0xff]
        %v440 = vld [vmem:[%s301 + $0x298] sm:$0xff]
        %v441 = vld [vmem:[%s301 + $0x2a0] sm:$0xff]
        %v442 = vld [vmem:[%s301 + $0x2a8] sm:$0xff]
        %v443 = vld [vmem:[%s301 + $0x2b0] sm:$0xff]
        %v444 = vld [vmem:[%s301 + $0x2b8] sm:$0xff]
        %v445 = vld [vmem:[%s301 + $0x2c0] sm:$0xff]
        %v446 = vld [vmem:[%s301 + $0x2c8] sm:$0xff]
        %v447 = vld [vmem:[%s301 + $0x2d0] sm:$0xff]
        %v448 = vld [vmem:[%s301 + $0x2d8] sm:$0xff]
        %v449 = vld [vmem:[%s301 + $0x2e0] sm:$0xff]
        %v450 = vld [vmem:[%s301 + $0x2e8] sm:$0xff]
        %v451 = vld [vmem:[%s301 + $0x2f0] sm:$0xff]
        %v452 = vld [vmem:[%s301 + $0x2f8] sm:$0xff]
        %v453 = vld [vmem:[%s301 + $0x300] sm:$0xff]
        %v454 = vld [vmem:[%s301 + $0x308] sm:$0xff]
        %v455 = vld [vmem:[%s301 + $0x310] sm:$0xff]
        %v456 = vld [vmem:[%s301 + $0x318] sm:$0xff]
        %v457 = vld [vmem:[%s301 + $0x320] sm:$0xff]
        %v458 = vld [vmem:[%s301 + $0x328] sm:$0xff]
        %v459 = vld [vmem:[%s301 + $0x330] sm:$0xff]
        %v460 = vld [vmem:[%s301 + $0x338] sm:$0xff]
        %v461 = vld [vmem:[%s301 + $0x340] sm:$0xff]
        %v462 = vld [vmem:[%s301 + $0x348] sm:$0xff]
        %v463 = vld [vmem:[%s301 + $0x350] sm:$0xff]
        %v464 = vld [vmem:[%s301 + $0x358] sm:$0xff]
        %v465 = vld [vmem:[%s301 + $0x360] sm:$0xff]
        %v466 = vld [vmem:[%s301 + $0x368] sm:$0xff]
        %v467 = vld [vmem:[%s301 + $0x370] sm:$0xff]
        %v468 = vld [vmem:[%s301 + $0x378] sm:$0xff]
        %v469 = vld [vmem:[%s301 + $0x380] sm:$0xff]
        %v470 = vld [vmem:[%s301 + $0x388] sm:$0xff]
        %v471 = vld [vmem:[%s301 + $0x390] sm:$0xff]
        %v472 = vld [vmem:[%s301 + $0x398] sm:$0xff]
        %v473 = vld [vmem:[%s301 + $0x3a0] sm:$0xff]
        %v474 = vld [vmem:[%s301 + $0x3a8] sm:$0xff]
        %v475 = vld [vmem:[%s301 + $0x3b0] sm:$0xff]
        %v476 = vld [vmem:[%s301 + $0x3b8] sm:$0xff]
        %v477 = vld [vmem:[%s301 + $0x3c0] sm:$0xff]
        %v478 = vld [vmem:[%s301 + $0x3c8] sm:$0xff]
        %v479 = vld [vmem:[%s301 + $0x3d0] sm:$0xff]
        %v480 = vld [vmem:[%s301 + $0x3d8] sm:$0xff]
        %v481 = vld [vmem:[%s301 + $0x3e0] sm:$0xff]
        %v482 = vld [vmem:[%s301 + $0x3e8] sm:$0xff]
        %v483 = vld [vmem:[%s301 + $0x3f0] sm:$0xff]
        %v484 = vld [vmem:[%s301 + $0x3f8] sm:$0xff]
        %485 = vmatpush.msra.mxu0 %v387
        %486 = vmatpush.msra.mxu0 %v385
        %487 = vmatpush.msra.mxu0 %v383
        %488 = vmatpush.msra.mxu0 %v381
        %489 = vmatpush.msra.mxu0 %v379
        %490 = vmatpush.msra.mxu0 %v377
        %491 = vmatpush.msra.mxu0 %v375
        %492 = vmatpush.msra.mxu0 %v373
        %493 = vmatpush.msra.mxu0 %v371
        %494 = vmatpush.msra.mxu0 %v369
        %495 = vmatpush.msra.mxu0 %v367
        %496 = vmatpush.msra.mxu0 %v365
        %497 = vmatpush.msra.mxu0 %v363
        %498 = vmatpush.msra.mxu0 %v361
        %499 = vmatpush.msra.mxu0 %v359
        %500 = vmatpush.msra.mxu0 %v357
        %501 = vmatmul.f32.gmra.mxu0 %v341
        %v502 = vpop.f32.mrf.mxu0
        %v503 = vadd.f32 0.0, %v502
        %504 = vmatmul.f32.gmra.mxu0 %v345
        %v505 = vpop.f32.mrf.mxu0
        %v506 = vadd.f32 0.0, %v505
        %507 = vmatmul.f32.gmra.mxu0 %v349
        %v508 = vpop.f32.mrf.mxu0
        %v509 = vadd.f32 0.0, %v508
        %510 = vmatmul.f32.gmra.mxu0 %v353
        %v511 = vpop.f32.mrf.mxu0
        %v512 = vadd.f32 0.0, %v511
        %513 = vdwg.mxu0
        %514 = vmatpush.msra.mxu0 %v419
        %515 = vmatpush.msra.mxu0 %v417
        %516 = vmatpush.msra.mxu0 %v415
        %517 = vmatpush.msra.mxu0 %v413
        %518 = vmatpush.msra.mxu0 %v411
        %519 = vmatpush.msra.mxu0 %v409
        %520 = vmatpush.msra.mxu0 %v407
        %521 = vmatpush.msra.mxu0 %v405
        %522 = vmatpush.msra.mxu0 %v403
        %523 = vmatpush.msra.mxu0 %v401
        %524 = vmatpush.msra.mxu0 %v399
        %525 = vmatpush.msra.mxu0 %v397
        %526 = vmatpush.msra.mxu0 %v395
        %527 = vmatpush.msra.mxu0 %v393
        %528 = vmatpush.msra.mxu0 %v391
        %529 = vmatpush.msra.mxu0 %v389
        %530 = vmatmul.f32.gmra.mxu0 %v342
        %v531 = vpop.f32.mrf.mxu0
        %v532 = vadd.f32 %v503, %v531
        %533 = vmatmul.f32.gmra.mxu0 %v346
        %v534 = vpop.f32.mrf.mxu0
        %v535 = vadd.f32 %v506, %v534
        %536 = vmatmul.f32.gmra.mxu0 %v350
        %v537 = vpop.f32.mrf.mxu0
        %v538 = vadd.f32 %v509, %v537
        %539 = vmatmul.f32.gmra.mxu0 %v354
        %v540 = vpop.f32.mrf.mxu0
        %v541 = vadd.f32 %v512, %v540
        %542 = vdwg.mxu0
        %543 = vmatpush.msra.mxu0 %v451
        %544 = vmatpush.msra.mxu0 %v449
        %545 = vmatpush.msra.mxu0 %v447
        %546 = vmatpush.msra.mxu0 %v445
        %547 = vmatpush.msra.mxu0 %v443
        %548 = vmatpush.msra.mxu0 %v441
        %549 = vmatpush.msra.mxu0 %v439
        %550 = vmatpush.msra.mxu0 %v437
        %551 = vmatpush.msra.mxu0 %v435
        %552 = vmatpush.msra.mxu0 %v433
        %553 = vmatpush.msra.mxu0 %v431
        %554 = vmatpush.msra.mxu0 %v429
        %555 = vmatpush.msra.mxu0 %v427
        %556 = vmatpush.msra.mxu0 %v425
        %557 = vmatpush.msra.mxu0 %v423
        %558 = vmatpush.msra.mxu0 %v421
        %559 = vmatmul.f32.gmra.mxu0 %v343
        %v560 = vpop.f32.mrf.mxu0
        %v561 = vadd.f32 %v532, %v560
        %562 = vmatmul.f32.gmra.mxu0 %v347
        %v563 = vpop.f32.mrf.mxu0
        %v564 = vadd.f32 %v535, %v563
        %565 = vmatmul.f32.gmra.mxu0 %v351
        %v566 = vpop.f32.mrf.mxu0
        %v567 = vadd.f32 %v538, %v566
        %568 = vmatmul.f32.gmra.mxu0 %v355
        %v569 = vpop.f32.mrf.mxu0
        %v570 = vadd.f32 %v541, %v569
        %571 = vdwg.mxu0
        %572 = vmatpush.msra.mxu0 %v483
        %573 = vmatpush.msra.mxu0 %v481
        %574 = vmatpush.msra.mxu0 %v479
        %575 = vmatpush.msra.mxu0 %v477
        %576 = vmatpush.msra.mxu0 %v475
        %577 = vmatpush.msra.mxu0 %v473
        %578 = vmatpush.msra.mxu0 %v471
        %579 = vmatpush.msra.mxu0 %v469
        %580 = vmatpush.msra.mxu0 %v467
        %581 = vmatpush.msra.mxu0 %v465
        %582 = vmatpush.msra.mxu0 %v463
        %583 = vmatpush.msra.mxu0 %v461
        %584 = vmatpush.msra.mxu0 %v459
        %585 = vmatpush.msra.mxu0 %v457
        %586 = vmatpush.msra.mxu0 %v455
        %587 = vmatpush.msra.mxu0 %v453
        %588 = vmatmul.f32.gmra.mxu0 %v344
        %v589 = vpop.f32.mrf.mxu0
        %v590 = vadd.f32 %v561, %v589
        %591 = vmatmul.f32.gmra.mxu0 %v348
        %v592 = vpop.f32.mrf.mxu0
        %v593 = vadd.f32 %v564, %v592
        %594 = vmatmul.f32.gmra.mxu0 %v352
        %v595 = vpop.f32.mrf.mxu0
        %v596 = vadd.f32 %v567, %v595
        %597 = vmatmul.f32.gmra.mxu0 %v356
        %v598 = vpop.f32.mrf.mxu0
        %v599 = vadd.f32 %v570, %v598
        %600 = vdwg.mxu0
        %601 = vmatpush.msra.mxu0 %v388
        %602 = vmatpush.msra.mxu0 %v386
        %603 = vmatpush.msra.mxu0 %v384
        %604 = vmatpush.msra.mxu0 %v382
        %605 = vmatpush.msra.mxu0 %v380
        %606 = vmatpush.msra.mxu0 %v378
        %607 = vmatpush.msra.mxu0 %v376
        %608 = vmatpush.msra.mxu0 %v374
        %609 = vmatpush.msra.mxu0 %v372
        %610 = vmatpush.msra.mxu0 %v370
        %611 = vmatpush.msra.mxu0 %v368
        %612 = vmatpush.msra.mxu0 %v366
        %613 = vmatpush.msra.mxu0 %v364
        %614 = vmatpush.msra.mxu0 %v362
        %615 = vmatpush.msra.mxu0 %v360
        %616 = vmatpush.msra.mxu0 %v358
        %617 = vmatmul.f32.gmra.mxu0 %v341
        %v618 = vpop.f32.mrf.mxu0
        %v619 = vadd.f32 0.0, %v618
        %620 = vmatmul.f32.gmra.mxu0 %v345
        %v621 = vpop.f32.mrf.mxu0
        %v622 = vadd.f32 0.0, %v621
        %623 = vmatmul.f32.gmra.mxu0 %v349
        %v624 = vpop.f32.mrf.mxu0
        %v625 = vadd.f32 0.0, %v624
        %626 = vmatmul.f32.gmra.mxu0 %v353
        %v627 = vpop.f32.mrf.mxu0
        %v628 = vadd.f32 0.0, %v627
        %629 = vdwg.mxu0
        %630 = vmatpush.msra.mxu0 %v420
        %631 = vmatpush.msra.mxu0 %v418
        %632 = vmatpush.msra.mxu0 %v416
        %633 = vmatpush.msra.mxu0 %v414
        %634 = vmatpush.msra.mxu0 %v412
        %635 = vmatpush.msra.mxu0 %v410
        %636 = vmatpush.msra.mxu0 %v408
        %637 = vmatpush.msra.mxu0 %v406
        %638 = vmatpush.msra.mxu0 %v404
        %639 = vmatpush.msra.mxu0 %v402
        %640 = vmatpush.msra.mxu0 %v400
        %641 = vmatpush.msra.mxu0 %v398
        %642 = vmatpush.msra.mxu0 %v396
        %643 = vmatpush.msra.mxu0 %v394
        %644 = vmatpush.msra.mxu0 %v392
        %645 = vmatpush.msra.mxu0 %v390
        %646 = vmatmul.f32.gmra.mxu0 %v342
        %v647 = vpop.f32.mrf.mxu0
        %v648 = vadd.f32 %v619, %v647
        %649 = vmatmul.f32.gmra.mxu0 %v346
        %v650 = vpop.f32.mrf.mxu0
        %v651 = vadd.f32 %v622, %v650
        %652 = vmatmul.f32.gmra.mxu0 %v350
        %v653 = vpop.f32.mrf.mxu0
        %v654 = vadd.f32 %v625, %v653
        %655 = vmatmul.f32.gmra.mxu0 %v354
        %v656 = vpop.f32.mrf.mxu0
        %v657 = vadd.f32 %v628, %v656
        %658 = vdwg.mxu0
        %659 = vmatpush.msra.mxu0 %v452
        %660 = vmatpush.msra.mxu0 %v450
        %661 = vmatpush.msra.mxu0 %v448
        %662 = vmatpush.msra.mxu0 %v446
        %663 = vmatpush.msra.mxu0 %v444
        %664 = vmatpush.msra.mxu0 %v442
        %665 = vmatpush.msra.mxu0 %v440
        %666 = vmatpush.msra.mxu0 %v438
        %667 = vmatpush.msra.mxu0 %v436
        %668 = vmatpush.msra.mxu0 %v434
        %669 = vmatpush.msra.mxu0 %v432
        %670 = vmatpush.msra.mxu0 %v430
        %671 = vmatpush.msra.mxu0 %v428
        %672 = vmatpush.msra.mxu0 %v426
        %673 = vmatpush.msra.mxu0 %v424
        %674 = vmatpush.msra.mxu0 %v422
        %675 = vmatmul.f32.gmra.mxu0 %v343
        %v676 = vpop.f32.mrf.mxu0
        %v677 = vadd.f32 %v648, %v676
        %678 = vmatmul.f32.gmra.mxu0 %v347
        %v679 = vpop.f32.mrf.mxu0
        %v680 = vadd.f32 %v651, %v679
        %681 = vmatmul.f32.gmra.mxu0 %v351
        %v682 = vpop.f32.mrf.mxu0
        %v683 = vadd.f32 %v654, %v682
        %684 = vmatmul.f32.gmra.mxu0 %v355
        %v685 = vpop.f32.mrf.mxu0
        %v686 = vadd.f32 %v657, %v685
        %687 = vdwg.mxu0
        %688 = vmatpush.msra.mxu0 %v484
        %689 = vmatpush.msra.mxu0 %v482
        %690 = vmatpush.msra.mxu0 %v480
        %691 = vmatpush.msra.mxu0 %v478
        %692 = vmatpush.msra.mxu0 %v476
        %693 = vmatpush.msra.mxu0 %v474
        %694 = vmatpush.msra.mxu0 %v472
        %695 = vmatpush.msra.mxu0 %v470
        %696 = vmatpush.msra.mxu0 %v468
        %697 = vmatpush.msra.mxu0 %v466
        %698 = vmatpush.msra.mxu0 %v464
        %699 = vmatpush.msra.mxu0 %v462
        %700 = vmatpush.msra.mxu0 %v460
        %701 = vmatpush.msra.mxu0 %v458
        %702 = vmatpush.msra.mxu0 %v456
        %703 = vmatpush.msra.mxu0 %v454
        %704 = vmatmul.f32.gmra.mxu0 %v344
        %v705 = vpop.f32.mrf.mxu0
        %v706 = vadd.f32 %v677, %v705
        %707 = vmatmul.f32.gmra.mxu0 %v348
        %v708 = vpop.f32.mrf.mxu0
        %v709 = vadd.f32 %v680, %v708
        %710 = vmatmul.f32.gmra.mxu0 %v352
        %v711 = vpop.f32.mrf.mxu0
        %v712 = vadd.f32 %v683, %v711
        %713 = vmatmul.f32.gmra.mxu0 %v356
        %v714 = vpop.f32.mrf.mxu0
        %v715 = vadd.f32 %v686, %v714
        %716 = vdwg.mxu0
        %v717 = vadd.f32 %v333, %v590
        %v718 = vadd.f32 %v334, %v706
        %v719 = vadd.f32 %v335, %v593
        %v720 = vadd.f32 %v336, %v709
        %v721 = vadd.f32 %v337, %v596
        %v722 = vadd.f32 %v338, %v712
        %v723 = vadd.f32 %v339, %v599
        %v724 = vadd.f32 %v340, %v715
        %725 = vst [vmem:[#allocation2] sm:$0xff] %v717
        %726 = vst [vmem:[#allocation2 + $0x8] sm:$0xff] %v718
        %727 = vst [vmem:[#allocation2 + $0x10] sm:$0xff] %v719
        %728 = vst [vmem:[#allocation2 + $0x18] sm:$0xff] %v720
        %729 = vst [vmem:[#allocation2 + $0x20] sm:$0xff] %v721
        %730 = vst [vmem:[#allocation2 + $0x28] sm:$0xff] %v722
        %731 = vst [vmem:[#allocation2 + $0x30] sm:$0xff] %v723
        %732 = vst [vmem:[#allocation2 + $0x38] sm:$0xff] %v724
        %p733 = scmp.eq.s32.totalorder %s21, 3
        // Predicated region
        $region60: #{cnn_encoder_forward.8} parent=50 // pred_check
          %p734 = pneg %p733
        $region61: #{cnn_encoder_forward.8} parent=50 // pred_check_branch
          %736 = sbr.rel (%p734) target = $region63
        $region62: #{cnn_encoder_forward.8} parent=50 // pred_region
          %v737 = vld [vmem:[#allocation2] sm:$0xff]
          %v738 = vld [vmem:[#allocation2 + $0x8] sm:$0xff]
          %v739 = vld [vmem:[#allocation2 + $0x10] sm:$0xff]
          %v740 = vld [vmem:[#allocation2 + $0x18] sm:$0xff]
          %v741 = vld [vmem:[#allocation2 + $0x20] sm:$0xff]
          %v742 = vld [vmem:[#allocation2 + $0x28] sm:$0xff]
          %v743 = vld [vmem:[#allocation2 + $0x30] sm:$0xff]
          %v744 = vld [vmem:[#allocation2 + $0x38] sm:$0xff]
          %v745 = vld [vmem:[%s307] sm:$0x3]
          %v747 = vperm.slane %v745, 0
          %v748 = vperm.slane %v745, 1
          %v751 = vadd.f32 %v737, %v747
          %v752 = vadd.f32 %v738, %v748
          %v753 = vadd.f32 %v739, %v747
          %v754 = vadd.f32 %v740, %v748
          %v755 = vadd.f32 %v741, %v747
          %v756 = vadd.f32 %v742, %v748
          %v757 = vadd.f32 %v743, %v747
          %v758 = vadd.f32 %v744, %v748
          %v759 = vmax.f32 %v751, 0.0
          %v760 = vmax.f32 %v752, 0.0
          %v761 = vmax.f32 %v753, 0.0
          %v762 = vmax.f32 %v754, 0.0
          %v763 = vmax.f32 %v755, 0.0
          %v764 = vmax.f32 %v756, 0.0
          %v765 = vmax.f32 %v757, 0.0
          %v766 = vmax.f32 %v758, 0.0
          %767 = vst [vmem:[%s318] sm:$0xff] %v759
          %768 = vst [vmem:[%s318 + $0x8] sm:$0xff] %v760
          %769 = vst [vmem:[%s318 + $0x10] sm:$0xff] %v761
          %770 = vst [vmem:[%s318 + $0x18] sm:$0xff] %v762
          %771 = vst [vmem:[%s318 + $0x20] sm:$0xff] %v763
          %772 = vst [vmem:[%s318 + $0x28] sm:$0xff] %v764
          %773 = vst [vmem:[%s318 + $0x30] sm:$0xff] %v765
          %774 = vst [vmem:[%s318 + $0x38] sm:$0xff] %v766
        $region63: #{cnn_encoder_forward.8} parent=50 // pred_fallthru
          _
        %s775 = smul.u32 4, %s19
        %s776 = smul.u32 2, %s20
        %p777 = scmp.lt.s32.totalorder %s775, 3
        %s778 = scalar_select %p777, %s775, 3
        %p779 = scmp.lt.s32.totalorder %s776, 1
        %s780 = scalar_select %p779, %s776, 1
        %s781 = smul.addr %s778, 2
        %s782 = sadd.s32 %s780, %s781
        %s783 = smul.addr %s782, 8
        %s784 = scalar_lea.vmem %s3, %s783
        // Predicated region
        $region64: #{cnn_encoder_forward.8} parent=50 // pred_check
          %p785 = pneg %p135
        $region65: #{cnn_encoder_forward.8} parent=50 // pred_check_branch
          %787 = sbr.rel (%p785) target = $region67
        $region66: #{cnn_encoder_forward.8} parent=50 // pred_region
          %s788 = smul.u32 4, %s19
          %s789 = smul.u32 2, %s20
        $region67: #{cnn_encoder_forward.8} parent=50 // pred_fallthru
          _
        // Predicated region
        $region68: #{cnn_encoder_forward.8} parent=50 // pred_check
          %p790 = pneg %p135
        $region69: #{cnn_encoder_forward.8} parent=50 // pred_check_branch
          %792 = sbr.rel (%p790) target = $region71
        $region70: #{cnn_encoder_forward.8} parent=50 // pred_region
          %s793 = smul.u32 4, %s19
          %s794 = smul.u32 2, %s20
          %p795 = scmp.lt.s32.totalorder %s793, 3
          %s796 = scalar_select %p795, %s793, 3
          %p797 = scmp.lt.s32.totalorder %s794, 1
          %s798 = scalar_select %p797, %s794, 1
          %s799 = smul.addr %s796, 2
          %s800 = sadd.s32 %s798, %s799
          %s801 = smul.addr %s800, 8
          %s802 = scalar_lea.vmem %s3, %s801
        $region71: #{cnn_encoder_forward.8} parent=50 // pred_fallthru
          _
      $region51: #{cnn_encoder_forward.8} parent=5 // pred_fallthru
        _
      %p803 = scmp.le.s32.totalorder 2, %s9
      // Predicated region
      $region72: #{cnn_encoder_forward.8} parent=5 // pred_check
        %p804 = pneg %p803
      $region73: #{cnn_encoder_forward.8} parent=5 // pred_check_branch
        %806 = sbr.rel (%p804) target = $region75
      $region74: #{cnn_encoder_forward.8} parent=5 // pred_region
        %s807 = ssub.s32 %s9, 2
      $region75: #{cnn_encoder_forward.8} parent=5 // pred_fallthru
        _
    $region6: #{cnn_encoder_forward.8} parent=1 // loop_footer
      %s13 = sadd.s32 1, %s9
    $region7: #{cnn_encoder_forward.8} parent=1 // loop_footer_branch
      %8 = sbr.rel target = $region3
    $region8: #{cnn_encoder_forward.8} parent=1 // loop_exit
      _

// kernel: cnn_encoder_forward.9
$region0: #{cnn_encoder_forward.9}
  #allocation0 [shape = 'u32[]', space=smem, size = 0x4, offset = 0x4, fixed_abs, tag = 'smem constant byte address 0x4 - core index']
  #allocation1 [shape = 'u32[72,128]{1,0:T(1,128)}', space=vmem, size = 0x9000, scoped, tag = 'internal scratch']
  #allocation2 [shape = 'f32[2,128]{1,0:T(2,128)}', space=vmem, size = 0x400, scoped, tag = 'scratch operand']
  %s0 = inlined_call_operand.vmem [shape: f32[2,4096], index: 0, kind: input, shape index: {}]
  %s1 = inlined_call_operand.vmem [shape: f32[4096,128], index: 1, kind: input, shape index: {}]
  %s2 = inlined_call_operand.vmem [shape: f32[1,128], index: 2, kind: input, shape index: {}]
  %s3 = inlined_call_operand.hbm [shape: f32[2,128], index: 3, kind: output, shape index: {}]
  %s4 = sld [smem:[#allocation0]]
  $region53: #{cnn_encoder_forward.9} parent=0
    _
  %s6 = ssub.s32 1, %s4
  %s7 = scalar_select 0, %s6, %s4
  $region1: #{cnn_encoder_forward.9} parent=0
    #allocation3 [shape = 'u8[1024]{0}', space=vmem, size = 0x400, scoped, tag = 'output window, operand 0, single buffered']
    #allocation4 [shape = 's32[2]{0}', space=sflag, size = 0x8, scoped, tag = 'scoped memory for cnn_encoder_forward.9']
    %8 = vsyncpa [#allocation4], 0
    loop: start=0, step=1, limit=10
    $region2: #{cnn_encoder_forward.9} parent=1 // loop_pre_header
      _
    $region3: #{cnn_encoder_forward.9} parent=1 // loop_header
      %s10 = sphi 0, %s14
      %p11 = scmp.ge.s32.totalorder %s10, 10
      %s17 = sphi 0, %s36
      %s18 = sphi 0, %s32
      %s19 = sphi 0, %s28
      %s20 = sphi 0, %s17
      %s21 = sphi 0, %s18
      %s22 = sphi 0, %s19
      %s23 = sphi 0, %s20
      %s24 = sphi 0, %s21
      %s25 = sphi 0, %s22
      %s41 = sphi 0, %s43
      %s44 = sphi 0, %s41
      %s45 = sphi 0, %s44
      %s61 = sphi 0, %s45
      %s69 = sphi 0, %s71
      %s72 = sphi 0, %s69
      %s73 = sphi 0, %s72
      %s89 = sphi 0, %s73
      %s95 = sphi 0, %s97
      %s98 = sphi 0, %s95
      %s99 = sphi 0, %s98
      %s115 = sphi 0, %s99
      %s123 = sphi 0, %s125
      %s126 = sphi 0, %s123
      %s127 = sphi 0, %s126
      %s143 = sphi 0, %s127
    $region4: #{cnn_encoder_forward.9} parent=1 // loop_header_branch
      %13 = sbr.rel (%p11) target = $region8
    $region5: #{cnn_encoder_forward.9} parent=1 // loop_body
      %s15 = ssub.s32 %s10, 1
      %s16 = ssub.s32 %s10, 2
      %s26 = sadd.s32 1, %s19
      %p27 = scmp.ge.s32.totalorder %s26, 8
      %s28 = scalar_select %p27, 0, %s26
      %s29 = sadd.s32 1, %s18
      %s30 = scalar_select %p27, %s29, %s18
      %p31 = scmp.ge.s32.totalorder %s30, 1
      %s32 = scalar_select %p31, 0, %s30
      %s33 = sadd.s32 1, %s17
      %s34 = scalar_select %p31, %s33, %s17
      %p35 = scmp.ge.s32.totalorder %s34, 1
      %s36 = scalar_select %p35, 0, %s34
      %s37 = ssub.s32 %s17, %s36
      %s38 = ssub.s32 %s19, %s28
      %s39 = sor.u32 %s37, %s38
      %p40 = scmp.eq.s32.totalorder %s39, 0
      %s42 = sadd.s32 %s41, 1
      %s43 = scalar_select %p40, %s41, %s42
      %p46 = pneg %p40
      %p47 = scmp.eq.s32.totalorder %s10, 7
      %p48 = por %p46, %p47
      %p49 = scmp.ne.s32.totalorder %s41, %s44
      %p50 = scmp.eq.s32.totalorder %s10, 0
      %p51 = por %p49, %p50
      %p52 = scmp.ne.s32.totalorder %s41, %s44
      %p53 = scmp.eq.s32.totalorder %s15, 7
      %p54 = por %p52, %p53
      %p55 = scmp.ne.s32.totalorder %s44, %s45
      %p56 = scmp.eq.s32.totalorder %s15, 0
      %p57 = por %p55, %p56
      %p58 = scmp.ne.s32.totalorder %s44, %s45
      %p59 = scmp.eq.s32.totalorder %s16, 7
      %p60 = por %p58, %p59
      %p62 = scmp.ne.s32.totalorder %s45, %s61
      %p63 = scmp.eq.s32.totalorder %s16, 0
      %p64 = por %p62, %p63
      %s65 = ssub.s32 %s19, %s28
      %s66 = ssub.s32 %s18, %s32
      %s67 = sor.u32 %s65, %s66
      %p68 = scmp.eq.s32.totalorder %s67, 0
      %s70 = sadd.s32 %s69, 1
      %s71 = scalar_select %p68, %s69, %s70
      %p74 = pneg %p68
      %p75 = scmp.eq.s32.totalorder %s10, 7
      %p76 = por %p74, %p75
      %p77 = scmp.ne.s32.totalorder %s69, %s72
      %p78 = scmp.eq.s32.totalorder %s10, 0
      %p79 = por %p77, %p78
      %p80 = scmp.ne.s32.totalorder %s69, %s72
      %p81 = scmp.eq.s32.totalorder %s15, 7
      %p82 = por %p80, %p81
      %p83 = scmp.ne.s32.totalorder %s72, %s73
      %p84 = scmp.eq.s32.totalorder %s15, 0
      %p85 = por %p83, %p84
      %p86 = scmp.ne.s32.totalorder %s72, %s73
      %p87 = scmp.eq.s32.totalorder %s16, 7
      %p88 = por %p86, %p87
      %p90 = scmp.ne.s32.totalorder %s73, %s89
      %p91 = scmp.eq.s32.totalorder %s16, 0
      %p92 = por %p90, %p91
      %s93 = ssub.s32 %s18, %s32
      %p94 = scmp.eq.s32.totalorder %s93, 0
      %s96 = sadd.s32 %s95, 1
      %s97 = scalar_select %p94, %s95, %s96
      %p100 = pneg %p94
      %p101 = scmp.eq.s32.totalorder %s10, 7
      %p102 = por %p100, %p101
      %p103 = scmp.ne.s32.totalorder %s95, %s98
      %p104 = scmp.eq.s32.totalorder %s10, 0
      %p105 = por %p103, %p104
      %p106 = scmp.ne.s32.totalorder %s95, %s98
      %p107 = scmp.eq.s32.totalorder %s15, 7
      %p108 = por %p106, %p107
      %p109 = scmp.ne.s32.totalorder %s98, %s99
      %p110 = scmp.eq.s32.totalorder %s15, 0
      %p111 = por %p109, %p110
      %p112 = scmp.ne.s32.totalorder %s98, %s99
      %p113 = scmp.eq.s32.totalorder %s16, 7
      %p114 = por %p112, %p113
      %p116 = scmp.ne.s32.totalorder %s99, %s115
      %p117 = scmp.eq.s32.totalorder %s16, 0
      %p118 = por %p116, %p117
      %s119 = ssub.s32 %s17, %s36
      %s120 = ssub.s32 %s18, %s32
      %s121 = sor.u32 %s119, %s120
      %p122 = scmp.eq.s32.totalorder %s121, 0
      %s124 = sadd.s32 %s123, 1
      %s125 = scalar_select %p122, %s123, %s124
      %p128 = pneg %p122
      %p129 = scmp.eq.s32.totalorder %s10, 7
      %p130 = por %p128, %p129
      %p131 = scmp.ne.s32.totalorder %s123, %s126
      %p132 = scmp.eq.s32.totalorder %s10, 0
      %p133 = por %p131, %p132
      %p134 = scmp.ne.s32.totalorder %s123, %s126
      %p135 = scmp.eq.s32.totalorder %s15, 7
      %p136 = por %p134, %p135
      %p137 = scmp.ne.s32.totalorder %s126, %s127
      %p138 = scmp.eq.s32.totalorder %s15, 0
      %p139 = por %p137, %p138
      %p140 = scmp.ne.s32.totalorder %s126, %s127
      %p141 = scmp.eq.s32.totalorder %s16, 7
      %p142 = por %p140, %p141
      %p144 = scmp.ne.s32.totalorder %s127, %s143
      %p145 = scmp.eq.s32.totalorder %s16, 0
      %p146 = por %p144, %p145
      %p147 = scmp.le.s32.totalorder 1, %s10
      %p148 = scmp.lt.s32.totalorder %s10, 9
      %p149 = pnand %p147, %p148
      %p150 = pneg %p149
      // Predicated region
      $region9: #{cnn_encoder_forward.9} parent=5 // pred_check
        _
      $region10: #{cnn_encoder_forward.9} parent=5 // pred_check_branch
        %152 = sbr.rel (%p149) target = $region12
      $region11: #{cnn_encoder_forward.9} parent=5 // pred_region
        %s153 = ssub.s32 %s10, 1
        // Predicated region
        $region13: #{cnn_encoder_forward.9} parent=11 // pred_check
          %p154 = pneg %p111
        $region14: #{cnn_encoder_forward.9} parent=11 // pred_check_branch
          %156 = sbr.rel (%p154) target = $region16
        $region15: #{cnn_encoder_forward.9} parent=11 // pred_region
          %p157 = scmp.lt.s32.totalorder %s21, 0
          %s158 = scalar_select %p157, %s21, 0
          %s159 = scalar_lea.vmem %s2, %s158
        $region16: #{cnn_encoder_forward.9} parent=11 // pred_fallthru
          _
      $region12: #{cnn_encoder_forward.9} parent=5 // pred_fallthru
        _
      %p160 = scmp.lt.s32.totalorder %s10, 8
      // Predicated region
      $region17: #{cnn_encoder_forward.9} parent=5 // pred_check
        %p161 = pneg %p160
      $region18: #{cnn_encoder_forward.9} parent=5 // pred_check_branch
        %163 = sbr.rel (%p161) target = $region20
      $region19: #{cnn_encoder_forward.9} parent=5 // pred_region
        // Predicated region
        $region21: #{cnn_encoder_forward.9} parent=19 // pred_check
          %p164 = pneg %p51
        $region22: #{cnn_encoder_forward.9} parent=19 // pred_check_branch
          %166 = sbr.rel (%p164) target = $region24
        $region23: #{cnn_encoder_forward.9} parent=19 // pred_region
          %s167 = smul.u32 4, %s19
          %p168 = scmp.lt.s32.totalorder %s17, 0
          %s169 = scalar_select %p168, %s17, 0
          %p170 = scmp.lt.s32.totalorder %s167, 31
          %s171 = scalar_select %p170, %s167, 31
          %s172 = smul.addr %s169, 32
          %s173 = sadd.s32 %s171, %s172
          %s174 = smul.addr %s173, 2
          %s175 = scalar_lea.vmem %s0, %s174
          %s176 = smul.u32 4, %s19
        $region24: #{cnn_encoder_forward.9} parent=19 // pred_fallthru
          _
        // Predicated region
        $region25: #{cnn_encoder_forward.9} parent=19 // pred_check
          %p177 = pneg %p79
        $region26: #{cnn_encoder_forward.9} parent=19 // pred_check_branch
          %179 = sbr.rel (%p177) target = $region28
        $region27: #{cnn_encoder_forward.9} parent=19 // pred_region
          %s180 = smul.u32 64, %s19
          %p181 = scmp.lt.s32.totalorder %s180, 511
          %s182 = scalar_select %p181, %s180, 511
          %p183 = scmp.lt.s32.totalorder %s18, 0
          %s184 = scalar_select %p183, %s18, 0
          %s185 = sadd.s32 %s184, %s182
          %s186 = smul.addr %s185, 8
          %s187 = scalar_lea.vmem %s1, %s186
          %s188 = smul.u32 64, %s19
        $region28: #{cnn_encoder_forward.9} parent=19 // pred_fallthru
          _
      $region20: #{cnn_encoder_forward.9} parent=5 // pred_fallthru
        _
      %p189 = scmp.le.s32.totalorder 1, %s10
      %p190 = scmp.lt.s32.totalorder %s10, 9
      %p191 = pnand %p189, %p190
      %p192 = pneg %p191
      // Predicated region
      $region29: #{cnn_encoder_forward.9} parent=5 // pred_check
        _
      $region30: #{cnn_encoder_forward.9} parent=5 // pred_check_branch
        %194 = sbr.rel (%p191) target = $region32
      $region31: #{cnn_encoder_forward.9} parent=5 // pred_region
        %s195 = ssub.s32 %s10, 1
        %s196 = smul.u32 4, %s22
        %p197 = scmp.lt.s32.totalorder %s20, 0
        %s198 = scalar_select %p197, %s20, 0
        %p199 = scmp.lt.s32.totalorder %s196, 31
        %s200 = scalar_select %p199, %s196, 31
        %s201 = smul.addr %s198, 32
        %s202 = sadd.s32 %s200, %s201
        %s203 = smul.addr %s202, 2
        %s204 = scalar_lea.vmem %s0, %s203
        %p205 = pneg %p57
        %p206 = pneg %p54
        %s207 = smul.u32 64, %s22
        %p208 = scmp.lt.s32.totalorder %s207, 511
        %s209 = scalar_select %p208, %s207, 511
        %p210 = scmp.lt.s32.totalorder %s21, 0
        %s211 = scalar_select %p210, %s21, 0
        %s212 = sadd.s32 %s211, %s209
        %s213 = smul.addr %s212, 8
        %s214 = scalar_lea.vmem %s1, %s213
        %p215 = pneg %p85
        %p216 = pneg %p82
        %p217 = scmp.lt.s32.totalorder %s21, 0
        %s218 = scalar_select %p217, %s21, 0
        %s219 = scalar_lea.vmem %s2, %s218
        %p220 = pneg %p111
        %p221 = pneg %p108
        %p222 = pneg %p139
        %p223 = pneg %p136
        %s224 = smul.u32 4, %s22
        %p225 = scmp.lt.s32.totalorder %s20, 0
        %s226 = scalar_select %p225, %s20, 0
        %p227 = scmp.lt.s32.totalorder %s224, 31
        %s228 = scalar_select %p227, %s224, 31
        %s229 = smul.addr %s226, 32
        %s230 = sadd.s32 %s228, %s229
        %s231 = smul.addr %s230, 2
        %s232 = scalar_lea.vmem %s0, %s231
        %s233 = smul.u32 4, %s22
        %s234 = smul.u32 64, %s22
        %p235 = scmp.lt.s32.totalorder %s234, 511
        %s236 = scalar_select %p235, %s234, 511
        %p237 = scmp.lt.s32.totalorder %s21, 0
        %s238 = scalar_select %p237, %s21, 0
        %s239 = sadd.s32 %s238, %s236
        %s240 = smul.addr %s239, 8
        %s241 = scalar_lea.vmem %s1, %s240
        %s242 = smul.u32 64, %s22
        %p243 = scmp.lt.s32.totalorder %s21, 0
        %s244 = scalar_select %p243, %s21, 0
        %s245 = scalar_lea.vmem %s2, %s244
        %p246 = scmp.eq.s32.totalorder %s22, 0
        // Predicated region
        $region33: #{cnn_encoder_forward.9} parent=31 // pred_check
          %p247 = pneg %p246
        $region34: #{cnn_encoder_forward.9} parent=31 // pred_check_branch
          %249 = sbr.rel (%p247) target = $region36
        $region35: #{cnn_encoder_forward.9} parent=31 // pred_region
          %250 = vst [vmem:[#allocation2] sm:$0x3] 0.0
        $region36: #{cnn_encoder_forward.9} parent=31 // pred_fallthru
          _
        %v251 = vld [vmem:[#allocation2] sm:$0x3]
        %v252 = vld [vmem:[%s232] sm:$0xff]
        %v253 = vld [vmem:[%s241] sm:$0xff]
        %v254 = vld [vmem:[%s241 + $0x8] sm:$0xff]
        %v255 = vld [vmem:[%s241 + $0x10] sm:$0xff]
        %v256 = vld [vmem:[%s241 + $0x18] sm:$0xff]
        %v257 = vld [vmem:[%s241 + $0x20] sm:$0xff]
        %v258 = vld [vmem:[%s241 + $0x28] sm:$0xff]
        %v259 = vld [vmem:[%s241 + $0x30] sm:$0xff]
        %v260 = vld [vmem:[%s241 + $0x38] sm:$0xff]
        %v261 = vld [vmem:[%s241 + $0x40] sm:$0xff]
        %v262 = vld [vmem:[%s241 + $0x48] sm:$0xff]
        %v263 = vld [vmem:[%s241 + $0x50] sm:$0xff]
        %v264 = vld [vmem:[%s241 + $0x58] sm:$0xff]
        %v265 = vld [vmem:[%s241 + $0x60] sm:$0xff]
        %v266 = vld [vmem:[%s241 + $0x68] sm:$0xff]
        %v267 = vld [vmem:[%s241 + $0x70] sm:$0xff]
        %v268 = vld [vmem:[%s241 + $0x78] sm:$0xff]
        %v269 = vld [vmem:[%s241 + $0x80] sm:$0xff]
        %v270 = vld [vmem:[%s241 + $0x88] sm:$0xff]
        %v271 = vld [vmem:[%s241 + $0x90] sm:$0xff]
        %v272 = vld [vmem:[%s241 + $0x98] sm:$0xff]
        %v273 = vld [vmem:[%s241 + $0xa0] sm:$0xff]
        %v274 = vld [vmem:[%s241 + $0xa8] sm:$0xff]
        %v275 = vld [vmem:[%s241 + $0xb0] sm:$0xff]
        %v276 = vld [vmem:[%s241 + $0xb8] sm:$0xff]
        %v277 = vld [vmem:[%s241 + $0xc0] sm:$0xff]
        %v278 = vld [vmem:[%s241 + $0xc8] sm:$0xff]
        %v279 = vld [vmem:[%s241 + $0xd0] sm:$0xff]
        %v280 = vld [vmem:[%s241 + $0xd8] sm:$0xff]
        %v281 = vld [vmem:[%s241 + $0xe0] sm:$0xff]
        %v282 = vld [vmem:[%s241 + $0xe8] sm:$0xff]
        %v283 = vld [vmem:[%s241 + $0xf0] sm:$0xff]
        %v284 = vld [vmem:[%s241 + $0xf8] sm:$0xff]
        %v285 = vld [vmem:[%s241 + $0x100] sm:$0xff]
        %v286 = vld [vmem:[%s241 + $0x108] sm:$0xff]
        %v287 = vld [vmem:[%s241 + $0x110] sm:$0xff]
        %v288 = vld [vmem:[%s241 + $0x118] sm:$0xff]
        %v289 = vld [vmem:[%s241 + $0x120] sm:$0xff]
        %v290 = vld [vmem:[%s241 + $0x128] sm:$0xff]
        %v291 = vld [vmem:[%s241 + $0x130] sm:$0xff]
        %v292 = vld [vmem:[%s241 + $0x138] sm:$0xff]
        %v293 = vld [vmem:[%s241 + $0x140] sm:$0xff]
        %v294 = vld [vmem:[%s241 + $0x148] sm:$0xff]
        %v295 = vld [vmem:[%s241 + $0x150] sm:$0xff]
        %v296 = vld [vmem:[%s241 + $0x158] sm:$0xff]
        %v297 = vld [vmem:[%s241 + $0x160] sm:$0xff]
        %v298 = vld [vmem:[%s241 + $0x168] sm:$0xff]
        %v299 = vld [vmem:[%s241 + $0x170] sm:$0xff]
        %v300 = vld [vmem:[%s241 + $0x178] sm:$0xff]
        %v301 = vld [vmem:[%s241 + $0x180] sm:$0xff]
        %v302 = vld [vmem:[%s241 + $0x188] sm:$0xff]
        %v303 = vld [vmem:[%s241 + $0x190] sm:$0xff]
        %v304 = vld [vmem:[%s241 + $0x198] sm:$0xff]
        %v305 = vld [vmem:[%s241 + $0x1a0] sm:$0xff]
        %v306 = vld [vmem:[%s241 + $0x1a8] sm:$0xff]
        %v307 = vld [vmem:[%s241 + $0x1b0] sm:$0xff]
        %v308 = vld [vmem:[%s241 + $0x1b8] sm:$0xff]
        %v309 = vld [vmem:[%s241 + $0x1c0] sm:$0xff]
        %v310 = vld [vmem:[%s241 + $0x1c8] sm:$0xff]
        %v311 = vld [vmem:[%s241 + $0x1d0] sm:$0xff]
        %v312 = vld [vmem:[%s241 + $0x1d8] sm:$0xff]
        %v313 = vld [vmem:[%s241 + $0x1e0] sm:$0xff]
        %v314 = vld [vmem:[%s241 + $0x1e8] sm:$0xff]
        %v315 = vld [vmem:[%s241 + $0x1f0] sm:$0xff]
        %v316 = vld [vmem:[%s241 + $0x1f8] sm:$0xff]
        %318 = vst [vmem:[#allocation1] ss:$4 sm:$0xff] %v252
        %v319 = vld.sshfl [vmem:[#allocation1] sm:$0xff pattern:$0x73625140]
        %v320 = vld.sshfl [vmem:[#allocation1 + $0x8] sm:$0xff pattern:$0x73625140]
        %v321 = vld.sshfl [vmem:[#allocation1 + $0x10] sm:$0xff pattern:$0x73625140]
        %v322 = vld.sshfl [vmem:[#allocation1 + $0x18] sm:$0xff pattern:$0x73625140]
        %327 = vmatpush.msra.mxu0 %v268
        %328 = vmatpush.msra.mxu0 %v267
        %329 = vmatpush.msra.mxu0 %v266
        %330 = vmatpush.msra.mxu0 %v265
        %331 = vmatpush.msra.mxu0 %v264
        %332 = vmatpush.msra.mxu0 %v263
        %333 = vmatpush.msra.mxu0 %v262
        %334 = vmatpush.msra.mxu0 %v261
        %335 = vmatpush.msra.mxu0 %v260
        %336 = vmatpush.msra.mxu0 %v259
        %337 = vmatpush.msra.mxu0 %v258
        %338 = vmatpush.msra.mxu0 %v257
        %339 = vmatpush.msra.mxu0 %v256
        %340 = vmatpush.msra.mxu0 %v255
        %341 = vmatpush.msra.mxu0 %v254
        %342 = vmatpush.msra.mxu0 %v253
        %343 = vmatmul.f32.gmra.mxu0 %v319
        %v344 = vpop.f32.mrf.mxu0
        %v345 = vadd.f32 0.0, %v344
        %346 = vdwg.mxu0
        %347 = vmatpush.msra.mxu0 %v284
        %348 = vmatpush.msra.mxu0 %v283
        %349 = vmatpush.msra.mxu0 %v282
        %350 = vmatpush.msra.mxu0 %v281
        %351 = vmatpush.msra.mxu0 %v280
        %352 = vmatpush.msra.mxu0 %v279
        %353 = vmatpush.msra.mxu0 %v278
        %354 = vmatpush.msra.mxu0 %v277
        %355 = vmatpush.msra.mxu0 %v276
        %356 = vmatpush.msra.mxu0 %v275
        %357 = vmatpush.msra.mxu0 %v274
        %358 = vmatpush.msra.mxu0 %v273
        %359 = vmatpush.msra.mxu0 %v272
        %360 = vmatpush.msra.mxu0 %v271
        %361 = vmatpush.msra.mxu0 %v270
        %362 = vmatpush.msra.mxu0 %v269
        %363 = vmatmul.f32.gmra.mxu0 %v320
        %v364 = vpop.f32.mrf.mxu0
        %v365 = vadd.f32 %v345, %v364
        %366 = vdwg.mxu0
        %367 = vmatpush.msra.mxu0 %v300
        %368 = vmatpush.msra.mxu0 %v299
        %369 = vmatpush.msra.mxu0 %v298
        %370 = vmatpush.msra.mxu0 %v297
        %371 = vmatpush.msra.mxu0 %v296
        %372 = vmatpush.msra.mxu0 %v295
        %373 = vmatpush.msra.mxu0 %v294
        %374 = vmatpush.msra.mxu0 %v293
        %375 = vmatpush.msra.mxu0 %v292
        %376 = vmatpush.msra.mxu0 %v291
        %377 = vmatpush.msra.mxu0 %v290
        %378 = vmatpush.msra.mxu0 %v289
        %379 = vmatpush.msra.mxu0 %v288
        %380 = vmatpush.msra.mxu0 %v287
        %381 = vmatpush.msra.mxu0 %v286
        %382 = vmatpush.msra.mxu0 %v285
        %383 = vmatmul.f32.gmra.mxu0 %v321
        %v384 = vpop.f32.mrf.mxu0
        %v385 = vadd.f32 %v365, %v384
        %386 = vdwg.mxu0
        %387 = vmatpush.msra.mxu0 %v316
        %388 = vmatpush.msra.mxu0 %v315
        %389 = vmatpush.msra.mxu0 %v314
        %390 = vmatpush.msra.mxu0 %v313
        %391 = vmatpush.msra.mxu0 %v312
        %392 = vmatpush.msra.mxu0 %v311
        %393 = vmatpush.msra.mxu0 %v310
        %394 = vmatpush.msra.mxu0 %v309
        %395 = vmatpush.msra.mxu0 %v308
        %396 = vmatpush.msra.mxu0 %v307
        %397 = vmatpush.msra.mxu0 %v306
        %398 = vmatpush.msra.mxu0 %v305
        %399 = vmatpush.msra.mxu0 %v304
        %400 = vmatpush.msra.mxu0 %v303
        %401 = vmatpush.msra.mxu0 %v302
        %402 = vmatpush.msra.mxu0 %v301
        %403 = vmatmul.f32.gmra.mxu0 %v322
        %v404 = vpop.f32.mrf.mxu0
        %v405 = vadd.f32 %v385, %v404
        %406 = vdwg.mxu0
        %v407 = vadd.f32 %v251, %v405
        %408 = vst [vmem:[#allocation2] sm:$0x3] %v407
        %p409 = scmp.eq.s32.totalorder %s22, 7
        // Predicated region
        $region37: #{cnn_encoder_forward.9} parent=31 // pred_check
          %p410 = pneg %p409
        $region38: #{cnn_encoder_forward.9} parent=31 // pred_check_branch
          %412 = sbr.rel (%p410) target = $region40
        $region39: #{cnn_encoder_forward.9} parent=31 // pred_region
          %v413 = vld [vmem:[#allocation2] sm:$0x3]
          %v414 = vld [vmem:[%s245] sm:$0x1]
          %v416 = vperm.slane %v414, 0
          %v418 = vadd.f32 %v413, %v416
          %419 = vst [vmem:[#allocation3] sm:$0x3] %v418
        $region40: #{cnn_encoder_forward.9} parent=31 // pred_fallthru
          _
        // Predicated region
        $region41: #{cnn_encoder_forward.9} parent=31 // pred_check
          %p420 = pneg %p136
        $region42: #{cnn_encoder_forward.9} parent=31 // pred_check_branch
          %422 = sbr.rel (%p420) target = $region44
        $region43: #{cnn_encoder_forward.9} parent=31 // pred_region
          %424 = vsyncadd [#allocation4], 0
          %s425 = sadd.s32 %s21, %s20
          %s426 = smul.addr %s425, 2
          %s427 = scalar_lea.hbm %s3, %s426
          %s429 = sshll.u32 [#allocation3], 4
          %s430 = int_to_ptr.vmem [resolvable:$true] %s429
          %s431 = sshll.u32 %s427, 4
          %s432 = int_to_ptr.hbm [resolvable:$true] %s431
          %434 = dma.vmem_to_hbm [thread:$0]  %s430, 32, %s432, [#allocation4]
        $region44: #{cnn_encoder_forward.9} parent=31 // pred_fallthru
          _
        // Predicated region
        $region45: #{cnn_encoder_forward.9} parent=31 // pred_check
          %p435 = pneg %p136
        $region46: #{cnn_encoder_forward.9} parent=31 // pred_check_branch
          %437 = sbr.rel (%p435) target = $region48
        $region47: #{cnn_encoder_forward.9} parent=31 // pred_region
          %439 = dma.done [#allocation4], 32
        $region48: #{cnn_encoder_forward.9} parent=31 // pred_fallthru
          _
      $region32: #{cnn_encoder_forward.9} parent=5 // pred_fallthru
        _
      %p440 = scmp.le.s32.totalorder 2, %s10
      // Predicated region
      $region49: #{cnn_encoder_forward.9} parent=5 // pred_check
        %p441 = pneg %p440
      $region50: #{cnn_encoder_forward.9} parent=5 // pred_check_branch
        %443 = sbr.rel (%p441) target = $region52
      $region51: #{cnn_encoder_forward.9} parent=5 // pred_region
        %s444 = ssub.s32 %s10, 2
      $region52: #{cnn_encoder_forward.9} parent=5 // pred_fallthru
        _
    $region6: #{cnn_encoder_forward.9} parent=1 // loop_footer
      %s14 = sadd.s32 1, %s10
    $region7: #{cnn_encoder_forward.9} parent=1 // loop_footer_branch
      %9 = sbr.rel target = $region3
    $region8: #{cnn_encoder_forward.9} parent=1 // loop_exit
      _
    %445 = vsyncpa [#allocation4], 1
    %s446 = scalar_lea.sflag [#allocation4], 1
    %447 = vsyncpa %s446, 1

</llo_original>
